<compile_context>
chip_gen: v7x
topology: tpu7x:2x2x1
jax: 0.10.0
libtpu: 0.0.40
codegen_flags: <defaults>
</compile_context>

<pallas_src>
import functools

import jax
import jax.numpy as jnp
from jax.experimental import pallas as pl
from jax.experimental.pallas import tpu as pltpu

DILATIONS = (1, 2, 4, 8)
MAX_PAD = max(DILATIONS)  # 8 — halo that covers every dilation's 3x3 reach


# ---------------------------------------------------------------------------
# Kernel: one (batch, row-tile) step — all dilated branches + weight_calc + mix
# ---------------------------------------------------------------------------
def _msfa_kernel(xt_ref, w1c_ref, wrest_ref, w2t_ref, b1_ref, bdil_ref,
                 b2_ref, o_ref, *, dilations, wp):
    """
    xt_ref   : (Cin, L)             bf16 halo row tile, flattened rows*Wp, +/-8 pad
    w1c_ref  : (9, 2*Cout, Cin)     bf16 per-tap [weight_calc conv1 ; branch 0]
    wrest_ref: ((D-1)*9, Cout, Cin) bf16 per-tap weights, branches 1..D-1
    w2t_ref  : (D, Cout)            bf16 weight_calc 1x1 conv (transposed)
    b1_ref   : (Cout, 1) f32   bdil_ref : (Cout, D) f32   b2_ref : (D, 1) f32
    o_ref    : (Cout, T) output block, T = TH * Wp (padded-width output frame)
    """
    cout, t_out = o_ref.shape
    num_branches = len(dilations)

    def tap(d, ky, kx):
        # Static contiguous slice of the flattened padded tile == the (ky, kx)
        # tap of a 3x3 conv with dilation d, expressed in the padded-width
        # output frame.  Garbage wraps land only in the discarded columns.
        off = MAX_PAD + (MAX_PAD + (ky - 1) * d) * wp + (kx - 1) * d
        return xt_ref[:, off:off + t_out]                       # (Cin, T) bf16

    def conv3x3(w_ref, base, d):
        # Nine accumulating K=Cin matmuls against the resident input tile
        # (on v7x these accumulate in the MRB; elsewhere in f32 vregs).
        acc = None
        for ky in range(3):
            for kx in range(3):
                c = jnp.dot(w_ref[base + ky * 3 + kx], tap(d, ky, kx),
                            preferred_element_type=jnp.float32)
                acc = c if acc is None else acc + c
        return acc

    # Dilation-1 pass feeds BOTH the weight_calc hidden layer and branch 0
    # (their per-tap weights were concatenated along the Cout axis).
    y = conv3x3(w1c_ref, 0, dilations[0])                       # (2*Cout, T)
    y1 = jnp.maximum(y[:cout] + b1_ref[...], 0.0)               # weight_calc hidden
    feat0 = jnp.maximum(y[cout:] + bdil_ref[:, 0:1], 0.0)       # dilated branch 0

    # weight_calc tail: 1x1 conv + ReLU + softmax over the D branch rows.
    y2 = jnp.dot(w2t_ref[...], y1.astype(jnp.bfloat16),
                 preferred_element_type=jnp.float32) + b2_ref[...]   # (D, T)
    y2 = jnp.maximum(y2, 0.0)
    y2 = y2 - jnp.max(y2, axis=0, keepdims=True)
    e = jnp.exp(y2)
    wmap = e * pl.reciprocal(jnp.sum(e, axis=0, keepdims=True), approx=True)

    # Weighted aggregation of the dilated branches.
    out = wmap[0:1, :] * feat0
    for i in range(1, num_branches):
        f = conv3x3(wrest_ref, (i - 1) * 9, dilations[i])
        f = jnp.maximum(f + bdil_ref[:, i:i + 1], 0.0)
        out = out + wmap[i:i + 1, :] * f

    o_ref[...] = out.astype(o_ref.dtype)


# ---------------------------------------------------------------------------
# Wrapper-side helpers
# ---------------------------------------------------------------------------
def _per_tap_weights(w):
    # (3, 3, Cin, Cout) -> (9, Cout, Cin), tap index = ky*3 + kx.
    return jnp.transpose(w, (0, 1, 3, 2)).reshape(9, w.shape[3], w.shape[2])


def _vmem_tiling_budget():
    # Generation-aware: ~60% of physical VMEM, capped at 40 MiB so
    # double-buffering survives v7x's 64 MiB (v5e/v6e have 128 MiB physical).
    try:
        cap = int(pltpu.get_tpu_info().vmem_capacity_bytes)
    except Exception:
        cap = 64 << 20
    return min(int(0.6 * cap), 40 << 20)


def _pick_row_tile(n, h, w, cin, cout, d, out_bytes, budget, min_steps=4):
    """Largest row-tile height TH that (a) keeps the output block a multiple
    of 128 lanes, (b) fits the double-buffered VMEM budget, and (c) leaves
    >= min_steps grid steps for megacore sharding when possible."""
    wp = w + 2 * MAX_PAD

    def vmem_est(th):
        t_out = th * wp
        l = (th + 2 * MAX_PAD) * wp + 2 * MAX_PAD
        return (2 * cin * l * 2                      # 2x-buffered bf16 input tile
                + 2 * cout * t_out * out_bytes       # 2x-buffered output block
                + (8 * cout + 4 * d) * t_out * 4)    # rough f32 live intermediates

    cands = [th for th in range(h, 0, -1)
             if h % th == 0 and (th == h or (th * wp) % 128 == 0)]
    fits = [th for th in cands if vmem_est(th) <= budget] or [cands[-1]]
    for want in (min_steps, 2, 1):
        for th in fits:                              # descending: biggest first
            if n * (h // th) >= want:
                return th, vmem_est(th)
    return fits[-1], vmem_est(fits[-1])


def msfa_pallas(x_nchw, params, out_dtype=jnp.float32):
    """x_nchw: (N, Cin, H, W) float32 -> (N, Cout, H, W) out_dtype."""
    n, cin, h, w = x_nchw.shape
    cout = params["b1"].shape[0]
    d = len(DILATIONS)
    wp = w + 2 * MAX_PAD

    budget = _vmem_tiling_budget()
    th, est = _pick_row_tile(n, h, w, cin, cout, d,
                             jnp.dtype(out_dtype).itemsize, budget)
    nt = h // th
    thp = th + 2 * MAX_PAD
    t_out = th * wp
    l = thp * wp + 2 * MAX_PAD

    # --- weight prep: per-tap (Cout, Cin) matrices, bf16 ---
    w1_t = _per_tap_weights(params["w1"])                           # (9, Cout, Cin)
    wdil_t = [_per_tap_weights(params["w_dil"][i]) for i in range(d)]
    w1c = jnp.concatenate([w1_t, wdil_t[0]], axis=1).astype(jnp.bfloat16)
    wrest = jnp.concatenate(wdil_t[1:], axis=0).astype(jnp.bfloat16)
    w2t = params["w2"].T.astype(jnp.bfloat16)                       # (D, Cout)
    b1 = params["b1"].reshape(cout, 1)
    bdil = params["b_dil"].T                                        # (Cout, D)
    b2 = params["b2"].reshape(d, 1)

    # --- input prep: zero-pad once, cut contiguous halo row tiles, flatten ---
    xp = jnp.pad(x_nchw, ((0, 0), (0, 0), (MAX_PAD, MAX_PAD),
                          (MAX_PAD, MAX_PAD))).astype(jnp.bfloat16)  # (N,Cin,Hp,Wp)
    tiles = jnp.stack([xp[:, :, t * th: t * th + thp, :] for t in range(nt)],
                      axis=1)                                        # (N,NT,Cin,THp,Wp)
    tiles = tiles.reshape(n, nt, cin, thp * wp)
    tiles = jnp.pad(tiles, ((0, 0), (0, 0), (0, 0),
                            (MAX_PAD, MAX_PAD)))                     # (N,NT,Cin,L)

    kernel = functools.partial(_msfa_kernel, dilations=DILATIONS, wp=wp)
    full = lambda shape: pl.BlockSpec(shape, lambda *_: (0,) * len(shape))

    out_flat = pl.pallas_call(
        kernel,
        out_shape=jax.ShapeDtypeStruct((n, cout, h * wp), out_dtype),
        grid_spec=pltpu.PrefetchScalarGridSpec(
            num_scalar_prefetch=0,
            grid=(n, nt),
            in_specs=[
                pl.BlockSpec((None, None, cin, l), lambda i, j: (i, j, 0, 0)),
                full((9, 2 * cout, cin)),
                full(((d - 1) * 9, cout, cin)),
                full((d, cout)),
                full((cout, 1)),
                full((cout, d)),
                full((d, 1)),
            ],
            out_specs=pl.BlockSpec((None, cout, t_out), lambda i, j: (i, 0, j)),
        ),
        compiler_params=pltpu.CompilerParams(
            dimension_semantics=("parallel", "parallel"),
            vmem_limit_bytes=int(min(max(3 * est, 32 << 20), 48 << 20)),
        ),
    )(tiles, w1c, wrest, w2t, b1, bdil, b2)

    # Free reshape + drop the padded-width columns -> NCHW (no transposes).
    return out_flat.reshape(n, cout, h, wp)[:, :, :, MAX_PAD:MAX_PAD + w]


# ---------------------------------------------------------------------------
# Pure-JAX reference (lax convs) matching the PyTorch module
# ---------------------------------------------------------------------------
def msfa_ref(x_nchw, params):
    cout = params["b1"].shape[0]

    def conv(x, w_hwio, b, d, k):
        out = jax.lax.conv_general_dilated(
            x, w_hwio, window_strides=(1, 1),
            padding=[(d, d), (d, d)] if k == 3 else [(0, 0), (0, 0)],
            rhs_dilation=(d, d),
            dimension_numbers=("NCHW", "HWIO", "NCHW"))
        return out + b.reshape(1, -1, 1, 1)

    y1 = jax.nn.relu(conv(x_nchw, params["w1"], params["b1"], 1, 3))
    D = len(DILATIONS)
    y2 = jax.nn.relu(conv(y1, params["w2"].reshape(1, 1, cout, D),
                          params["b2"], 1, 1))
    wmap = jax.nn.softmax(y2, axis=1)

    out = 0.0
    for i, d in enumerate(DILATIONS):
        feat = jax.nn.relu(conv(x_nchw, params["w_dil"][i],
                                params["b_dil"][i], d, 3))
        out = out + wmap[:, i:i + 1, :, :] * feat
    return out


def init_params(key, cin, cout):
    ks = jax.random.split(key, 6)
    D = len(DILATIONS)
    s = 0.1
    return {
        "w_dil": s * jax.random.normal(ks[0], (D, 3, 3, cin, cout), jnp.float32),
        "b_dil": s * jax.random.normal(ks[1], (D, cout), jnp.float32),
        "w1": s * jax.random.normal(ks[2], (3, 3, cin, cout), jnp.float32),
        "b1": s * jax.random.normal(ks[3], (cout,), jnp.float32),
        "w2": s * jax.random.normal(ks[4], (cout, D), jnp.float32),
        "b2": s * jax.random.normal(ks[5], (D,), jnp.float32),
    }


if __name__ == "__main__":
    key = jax.random.PRNGKey(0)
    kx, kp = jax.random.split(key)

    N, C, H, W = 2, 8, 16, 16  # small synthetic shapes (in_channels == out_channels)
    x = jax.random.normal(kx, (N, C, H, W), jnp.float32)
    params = init_params(kp, C, C)

    msfa = jax.jit(msfa_pallas)
    out = jax.block_until_ready(msfa(x, params))
    ref = jax.block_until_ready(msfa_ref(x, params))

    assert out.shape == (N, C, H, W)
    # bf16 MXU operands with f32 accumulation -> relaxed tolerance vs f32 ref.
    err = float(jnp.max(jnp.abs(out - ref)))
    assert jnp.allclose(out, ref, atol=5e-2, rtol=5e-2), err
    print("KERNEL_OK")
</pallas_src>

<mosaic_0001>
module attributes {stable_mosaic.version = 11 : i64} {
  func.func @_msfa_kernel(%arg0: i32, %arg1: i32, %arg2: memref<1x1x8x784xbf16, #tpu.memory_space<vmem>>, %arg3: memref<9x16x8xbf16, #tpu.memory_space<vmem>>, %arg4: memref<27x8x8xbf16, #tpu.memory_space<vmem>>, %arg5: memref<4x8xbf16, #tpu.memory_space<vmem>>, %arg6: memref<8x1xf32, #tpu.memory_space<vmem>>, %arg7: memref<8x4xf32, #tpu.memory_space<vmem>>, %arg8: memref<4x1xf32, #tpu.memory_space<vmem>>, %arg9: memref<1x8x256xf32, #tpu.memory_space<vmem>>) attributes {dimension_semantics = [#tpu.dimension_semantics<parallel>, #tpu.dimension_semantics<parallel>], iteration_bounds = array<i64: 2, 2>, scalar_prefetch = 0 : i64, scratch_operands = 0 : i64, tpu.core_type = #tpu.core_type<tc>, window_params = [{transform_indices = @transform_0, window_bounds = array<i64: 1, 1, 8, 784>}, {pipeline_mode = #tpu.pipeline_mode<synchronous>, transform_indices = @transform_1, window_bounds = array<i64: 9, 16, 8>}, {pipeline_mode = #tpu.pipeline_mode<synchronous>, transform_indices = @transform_2, window_bounds = array<i64: 27, 8, 8>}, {pipeline_mode = #tpu.pipeline_mode<synchronous>, transform_indices = @transform_3, window_bounds = array<i64: 4, 8>}, {pipeline_mode = #tpu.pipeline_mode<synchronous>, transform_indices = @transform_4, window_bounds = array<i64: 8, 1>}, {pipeline_mode = #tpu.pipeline_mode<synchronous>, transform_indices = @transform_5, window_bounds = array<i64: 8, 4>}, {pipeline_mode = #tpu.pipeline_mode<synchronous>, transform_indices = @transform_6, window_bounds = array<i64: 4, 1>}, {transform_indices = @transform_7, window_bounds = array<i64: 1, 8, 256>}]} {
    %c0 = arith.constant 0 : index
    %c0_0 = arith.constant 0 : index
    %c0_1 = arith.constant 0 : index
    %0 = vector.load %arg3[%c0, %c0_0, %c0_1] : memref<9x16x8xbf16, #tpu.memory_space<vmem>>, vector<1x16x8xbf16>
    %1 = vector.shape_cast %0 : vector<1x16x8xbf16> to vector<16x8xbf16>
    %c0_2 = arith.constant 0 : index
    %c0_3 = arith.constant 0 : index
    %c0_4 = arith.constant 0 : index
    %c231 = arith.constant 231 : index
    %2 = vector.load %arg2[%c0_2, %c0_3, %c0_4, %c231] : memref<1x1x8x784xbf16, #tpu.memory_space<vmem>>, vector<1x1x8x256xbf16>
    %3 = vector.shape_cast %2 : vector<1x1x8x256xbf16> to vector<8x256xbf16>
    %cst = arith.constant dense<0.000000e+00> : vector<16x256xf32>
    %4 = tpu.matmul %1, %3, %cst {dimension_numbers = #tpu.dot_dimension_numbers<[1], [0], [0], [1], [0, 0, 1, 1], [], []>} : vector<16x8xbf16>, vector<8x256xbf16>, vector<16x256xf32> -> vector<16x256xf32>
    %c1 = arith.constant 1 : index
    %c0_5 = arith.constant 0 : index
    %c0_6 = arith.constant 0 : index
    %5 = vector.load %arg3[%c1, %c0_5, %c0_6] : memref<9x16x8xbf16, #tpu.memory_space<vmem>>, vector<1x16x8xbf16>
    %6 = vector.shape_cast %5 : vector<1x16x8xbf16> to vector<16x8xbf16>
    %c0_7 = arith.constant 0 : index
    %c0_8 = arith.constant 0 : index
    %c0_9 = arith.constant 0 : index
    %c232 = arith.constant 232 : index
    %7 = vector.load %arg2[%c0_7, %c0_8, %c0_9, %c232] : memref<1x1x8x784xbf16, #tpu.memory_space<vmem>>, vector<1x1x8x256xbf16>
    %8 = vector.shape_cast %7 : vector<1x1x8x256xbf16> to vector<8x256xbf16>
    %cst_10 = arith.constant dense<0.000000e+00> : vector<16x256xf32>
    %9 = tpu.matmul %6, %8, %cst_10 {dimension_numbers = #tpu.dot_dimension_numbers<[1], [0], [0], [1], [0, 0, 1, 1], [], []>} : vector<16x8xbf16>, vector<8x256xbf16>, vector<16x256xf32> -> vector<16x256xf32>
    %10 = arith.addf %4, %9 : vector<16x256xf32>
    %c2 = arith.constant 2 : index
    %c0_11 = arith.constant 0 : index
    %c0_12 = arith.constant 0 : index
    %11 = vector.load %arg3[%c2, %c0_11, %c0_12] : memref<9x16x8xbf16, #tpu.memory_space<vmem>>, vector<1x16x8xbf16>
    %12 = vector.shape_cast %11 : vector<1x16x8xbf16> to vector<16x8xbf16>
    %c0_13 = arith.constant 0 : index
    %c0_14 = arith.constant 0 : index
    %c0_15 = arith.constant 0 : index
    %c233 = arith.constant 233 : index
    %13 = vector.load %arg2[%c0_13, %c0_14, %c0_15, %c233] : memref<1x1x8x784xbf16, #tpu.memory_space<vmem>>, vector<1x1x8x256xbf16>
    %14 = vector.shape_cast %13 : vector<1x1x8x256xbf16> to vector<8x256xbf16>
    %cst_16 = arith.constant dense<0.000000e+00> : vector<16x256xf32>
    %15 = tpu.matmul %12, %14, %cst_16 {dimension_numbers = #tpu.dot_dimension_numbers<[1], [0], [0], [1], [0, 0, 1, 1], [], []>} : vector<16x8xbf16>, vector<8x256xbf16>, vector<16x256xf32> -> vector<16x256xf32>
    %16 = arith.addf %10, %15 : vector<16x256xf32>
    %c3 = arith.constant 3 : index
    %c0_17 = arith.constant 0 : index
    %c0_18 = arith.constant 0 : index
    %17 = vector.load %arg3[%c3, %c0_17, %c0_18] : memref<9x16x8xbf16, #tpu.memory_space<vmem>>, vector<1x16x8xbf16>
    %18 = vector.shape_cast %17 : vector<1x16x8xbf16> to vector<16x8xbf16>
    %c0_19 = arith.constant 0 : index
    %c0_20 = arith.constant 0 : index
    %c0_21 = arith.constant 0 : index
    %c263 = arith.constant 263 : index
    %19 = vector.load %arg2[%c0_19, %c0_20, %c0_21, %c263] : memref<1x1x8x784xbf16, #tpu.memory_space<vmem>>, vector<1x1x8x256xbf16>
    %20 = vector.shape_cast %19 : vector<1x1x8x256xbf16> to vector<8x256xbf16>
    %cst_22 = arith.constant dense<0.000000e+00> : vector<16x256xf32>
    %21 = tpu.matmul %18, %20, %cst_22 {dimension_numbers = #tpu.dot_dimension_numbers<[1], [0], [0], [1], [0, 0, 1, 1], [], []>} : vector<16x8xbf16>, vector<8x256xbf16>, vector<16x256xf32> -> vector<16x256xf32>
    %22 = arith.addf %16, %21 : vector<16x256xf32>
    %c4 = arith.constant 4 : index
    %c0_23 = arith.constant 0 : index
    %c0_24 = arith.constant 0 : index
    %23 = vector.load %arg3[%c4, %c0_23, %c0_24] : memref<9x16x8xbf16, #tpu.memory_space<vmem>>, vector<1x16x8xbf16>
    %24 = vector.shape_cast %23 : vector<1x16x8xbf16> to vector<16x8xbf16>
    %c0_25 = arith.constant 0 : index
    %c0_26 = arith.constant 0 : index
    %c0_27 = arith.constant 0 : index
    %c264 = arith.constant 264 : index
    %25 = vector.load %arg2[%c0_25, %c0_26, %c0_27, %c264] : memref<1x1x8x784xbf16, #tpu.memory_space<vmem>>, vector<1x1x8x256xbf16>
    %26 = vector.shape_cast %25 : vector<1x1x8x256xbf16> to vector<8x256xbf16>
    %cst_28 = arith.constant dense<0.000000e+00> : vector<16x256xf32>
    %27 = tpu.matmul %24, %26, %cst_28 {dimension_numbers = #tpu.dot_dimension_numbers<[1], [0], [0], [1], [0, 0, 1, 1], [], []>} : vector<16x8xbf16>, vector<8x256xbf16>, vector<16x256xf32> -> vector<16x256xf32>
    %28 = arith.addf %22, %27 : vector<16x256xf32>
    %c5 = arith.constant 5 : index
    %c0_29 = arith.constant 0 : index
    %c0_30 = arith.constant 0 : index
    %29 = vector.load %arg3[%c5, %c0_29, %c0_30] : memref<9x16x8xbf16, #tpu.memory_space<vmem>>, vector<1x16x8xbf16>
    %30 = vector.shape_cast %29 : vector<1x16x8xbf16> to vector<16x8xbf16>
    %c0_31 = arith.constant 0 : index
    %c0_32 = arith.constant 0 : index
    %c0_33 = arith.constant 0 : index
    %c265 = arith.constant 265 : index
    %31 = vector.load %arg2[%c0_31, %c0_32, %c0_33, %c265] : memref<1x1x8x784xbf16, #tpu.memory_space<vmem>>, vector<1x1x8x256xbf16>
    %32 = vector.shape_cast %31 : vector<1x1x8x256xbf16> to vector<8x256xbf16>
    %cst_34 = arith.constant dense<0.000000e+00> : vector<16x256xf32>
    %33 = tpu.matmul %30, %32, %cst_34 {dimension_numbers = #tpu.dot_dimension_numbers<[1], [0], [0], [1], [0, 0, 1, 1], [], []>} : vector<16x8xbf16>, vector<8x256xbf16>, vector<16x256xf32> -> vector<16x256xf32>
    %34 = arith.addf %28, %33 : vector<16x256xf32>
    %c6 = arith.constant 6 : index
    %c0_35 = arith.constant 0 : index
    %c0_36 = arith.constant 0 : index
    %35 = vector.load %arg3[%c6, %c0_35, %c0_36] : memref<9x16x8xbf16, #tpu.memory_space<vmem>>, vector<1x16x8xbf16>
    %36 = vector.shape_cast %35 : vector<1x16x8xbf16> to vector<16x8xbf16>
    %c0_37 = arith.constant 0 : index
    %c0_38 = arith.constant 0 : index
    %c0_39 = arith.constant 0 : index
    %c295 = arith.constant 295 : index
    %37 = vector.load %arg2[%c0_37, %c0_38, %c0_39, %c295] : memref<1x1x8x784xbf16, #tpu.memory_space<vmem>>, vector<1x1x8x256xbf16>
    %38 = vector.shape_cast %37 : vector<1x1x8x256xbf16> to vector<8x256xbf16>
    %cst_40 = arith.constant dense<0.000000e+00> : vector<16x256xf32>
    %39 = tpu.matmul %36, %38, %cst_40 {dimension_numbers = #tpu.dot_dimension_numbers<[1], [0], [0], [1], [0, 0, 1, 1], [], []>} : vector<16x8xbf16>, vector<8x256xbf16>, vector<16x256xf32> -> vector<16x256xf32>
    %40 = arith.addf %34, %39 : vector<16x256xf32>
    %c7 = arith.constant 7 : index
    %c0_41 = arith.constant 0 : index
    %c0_42 = arith.constant 0 : index
    %41 = vector.load %arg3[%c7, %c0_41, %c0_42] : memref<9x16x8xbf16, #tpu.memory_space<vmem>>, vector<1x16x8xbf16>
    %42 = vector.shape_cast %41 : vector<1x16x8xbf16> to vector<16x8xbf16>
    %c0_43 = arith.constant 0 : index
    %c0_44 = arith.constant 0 : index
    %c0_45 = arith.constant 0 : index
    %c296 = arith.constant 296 : index
    %43 = vector.load %arg2[%c0_43, %c0_44, %c0_45, %c296] : memref<1x1x8x784xbf16, #tpu.memory_space<vmem>>, vector<1x1x8x256xbf16>
    %44 = vector.shape_cast %43 : vector<1x1x8x256xbf16> to vector<8x256xbf16>
    %cst_46 = arith.constant dense<0.000000e+00> : vector<16x256xf32>
    %45 = tpu.matmul %42, %44, %cst_46 {dimension_numbers = #tpu.dot_dimension_numbers<[1], [0], [0], [1], [0, 0, 1, 1], [], []>} : vector<16x8xbf16>, vector<8x256xbf16>, vector<16x256xf32> -> vector<16x256xf32>
    %46 = arith.addf %40, %45 : vector<16x256xf32>
    %c8 = arith.constant 8 : index
    %c0_47 = arith.constant 0 : index
    %c0_48 = arith.constant 0 : index
    %47 = vector.load %arg3[%c8, %c0_47, %c0_48] : memref<9x16x8xbf16, #tpu.memory_space<vmem>>, vector<1x16x8xbf16>
    %48 = vector.shape_cast %47 : vector<1x16x8xbf16> to vector<16x8xbf16>
    %c0_49 = arith.constant 0 : index
    %c0_50 = arith.constant 0 : index
    %c0_51 = arith.constant 0 : index
    %c297 = arith.constant 297 : index
    %49 = vector.load %arg2[%c0_49, %c0_50, %c0_51, %c297] : memref<1x1x8x784xbf16, #tpu.memory_space<vmem>>, vector<1x1x8x256xbf16>
    %50 = vector.shape_cast %49 : vector<1x1x8x256xbf16> to vector<8x256xbf16>
    %cst_52 = arith.constant dense<0.000000e+00> : vector<16x256xf32>
    %51 = tpu.matmul %48, %50, %cst_52 {dimension_numbers = #tpu.dot_dimension_numbers<[1], [0], [0], [1], [0, 0, 1, 1], [], []>} : vector<16x8xbf16>, vector<8x256xbf16>, vector<16x256xf32> -> vector<16x256xf32>
    %52 = arith.addf %46, %51 : vector<16x256xf32>
    %53 = vector.extract_strided_slice %52 {offsets = [0, 0], sizes = [8, 256], strides = [1, 1]} : vector<16x256xf32> to vector<8x256xf32>
    %c0_53 = arith.constant 0 : index
    %c0_54 = arith.constant 0 : index
    %54 = vector.load %arg6[%c0_53, %c0_54] : memref<8x1xf32, #tpu.memory_space<vmem>>, vector<8x1xf32>
    %55 = vector.broadcast %54 : vector<8x1xf32> to vector<8x256xf32>
    %56 = arith.addf %53, %55 : vector<8x256xf32>
    %cst_55 = arith.constant 0.000000e+00 : f32
    %57 = vector.broadcast %cst_55 : f32 to vector<8x256xf32>
    %58 = arith.maximumf %56, %57 : vector<8x256xf32>
    %59 = vector.extract_strided_slice %52 {offsets = [8, 0], sizes = [8, 256], strides = [1, 1]} : vector<16x256xf32> to vector<8x256xf32>
    %c0_56 = arith.constant 0 : index
    %c0_57 = arith.constant 0 : index
    %60 = vector.load %arg7[%c0_56, %c0_57] : memref<8x4xf32, #tpu.memory_space<vmem>>, vector<8x1xf32>
    %61 = vector.broadcast %60 : vector<8x1xf32> to vector<8x256xf32>
    %62 = arith.addf %59, %61 : vector<8x256xf32>
    %cst_58 = arith.constant 0.000000e+00 : f32
    %63 = vector.broadcast %cst_58 : f32 to vector<8x256xf32>
    %64 = arith.maximumf %62, %63 : vector<8x256xf32>
    %c0_59 = arith.constant 0 : index
    %c0_60 = arith.constant 0 : index
    %65 = vector.load %arg5[%c0_59, %c0_60] : memref<4x8xbf16, #tpu.memory_space<vmem>>, vector<4x8xbf16>
    %66 = arith.truncf %58 : vector<8x256xf32> to vector<8x256xbf16>
    %cst_61 = arith.constant dense<0.000000e+00> : vector<4x256xf32>
    %67 = tpu.matmul %65, %66, %cst_61 {dimension_numbers = #tpu.dot_dimension_numbers<[1], [0], [0], [1], [0, 0, 1, 1], [], []>} : vector<4x8xbf16>, vector<8x256xbf16>, vector<4x256xf32> -> vector<4x256xf32>
    %c0_62 = arith.constant 0 : index
    %c0_63 = arith.constant 0 : index
    %68 = vector.load %arg8[%c0_62, %c0_63] : memref<4x1xf32, #tpu.memory_space<vmem>>, vector<4x1xf32>
    %69 = vector.broadcast %68 : vector<4x1xf32> to vector<4x256xf32>
    %70 = arith.addf %67, %69 : vector<4x256xf32>
    %cst_64 = arith.constant 0.000000e+00 : f32
    %71 = vector.broadcast %cst_64 : f32 to vector<4x256xf32>
    %72 = arith.maximumf %70, %71 : vector<4x256xf32>
    %cst_65 = arith.constant dense<0xFF800000> : vector<256xf32>
    %73 = vector.multi_reduction <maximumf>, %72, %cst_65 [0] : vector<4x256xf32> to vector<256xf32>
    %74 = vector.shape_cast %73 : vector<256xf32> to vector<1x256xf32>
    %75 = vector.broadcast %74 : vector<1x256xf32> to vector<4x256xf32>
    %76 = arith.subf %72, %75 : vector<4x256xf32>
    %77 = math.exp %76 : vector<4x256xf32>
    %cst_66 = arith.constant dense<0.000000e+00> : vector<256xf32>
    %78 = vector.multi_reduction <add>, %77, %cst_66 [0] : vector<4x256xf32> to vector<256xf32>
    %79 = vector.shape_cast %78 : vector<256xf32> to vector<1x256xf32>
    %80 = tpu.reciprocal %79 {approx = true} : vector<1x256xf32> -> vector<1x256xf32>
    %81 = vector.broadcast %80 : vector<1x256xf32> to vector<4x256xf32>
    %82 = arith.mulf %77, %81 : vector<4x256xf32>
    %83 = vector.extract_strided_slice %82 {offsets = [0, 0], sizes = [1, 256], strides = [1, 1]} : vector<4x256xf32> to vector<1x256xf32>
    %84 = vector.broadcast %83 : vector<1x256xf32> to vector<8x256xf32>
    %85 = arith.mulf %84, %64 : vector<8x256xf32>
    %c0_67 = arith.constant 0 : index
    %c0_68 = arith.constant 0 : index
    %c0_69 = arith.constant 0 : index
    %86 = vector.load %arg4[%c0_67, %c0_68, %c0_69] : memref<27x8x8xbf16, #tpu.memory_space<vmem>>, vector<1x8x8xbf16>
    %87 = vector.shape_cast %86 : vector<1x8x8xbf16> to vector<8x8xbf16>
    %c0_70 = arith.constant 0 : index
    %c0_71 = arith.constant 0 : index
    %c0_72 = arith.constant 0 : index
    %c198 = arith.constant 198 : index
    %88 = vector.load %arg2[%c0_70, %c0_71, %c0_72, %c198] : memref<1x1x8x784xbf16, #tpu.memory_space<vmem>>, vector<1x1x8x256xbf16>
    %89 = vector.shape_cast %88 : vector<1x1x8x256xbf16> to vector<8x256xbf16>
    %cst_73 = arith.constant dense<0.000000e+00> : vector<8x256xf32>
    %90 = tpu.matmul %87, %89, %cst_73 {dimension_numbers = #tpu.dot_dimension_numbers<[1], [0], [0], [1], [0, 0, 1, 1], [], []>} : vector<8x8xbf16>, vector<8x256xbf16>, vector<8x256xf32> -> vector<8x256xf32>
    %c1_74 = arith.constant 1 : index
    %c0_75 = arith.constant 0 : index
    %c0_76 = arith.constant 0 : index
    %91 = vector.load %arg4[%c1_74, %c0_75, %c0_76] : memref<27x8x8xbf16, #tpu.memory_space<vmem>>, vector<1x8x8xbf16>
    %92 = vector.shape_cast %91 : vector<1x8x8xbf16> to vector<8x8xbf16>
    %c0_77 = arith.constant 0 : index
    %c0_78 = arith.constant 0 : index
    %c0_79 = arith.constant 0 : index
    %c200 = arith.constant 200 : index
    %93 = vector.load %arg2[%c0_77, %c0_78, %c0_79, %c200] : memref<1x1x8x784xbf16, #tpu.memory_space<vmem>>, vector<1x1x8x256xbf16>
    %94 = vector.shape_cast %93 : vector<1x1x8x256xbf16> to vector<8x256xbf16>
    %cst_80 = arith.constant dense<0.000000e+00> : vector<8x256xf32>
    %95 = tpu.matmul %92, %94, %cst_80 {dimension_numbers = #tpu.dot_dimension_numbers<[1], [0], [0], [1], [0, 0, 1, 1], [], []>} : vector<8x8xbf16>, vector<8x256xbf16>, vector<8x256xf32> -> vector<8x256xf32>
    %96 = arith.addf %90, %95 : vector<8x256xf32>
    %c2_81 = arith.constant 2 : index
    %c0_82 = arith.constant 0 : index
    %c0_83 = arith.constant 0 : index
    %97 = vector.load %arg4[%c2_81, %c0_82, %c0_83] : memref<27x8x8xbf16, #tpu.memory_space<vmem>>, vector<1x8x8xbf16>
    %98 = vector.shape_cast %97 : vector<1x8x8xbf16> to vector<8x8xbf16>
    %c0_84 = arith.constant 0 : index
    %c0_85 = arith.constant 0 : index
    %c0_86 = arith.constant 0 : index
    %c202 = arith.constant 202 : index
    %99 = vector.load %arg2[%c0_84, %c0_85, %c0_86, %c202] : memref<1x1x8x784xbf16, #tpu.memory_space<vmem>>, vector<1x1x8x256xbf16>
    %100 = vector.shape_cast %99 : vector<1x1x8x256xbf16> to vector<8x256xbf16>
    %cst_87 = arith.constant dense<0.000000e+00> : vector<8x256xf32>
    %101 = tpu.matmul %98, %100, %cst_87 {dimension_numbers = #tpu.dot_dimension_numbers<[1], [0], [0], [1], [0, 0, 1, 1], [], []>} : vector<8x8xbf16>, vector<8x256xbf16>, vector<8x256xf32> -> vector<8x256xf32>
    %102 = arith.addf %96, %101 : vector<8x256xf32>
    %c3_88 = arith.constant 3 : index
    %c0_89 = arith.constant 0 : index
    %c0_90 = arith.constant 0 : index
    %103 = vector.load %arg4[%c3_88, %c0_89, %c0_90] : memref<27x8x8xbf16, #tpu.memory_space<vmem>>, vector<1x8x8xbf16>
    %104 = vector.shape_cast %103 : vector<1x8x8xbf16> to vector<8x8xbf16>
    %c0_91 = arith.constant 0 : index
    %c0_92 = arith.constant 0 : index
    %c0_93 = arith.constant 0 : index
    %c262 = arith.constant 262 : index
    %105 = vector.load %arg2[%c0_91, %c0_92, %c0_93, %c262] : memref<1x1x8x784xbf16, #tpu.memory_space<vmem>>, vector<1x1x8x256xbf16>
    %106 = vector.shape_cast %105 : vector<1x1x8x256xbf16> to vector<8x256xbf16>
    %cst_94 = arith.constant dense<0.000000e+00> : vector<8x256xf32>
    %107 = tpu.matmul %104, %106, %cst_94 {dimension_numbers = #tpu.dot_dimension_numbers<[1], [0], [0], [1], [0, 0, 1, 1], [], []>} : vector<8x8xbf16>, vector<8x256xbf16>, vector<8x256xf32> -> vector<8x256xf32>
    %108 = arith.addf %102, %107 : vector<8x256xf32>
    %c4_95 = arith.constant 4 : index
    %c0_96 = arith.constant 0 : index
    %c0_97 = arith.constant 0 : index
    %109 = vector.load %arg4[%c4_95, %c0_96, %c0_97] : memref<27x8x8xbf16, #tpu.memory_space<vmem>>, vector<1x8x8xbf16>
    %110 = vector.shape_cast %109 : vector<1x8x8xbf16> to vector<8x8xbf16>
    %c0_98 = arith.constant 0 : index
    %c0_99 = arith.constant 0 : index
    %c0_100 = arith.constant 0 : index
    %c264_101 = arith.constant 264 : index
    %111 = vector.load %arg2[%c0_98, %c0_99, %c0_100, %c264_101] : memref<1x1x8x784xbf16, #tpu.memory_space<vmem>>, vector<1x1x8x256xbf16>
    %112 = vector.shape_cast %111 : vector<1x1x8x256xbf16> to vector<8x256xbf16>
    %cst_102 = arith.constant dense<0.000000e+00> : vector<8x256xf32>
    %113 = tpu.matmul %110, %112, %cst_102 {dimension_numbers = #tpu.dot_dimension_numbers<[1], [0], [0], [1], [0, 0, 1, 1], [], []>} : vector<8x8xbf16>, vector<8x256xbf16>, vector<8x256xf32> -> vector<8x256xf32>
    %114 = arith.addf %108, %113 : vector<8x256xf32>
    %c5_103 = arith.constant 5 : index
    %c0_104 = arith.constant 0 : index
    %c0_105 = arith.constant 0 : index
    %115 = vector.load %arg4[%c5_103, %c0_104, %c0_105] : memref<27x8x8xbf16, #tpu.memory_space<vmem>>, vector<1x8x8xbf16>
    %116 = vector.shape_cast %115 : vector<1x8x8xbf16> to vector<8x8xbf16>
    %c0_106 = arith.constant 0 : index
    %c0_107 = arith.constant 0 : index
    %c0_108 = arith.constant 0 : index
    %c266 = arith.constant 266 : index
    %117 = vector.load %arg2[%c0_106, %c0_107, %c0_108, %c266] : memref<1x1x8x784xbf16, #tpu.memory_space<vmem>>, vector<1x1x8x256xbf16>
    %118 = vector.shape_cast %117 : vector<1x1x8x256xbf16> to vector<8x256xbf16>
    %cst_109 = arith.constant dense<0.000000e+00> : vector<8x256xf32>
    %119 = tpu.matmul %116, %118, %cst_109 {dimension_numbers = #tpu.dot_dimension_numbers<[1], [0], [0], [1], [0, 0, 1, 1], [], []>} : vector<8x8xbf16>, vector<8x256xbf16>, vector<8x256xf32> -> vector<8x256xf32>
    %120 = arith.addf %114, %119 : vector<8x256xf32>
    %c6_110 = arith.constant 6 : index
    %c0_111 = arith.constant 0 : index
    %c0_112 = arith.constant 0 : index
    %121 = vector.load %arg4[%c6_110, %c0_111, %c0_112] : memref<27x8x8xbf16, #tpu.memory_space<vmem>>, vector<1x8x8xbf16>
    %122 = vector.shape_cast %121 : vector<1x8x8xbf16> to vector<8x8xbf16>
    %c0_113 = arith.constant 0 : index
    %c0_114 = arith.constant 0 : index
    %c0_115 = arith.constant 0 : index
    %c326 = arith.constant 326 : index
    %123 = vector.load %arg2[%c0_113, %c0_114, %c0_115, %c326] : memref<1x1x8x784xbf16, #tpu.memory_space<vmem>>, vector<1x1x8x256xbf16>
    %124 = vector.shape_cast %123 : vector<1x1x8x256xbf16> to vector<8x256xbf16>
    %cst_116 = arith.constant dense<0.000000e+00> : vector<8x256xf32>
    %125 = tpu.matmul %122, %124, %cst_116 {dimension_numbers = #tpu.dot_dimension_numbers<[1], [0], [0], [1], [0, 0, 1, 1], [], []>} : vector<8x8xbf16>, vector<8x256xbf16>, vector<8x256xf32> -> vector<8x256xf32>
    %126 = arith.addf %120, %125 : vector<8x256xf32>
    %c7_117 = arith.constant 7 : index
    %c0_118 = arith.constant 0 : index
    %c0_119 = arith.constant 0 : index
    %127 = vector.load %arg4[%c7_117, %c0_118, %c0_119] : memref<27x8x8xbf16, #tpu.memory_space<vmem>>, vector<1x8x8xbf16>
    %128 = vector.shape_cast %127 : vector<1x8x8xbf16> to vector<8x8xbf16>
    %c0_120 = arith.constant 0 : index
    %c0_121 = arith.constant 0 : index
    %c0_122 = arith.constant 0 : index
    %c328 = arith.constant 328 : index
    %129 = vector.load %arg2[%c0_120, %c0_121, %c0_122, %c328] : memref<1x1x8x784xbf16, #tpu.memory_space<vmem>>, vector<1x1x8x256xbf16>
    %130 = vector.shape_cast %129 : vector<1x1x8x256xbf16> to vector<8x256xbf16>
    %cst_123 = arith.constant dense<0.000000e+00> : vector<8x256xf32>
    %131 = tpu.matmul %128, %130, %cst_123 {dimension_numbers = #tpu.dot_dimension_numbers<[1], [0], [0], [1], [0, 0, 1, 1], [], []>} : vector<8x8xbf16>, vector<8x256xbf16>, vector<8x256xf32> -> vector<8x256xf32>
    %132 = arith.addf %126, %131 : vector<8x256xf32>
    %c8_124 = arith.constant 8 : index
    %c0_125 = arith.constant 0 : index
    %c0_126 = arith.constant 0 : index
    %133 = vector.load %arg4[%c8_124, %c0_125, %c0_126] : memref<27x8x8xbf16, #tpu.memory_space<vmem>>, vector<1x8x8xbf16>
    %134 = vector.shape_cast %133 : vector<1x8x8xbf16> to vector<8x8xbf16>
    %c0_127 = arith.constant 0 : index
    %c0_128 = arith.constant 0 : index
    %c0_129 = arith.constant 0 : index
    %c330 = arith.constant 330 : index
    %135 = vector.load %arg2[%c0_127, %c0_128, %c0_129, %c330] : memref<1x1x8x784xbf16, #tpu.memory_space<vmem>>, vector<1x1x8x256xbf16>
    %136 = vector.shape_cast %135 : vector<1x1x8x256xbf16> to vector<8x256xbf16>
    %cst_130 = arith.constant dense<0.000000e+00> : vector<8x256xf32>
    %137 = tpu.matmul %134, %136, %cst_130 {dimension_numbers = #tpu.dot_dimension_numbers<[1], [0], [0], [1], [0, 0, 1, 1], [], []>} : vector<8x8xbf16>, vector<8x256xbf16>, vector<8x256xf32> -> vector<8x256xf32>
    %138 = arith.addf %132, %137 : vector<8x256xf32>
    %c0_131 = arith.constant 0 : index
    %c1_132 = arith.constant 1 : index
    %139 = vector.load %arg7[%c0_131, %c1_132] : memref<8x4xf32, #tpu.memory_space<vmem>>, vector<8x1xf32>
    %140 = vector.broadcast %139 : vector<8x1xf32> to vector<8x256xf32>
    %141 = arith.addf %138, %140 : vector<8x256xf32>
    %cst_133 = arith.constant 0.000000e+00 : f32
    %142 = vector.broadcast %cst_133 : f32 to vector<8x256xf32>
    %143 = arith.maximumf %141, %142 : vector<8x256xf32>
    %144 = vector.extract_strided_slice %82 {offsets = [1, 0], sizes = [1, 256], strides = [1, 1]} : vector<4x256xf32> to vector<1x256xf32>
    %145 = vector.broadcast %144 : vector<1x256xf32> to vector<8x256xf32>
    %146 = arith.mulf %145, %143 : vector<8x256xf32>
    %147 = arith.addf %85, %146 : vector<8x256xf32>
    %c9 = arith.constant 9 : index
    %c0_134 = arith.constant 0 : index
    %c0_135 = arith.constant 0 : index
    %148 = vector.load %arg4[%c9, %c0_134, %c0_135] : memref<27x8x8xbf16, #tpu.memory_space<vmem>>, vector<1x8x8xbf16>
    %149 = vector.shape_cast %148 : vector<1x8x8xbf16> to vector<8x8xbf16>
    %c0_136 = arith.constant 0 : index
    %c0_137 = arith.constant 0 : index
    %c0_138 = arith.constant 0 : index
    %c132 = arith.constant 132 : index
    %150 = vector.load %arg2[%c0_136, %c0_137, %c0_138, %c132] : memref<1x1x8x784xbf16, #tpu.memory_space<vmem>>, vector<1x1x8x256xbf16>
    %151 = vector.shape_cast %150 : vector<1x1x8x256xbf16> to vector<8x256xbf16>
    %cst_139 = arith.constant dense<0.000000e+00> : vector<8x256xf32>
    %152 = tpu.matmul %149, %151, %cst_139 {dimension_numbers = #tpu.dot_dimension_numbers<[1], [0], [0], [1], [0, 0, 1, 1], [], []>} : vector<8x8xbf16>, vector<8x256xbf16>, vector<8x256xf32> -> vector<8x256xf32>
    %c10 = arith.constant 10 : index
    %c0_140 = arith.constant 0 : index
    %c0_141 = arith.constant 0 : index
    %153 = vector.load %arg4[%c10, %c0_140, %c0_141] : memref<27x8x8xbf16, #tpu.memory_space<vmem>>, vector<1x8x8xbf16>
    %154 = vector.shape_cast %153 : vector<1x8x8xbf16> to vector<8x8xbf16>
    %c0_142 = arith.constant 0 : index
    %c0_143 = arith.constant 0 : index
    %c0_144 = arith.constant 0 : index
    %c136 = arith.constant 136 : index
    %155 = vector.load %arg2[%c0_142, %c0_143, %c0_144, %c136] : memref<1x1x8x784xbf16, #tpu.memory_space<vmem>>, vector<1x1x8x256xbf16>
    %156 = vector.shape_cast %155 : vector<1x1x8x256xbf16> to vector<8x256xbf16>
    %cst_145 = arith.constant dense<0.000000e+00> : vector<8x256xf32>
    %157 = tpu.matmul %154, %156, %cst_145 {dimension_numbers = #tpu.dot_dimension_numbers<[1], [0], [0], [1], [0, 0, 1, 1], [], []>} : vector<8x8xbf16>, vector<8x256xbf16>, vector<8x256xf32> -> vector<8x256xf32>
    %158 = arith.addf %152, %157 : vector<8x256xf32>
    %c11 = arith.constant 11 : index
    %c0_146 = arith.constant 0 : index
    %c0_147 = arith.constant 0 : index
    %159 = vector.load %arg4[%c11, %c0_146, %c0_147] : memref<27x8x8xbf16, #tpu.memory_space<vmem>>, vector<1x8x8xbf16>
    %160 = vector.shape_cast %159 : vector<1x8x8xbf16> to vector<8x8xbf16>
    %c0_148 = arith.constant 0 : index
    %c0_149 = arith.constant 0 : index
    %c0_150 = arith.constant 0 : index
    %c140 = arith.constant 140 : index
    %161 = vector.load %arg2[%c0_148, %c0_149, %c0_150, %c140] : memref<1x1x8x784xbf16, #tpu.memory_space<vmem>>, vector<1x1x8x256xbf16>
    %162 = vector.shape_cast %161 : vector<1x1x8x256xbf16> to vector<8x256xbf16>
    %cst_151 = arith.constant dense<0.000000e+00> : vector<8x256xf32>
    %163 = tpu.matmul %160, %162, %cst_151 {dimension_numbers = #tpu.dot_dimension_numbers<[1], [0], [0], [1], [0, 0, 1, 1], [], []>} : vector<8x8xbf16>, vector<8x256xbf16>, vector<8x256xf32> -> vector<8x256xf32>
    %164 = arith.addf %158, %163 : vector<8x256xf32>
    %c12 = arith.constant 12 : index
    %c0_152 = arith.constant 0 : index
    %c0_153 = arith.constant 0 : index
    %165 = vector.load %arg4[%c12, %c0_152, %c0_153] : memref<27x8x8xbf16, #tpu.memory_space<vmem>>, vector<1x8x8xbf16>
    %166 = vector.shape_cast %165 : vector<1x8x8xbf16> to vector<8x8xbf16>
    %c0_154 = arith.constant 0 : index
    %c0_155 = arith.constant 0 : index
    %c0_156 = arith.constant 0 : index
    %c260 = arith.constant 260 : index
    %167 = vector.load %arg2[%c0_154, %c0_155, %c0_156, %c260] : memref<1x1x8x784xbf16, #tpu.memory_space<vmem>>, vector<1x1x8x256xbf16>
    %168 = vector.shape_cast %167 : vector<1x1x8x256xbf16> to vector<8x256xbf16>
    %cst_157 = arith.constant dense<0.000000e+00> : vector<8x256xf32>
    %169 = tpu.matmul %166, %168, %cst_157 {dimension_numbers = #tpu.dot_dimension_numbers<[1], [0], [0], [1], [0, 0, 1, 1], [], []>} : vector<8x8xbf16>, vector<8x256xbf16>, vector<8x256xf32> -> vector<8x256xf32>
    %170 = arith.addf %164, %169 : vector<8x256xf32>
    %c13 = arith.constant 13 : index
    %c0_158 = arith.constant 0 : index
    %c0_159 = arith.constant 0 : index
    %171 = vector.load %arg4[%c13, %c0_158, %c0_159] : memref<27x8x8xbf16, #tpu.memory_space<vmem>>, vector<1x8x8xbf16>
    %172 = vector.shape_cast %171 : vector<1x8x8xbf16> to vector<8x8xbf16>
    %c0_160 = arith.constant 0 : index
    %c0_161 = arith.constant 0 : index
    %c0_162 = arith.constant 0 : index
    %c264_163 = arith.constant 264 : index
    %173 = vector.load %arg2[%c0_160, %c0_161, %c0_162, %c264_163] : memref<1x1x8x784xbf16, #tpu.memory_space<vmem>>, vector<1x1x8x256xbf16>
    %174 = vector.shape_cast %173 : vector<1x1x8x256xbf16> to vector<8x256xbf16>
    %cst_164 = arith.constant dense<0.000000e+00> : vector<8x256xf32>
    %175 = tpu.matmul %172, %174, %cst_164 {dimension_numbers = #tpu.dot_dimension_numbers<[1], [0], [0], [1], [0, 0, 1, 1], [], []>} : vector<8x8xbf16>, vector<8x256xbf16>, vector<8x256xf32> -> vector<8x256xf32>
    %176 = arith.addf %170, %175 : vector<8x256xf32>
    %c14 = arith.constant 14 : index
    %c0_165 = arith.constant 0 : index
    %c0_166 = arith.constant 0 : index
    %177 = vector.load %arg4[%c14, %c0_165, %c0_166] : memref<27x8x8xbf16, #tpu.memory_space<vmem>>, vector<1x8x8xbf16>
    %178 = vector.shape_cast %177 : vector<1x8x8xbf16> to vector<8x8xbf16>
    %c0_167 = arith.constant 0 : index
    %c0_168 = arith.constant 0 : index
    %c0_169 = arith.constant 0 : index
    %c268 = arith.constant 268 : index
    %179 = vector.load %arg2[%c0_167, %c0_168, %c0_169, %c268] : memref<1x1x8x784xbf16, #tpu.memory_space<vmem>>, vector<1x1x8x256xbf16>
    %180 = vector.shape_cast %179 : vector<1x1x8x256xbf16> to vector<8x256xbf16>
    %cst_170 = arith.constant dense<0.000000e+00> : vector<8x256xf32>
    %181 = tpu.matmul %178, %180, %cst_170 {dimension_numbers = #tpu.dot_dimension_numbers<[1], [0], [0], [1], [0, 0, 1, 1], [], []>} : vector<8x8xbf16>, vector<8x256xbf16>, vector<8x256xf32> -> vector<8x256xf32>
    %182 = arith.addf %176, %181 : vector<8x256xf32>
    %c15 = arith.constant 15 : index
    %c0_171 = arith.constant 0 : index
    %c0_172 = arith.constant 0 : index
    %183 = vector.load %arg4[%c15, %c0_171, %c0_172] : memref<27x8x8xbf16, #tpu.memory_space<vmem>>, vector<1x8x8xbf16>
    %184 = vector.shape_cast %183 : vector<1x8x8xbf16> to vector<8x8xbf16>
    %c0_173 = arith.constant 0 : index
    %c0_174 = arith.constant 0 : index
    %c0_175 = arith.constant 0 : index
    %c388 = arith.constant 388 : index
    %185 = vector.load %arg2[%c0_173, %c0_174, %c0_175, %c388] : memref<1x1x8x784xbf16, #tpu.memory_space<vmem>>, vector<1x1x8x256xbf16>
    %186 = vector.shape_cast %185 : vector<1x1x8x256xbf16> to vector<8x256xbf16>
    %cst_176 = arith.constant dense<0.000000e+00> : vector<8x256xf32>
    %187 = tpu.matmul %184, %186, %cst_176 {dimension_numbers = #tpu.dot_dimension_numbers<[1], [0], [0], [1], [0, 0, 1, 1], [], []>} : vector<8x8xbf16>, vector<8x256xbf16>, vector<8x256xf32> -> vector<8x256xf32>
    %188 = arith.addf %182, %187 : vector<8x256xf32>
    %c16 = arith.constant 16 : index
    %c0_177 = arith.constant 0 : index
    %c0_178 = arith.constant 0 : index
    %189 = vector.load %arg4[%c16, %c0_177, %c0_178] : memref<27x8x8xbf16, #tpu.memory_space<vmem>>, vector<1x8x8xbf16>
    %190 = vector.shape_cast %189 : vector<1x8x8xbf16> to vector<8x8xbf16>
    %c0_179 = arith.constant 0 : index
    %c0_180 = arith.constant 0 : index
    %c0_181 = arith.constant 0 : index
    %c392 = arith.constant 392 : index
    %191 = vector.load %arg2[%c0_179, %c0_180, %c0_181, %c392] : memref<1x1x8x784xbf16, #tpu.memory_space<vmem>>, vector<1x1x8x256xbf16>
    %192 = vector.shape_cast %191 : vector<1x1x8x256xbf16> to vector<8x256xbf16>
    %cst_182 = arith.constant dense<0.000000e+00> : vector<8x256xf32>
    %193 = tpu.matmul %190, %192, %cst_182 {dimension_numbers = #tpu.dot_dimension_numbers<[1], [0], [0], [1], [0, 0, 1, 1], [], []>} : vector<8x8xbf16>, vector<8x256xbf16>, vector<8x256xf32> -> vector<8x256xf32>
    %194 = arith.addf %188, %193 : vector<8x256xf32>
    %c17 = arith.constant 17 : index
    %c0_183 = arith.constant 0 : index
    %c0_184 = arith.constant 0 : index
    %195 = vector.load %arg4[%c17, %c0_183, %c0_184] : memref<27x8x8xbf16, #tpu.memory_space<vmem>>, vector<1x8x8xbf16>
    %196 = vector.shape_cast %195 : vector<1x8x8xbf16> to vector<8x8xbf16>
    %c0_185 = arith.constant 0 : index
    %c0_186 = arith.constant 0 : index
    %c0_187 = arith.constant 0 : index
    %c396 = arith.constant 396 : index
    %197 = vector.load %arg2[%c0_185, %c0_186, %c0_187, %c396] : memref<1x1x8x784xbf16, #tpu.memory_space<vmem>>, vector<1x1x8x256xbf16>
    %198 = vector.shape_cast %197 : vector<1x1x8x256xbf16> to vector<8x256xbf16>
    %cst_188 = arith.constant dense<0.000000e+00> : vector<8x256xf32>
    %199 = tpu.matmul %196, %198, %cst_188 {dimension_numbers = #tpu.dot_dimension_numbers<[1], [0], [0], [1], [0, 0, 1, 1], [], []>} : vector<8x8xbf16>, vector<8x256xbf16>, vector<8x256xf32> -> vector<8x256xf32>
    %200 = arith.addf %194, %199 : vector<8x256xf32>
    %c0_189 = arith.constant 0 : index
    %c2_190 = arith.constant 2 : index
    %201 = vector.load %arg7[%c0_189, %c2_190] : memref<8x4xf32, #tpu.memory_space<vmem>>, vector<8x1xf32>
    %202 = vector.broadcast %201 : vector<8x1xf32> to vector<8x256xf32>
    %203 = arith.addf %200, %202 : vector<8x256xf32>
    %cst_191 = arith.constant 0.000000e+00 : f32
    %204 = vector.broadcast %cst_191 : f32 to vector<8x256xf32>
    %205 = arith.maximumf %203, %204 : vector<8x256xf32>
    %206 = vector.extract_strided_slice %82 {offsets = [2, 0], sizes = [1, 256], strides = [1, 1]} : vector<4x256xf32> to vector<1x256xf32>
    %207 = vector.broadcast %206 : vector<1x256xf32> to vector<8x256xf32>
    %208 = arith.mulf %207, %205 : vector<8x256xf32>
    %209 = arith.addf %147, %208 : vector<8x256xf32>
    %c18 = arith.constant 18 : index
    %c0_192 = arith.constant 0 : index
    %c0_193 = arith.constant 0 : index
    %210 = vector.load %arg4[%c18, %c0_192, %c0_193] : memref<27x8x8xbf16, #tpu.memory_space<vmem>>, vector<1x8x8xbf16>
    %211 = vector.shape_cast %210 : vector<1x8x8xbf16> to vector<8x8xbf16>
    %c0_194 = arith.constant 0 : index
    %c0_195 = arith.constant 0 : index
    %c0_196 = arith.constant 0 : index
    %c0_197 = arith.constant 0 : index
    %212 = vector.load %arg2[%c0_194, %c0_195, %c0_196, %c0_197] : memref<1x1x8x784xbf16, #tpu.memory_space<vmem>>, vector<1x1x8x256xbf16>
    %213 = vector.shape_cast %212 : vector<1x1x8x256xbf16> to vector<8x256xbf16>
    %cst_198 = arith.constant dense<0.000000e+00> : vector<8x256xf32>
    %214 = tpu.matmul %211, %213, %cst_198 {dimension_numbers = #tpu.dot_dimension_numbers<[1], [0], [0], [1], [0, 0, 1, 1], [], []>} : vector<8x8xbf16>, vector<8x256xbf16>, vector<8x256xf32> -> vector<8x256xf32>
    %c19 = arith.constant 19 : index
    %c0_199 = arith.constant 0 : index
    %c0_200 = arith.constant 0 : index
    %215 = vector.load %arg4[%c19, %c0_199, %c0_200] : memref<27x8x8xbf16, #tpu.memory_space<vmem>>, vector<1x8x8xbf16>
    %216 = vector.shape_cast %215 : vector<1x8x8xbf16> to vector<8x8xbf16>
    %c0_201 = arith.constant 0 : index
    %c0_202 = arith.constant 0 : index
    %c0_203 = arith.constant 0 : index
    %c8_204 = arith.constant 8 : index
    %217 = vector.load %arg2[%c0_201, %c0_202, %c0_203, %c8_204] : memref<1x1x8x784xbf16, #tpu.memory_space<vmem>>, vector<1x1x8x256xbf16>
    %218 = vector.shape_cast %217 : vector<1x1x8x256xbf16> to vector<8x256xbf16>
    %cst_205 = arith.constant dense<0.000000e+00> : vector<8x256xf32>
    %219 = tpu.matmul %216, %218, %cst_205 {dimension_numbers = #tpu.dot_dimension_numbers<[1], [0], [0], [1], [0, 0, 1, 1], [], []>} : vector<8x8xbf16>, vector<8x256xbf16>, vector<8x256xf32> -> vector<8x256xf32>
    %220 = arith.addf %214, %219 : vector<8x256xf32>
    %c20 = arith.constant 20 : index
    %c0_206 = arith.constant 0 : index
    %c0_207 = arith.constant 0 : index
    %221 = vector.load %arg4[%c20, %c0_206, %c0_207] : memref<27x8x8xbf16, #tpu.memory_space<vmem>>, vector<1x8x8xbf16>
    %222 = vector.shape_cast %221 : vector<1x8x8xbf16> to vector<8x8xbf16>
    %c0_208 = arith.constant 0 : index
    %c0_209 = arith.constant 0 : index
    %c0_210 = arith.constant 0 : index
    %c16_211 = arith.constant 16 : index
    %223 = vector.load %arg2[%c0_208, %c0_209, %c0_210, %c16_211] : memref<1x1x8x784xbf16, #tpu.memory_space<vmem>>, vector<1x1x8x256xbf16>
    %224 = vector.shape_cast %223 : vector<1x1x8x256xbf16> to vector<8x256xbf16>
    %cst_212 = arith.constant dense<0.000000e+00> : vector<8x256xf32>
    %225 = tpu.matmul %222, %224, %cst_212 {dimension_numbers = #tpu.dot_dimension_numbers<[1], [0], [0], [1], [0, 0, 1, 1], [], []>} : vector<8x8xbf16>, vector<8x256xbf16>, vector<8x256xf32> -> vector<8x256xf32>
    %226 = arith.addf %220, %225 : vector<8x256xf32>
    %c21 = arith.constant 21 : index
    %c0_213 = arith.constant 0 : index
    %c0_214 = arith.constant 0 : index
    %227 = vector.load %arg4[%c21, %c0_213, %c0_214] : memref<27x8x8xbf16, #tpu.memory_space<vmem>>, vector<1x8x8xbf16>
    %228 = vector.shape_cast %227 : vector<1x8x8xbf16> to vector<8x8xbf16>
    %c0_215 = arith.constant 0 : index
    %c0_216 = arith.constant 0 : index
    %c0_217 = arith.constant 0 : index
    %c256 = arith.constant 256 : index
    %229 = vector.load %arg2[%c0_215, %c0_216, %c0_217, %c256] : memref<1x1x8x784xbf16, #tpu.memory_space<vmem>>, vector<1x1x8x256xbf16>
    %230 = vector.shape_cast %229 : vector<1x1x8x256xbf16> to vector<8x256xbf16>
    %cst_218 = arith.constant dense<0.000000e+00> : vector<8x256xf32>
    %231 = tpu.matmul %228, %230, %cst_218 {dimension_numbers = #tpu.dot_dimension_numbers<[1], [0], [0], [1], [0, 0, 1, 1], [], []>} : vector<8x8xbf16>, vector<8x256xbf16>, vector<8x256xf32> -> vector<8x256xf32>
    %232 = arith.addf %226, %231 : vector<8x256xf32>
    %c22 = arith.constant 22 : index
    %c0_219 = arith.constant 0 : index
    %c0_220 = arith.constant 0 : index
    %233 = vector.load %arg4[%c22, %c0_219, %c0_220] : memref<27x8x8xbf16, #tpu.memory_space<vmem>>, vector<1x8x8xbf16>
    %234 = vector.shape_cast %233 : vector<1x8x8xbf16> to vector<8x8xbf16>
    %c0_221 = arith.constant 0 : index
    %c0_222 = arith.constant 0 : index
    %c0_223 = arith.constant 0 : index
    %c264_224 = arith.constant 264 : index
    %235 = vector.load %arg2[%c0_221, %c0_222, %c0_223, %c264_224] : memref<1x1x8x784xbf16, #tpu.memory_space<vmem>>, vector<1x1x8x256xbf16>
    %236 = vector.shape_cast %235 : vector<1x1x8x256xbf16> to vector<8x256xbf16>
    %cst_225 = arith.constant dense<0.000000e+00> : vector<8x256xf32>
    %237 = tpu.matmul %234, %236, %cst_225 {dimension_numbers = #tpu.dot_dimension_numbers<[1], [0], [0], [1], [0, 0, 1, 1], [], []>} : vector<8x8xbf16>, vector<8x256xbf16>, vector<8x256xf32> -> vector<8x256xf32>
    %238 = arith.addf %232, %237 : vector<8x256xf32>
    %c23 = arith.constant 23 : index
    %c0_226 = arith.constant 0 : index
    %c0_227 = arith.constant 0 : index
    %239 = vector.load %arg4[%c23, %c0_226, %c0_227] : memref<27x8x8xbf16, #tpu.memory_space<vmem>>, vector<1x8x8xbf16>
    %240 = vector.shape_cast %239 : vector<1x8x8xbf16> to vector<8x8xbf16>
    %c0_228 = arith.constant 0 : index
    %c0_229 = arith.constant 0 : index
    %c0_230 = arith.constant 0 : index
    %c272 = arith.constant 272 : index
    %241 = vector.load %arg2[%c0_228, %c0_229, %c0_230, %c272] : memref<1x1x8x784xbf16, #tpu.memory_space<vmem>>, vector<1x1x8x256xbf16>
    %242 = vector.shape_cast %241 : vector<1x1x8x256xbf16> to vector<8x256xbf16>
    %cst_231 = arith.constant dense<0.000000e+00> : vector<8x256xf32>
    %243 = tpu.matmul %240, %242, %cst_231 {dimension_numbers = #tpu.dot_dimension_numbers<[1], [0], [0], [1], [0, 0, 1, 1], [], []>} : vector<8x8xbf16>, vector<8x256xbf16>, vector<8x256xf32> -> vector<8x256xf32>
    %244 = arith.addf %238, %243 : vector<8x256xf32>
    %c24 = arith.constant 24 : index
    %c0_232 = arith.constant 0 : index
    %c0_233 = arith.constant 0 : index
    %245 = vector.load %arg4[%c24, %c0_232, %c0_233] : memref<27x8x8xbf16, #tpu.memory_space<vmem>>, vector<1x8x8xbf16>
    %246 = vector.shape_cast %245 : vector<1x8x8xbf16> to vector<8x8xbf16>
    %c0_234 = arith.constant 0 : index
    %c0_235 = arith.constant 0 : index
    %c0_236 = arith.constant 0 : index
    %c512 = arith.constant 512 : index
    %247 = vector.load %arg2[%c0_234, %c0_235, %c0_236, %c512] : memref<1x1x8x784xbf16, #tpu.memory_space<vmem>>, vector<1x1x8x256xbf16>
    %248 = vector.shape_cast %247 : vector<1x1x8x256xbf16> to vector<8x256xbf16>
    %cst_237 = arith.constant dense<0.000000e+00> : vector<8x256xf32>
    %249 = tpu.matmul %246, %248, %cst_237 {dimension_numbers = #tpu.dot_dimension_numbers<[1], [0], [0], [1], [0, 0, 1, 1], [], []>} : vector<8x8xbf16>, vector<8x256xbf16>, vector<8x256xf32> -> vector<8x256xf32>
    %250 = arith.addf %244, %249 : vector<8x256xf32>
    %c25 = arith.constant 25 : index
    %c0_238 = arith.constant 0 : index
    %c0_239 = arith.constant 0 : index
    %251 = vector.load %arg4[%c25, %c0_238, %c0_239] : memref<27x8x8xbf16, #tpu.memory_space<vmem>>, vector<1x8x8xbf16>
    %252 = vector.shape_cast %251 : vector<1x8x8xbf16> to vector<8x8xbf16>
    %c0_240 = arith.constant 0 : index
    %c0_241 = arith.constant 0 : index
    %c0_242 = arith.constant 0 : index
    %c520 = arith.constant 520 : index
    %253 = vector.load %arg2[%c0_240, %c0_241, %c0_242, %c520] : memref<1x1x8x784xbf16, #tpu.memory_space<vmem>>, vector<1x1x8x256xbf16>
    %254 = vector.shape_cast %253 : vector<1x1x8x256xbf16> to vector<8x256xbf16>
    %cst_243 = arith.constant dense<0.000000e+00> : vector<8x256xf32>
    %255 = tpu.matmul %252, %254, %cst_243 {dimension_numbers = #tpu.dot_dimension_numbers<[1], [0], [0], [1], [0, 0, 1, 1], [], []>} : vector<8x8xbf16>, vector<8x256xbf16>, vector<8x256xf32> -> vector<8x256xf32>
    %256 = arith.addf %250, %255 : vector<8x256xf32>
    %c26 = arith.constant 26 : index
    %c0_244 = arith.constant 0 : index
    %c0_245 = arith.constant 0 : index
    %257 = vector.load %arg4[%c26, %c0_244, %c0_245] : memref<27x8x8xbf16, #tpu.memory_space<vmem>>, vector<1x8x8xbf16>
    %258 = vector.shape_cast %257 : vector<1x8x8xbf16> to vector<8x8xbf16>
    %c0_246 = arith.constant 0 : index
    %c0_247 = arith.constant 0 : index
    %c0_248 = arith.constant 0 : index
    %c528 = arith.constant 528 : index
    %259 = vector.load %arg2[%c0_246, %c0_247, %c0_248, %c528] : memref<1x1x8x784xbf16, #tpu.memory_space<vmem>>, vector<1x1x8x256xbf16>
    %260 = vector.shape_cast %259 : vector<1x1x8x256xbf16> to vector<8x256xbf16>
    %cst_249 = arith.constant dense<0.000000e+00> : vector<8x256xf32>
    %261 = tpu.matmul %258, %260, %cst_249 {dimension_numbers = #tpu.dot_dimension_numbers<[1], [0], [0], [1], [0, 0, 1, 1], [], []>} : vector<8x8xbf16>, vector<8x256xbf16>, vector<8x256xf32> -> vector<8x256xf32>
    %262 = arith.addf %256, %261 : vector<8x256xf32>
    %c0_250 = arith.constant 0 : index
    %c3_251 = arith.constant 3 : index
    %263 = vector.load %arg7[%c0_250, %c3_251] : memref<8x4xf32, #tpu.memory_space<vmem>>, vector<8x1xf32>
    %264 = vector.broadcast %263 : vector<8x1xf32> to vector<8x256xf32>
    %265 = arith.addf %262, %264 : vector<8x256xf32>
    %cst_252 = arith.constant 0.000000e+00 : f32
    %266 = vector.broadcast %cst_252 : f32 to vector<8x256xf32>
    %267 = arith.maximumf %265, %266 : vector<8x256xf32>
    %268 = vector.extract_strided_slice %82 {offsets = [3, 0], sizes = [1, 256], strides = [1, 1]} : vector<4x256xf32> to vector<1x256xf32>
    %269 = vector.broadcast %268 : vector<1x256xf32> to vector<8x256xf32>
    %270 = arith.mulf %269, %267 : vector<8x256xf32>
    %271 = arith.addf %209, %270 : vector<8x256xf32>
    %c0_253 = arith.constant 0 : index
    %c0_254 = arith.constant 0 : index
    %c0_255 = arith.constant 0 : index
    %272 = vector.load %arg9[%c0_253, %c0_254, %c0_255] : memref<1x8x256xf32, #tpu.memory_space<vmem>>, vector<1x8x256xf32>
    %273 = vector.shape_cast %272 : vector<1x8x256xf32> to vector<8x256xf32>
    %274 = vector.shape_cast %271 : vector<8x256xf32> to vector<1x8x256xf32>
    tpu.vector_store %arg9[%c0_253, %c0_254, %c0_255], %274 {strides = array<i32>} : memref<1x8x256xf32, #tpu.memory_space<vmem>>, vector<1x8x256xf32>,
    return
  }
  func.func @transform_0(%arg0: i32, %arg1: i32) -> (i32, i32, i32, i32) {
    %c0_i32 = arith.constant 0 : i32
    %c0_i32_0 = arith.constant 0 : i32
    %c0_i32_1 = arith.constant 0 : i32
    return %arg0, %arg1, %c0_i32, %c0_i32_0 : i32, i32, i32, i32
  }
  func.func @transform_1(%arg0: i32, %arg1: i32) -> (i32, i32, i32) {
    %c0_i32 = arith.constant 0 : i32
    %c0_i32_0 = arith.constant 0 : i32
    %c0_i32_1 = arith.constant 0 : i32
    %c0_i32_2 = arith.constant 0 : i32
    return %c0_i32, %c0_i32_0, %c0_i32_1 : i32, i32, i32
  }
  func.func @transform_2(%arg0: i32, %arg1: i32) -> (i32, i32, i32) {
    %c0_i32 = arith.constant 0 : i32
    %c0_i32_0 = arith.constant 0 : i32
    %c0_i32_1 = arith.constant 0 : i32
    %c0_i32_2 = arith.constant 0 : i32
    return %c0_i32, %c0_i32_0, %c0_i32_1 : i32, i32, i32
  }
  func.func @transform_3(%arg0: i32, %arg1: i32) -> (i32, i32) {
    %c0_i32 = arith.constant 0 : i32
    %c0_i32_0 = arith.constant 0 : i32
    %c0_i32_1 = arith.constant 0 : i32
    return %c0_i32, %c0_i32_0 : i32, i32
  }
  func.func @transform_4(%arg0: i32, %arg1: i32) -> (i32, i32) {
    %c0_i32 = arith.constant 0 : i32
    %c0_i32_0 = arith.constant 0 : i32
    %c0_i32_1 = arith.constant 0 : i32
    return %c0_i32, %c0_i32_0 : i32, i32
  }
  func.func @transform_5(%arg0: i32, %arg1: i32) -> (i32, i32) {
    %c0_i32 = arith.constant 0 : i32
    %c0_i32_0 = arith.constant 0 : i32
    %c0_i32_1 = arith.constant 0 : i32
    return %c0_i32, %c0_i32_0 : i32, i32
  }
  func.func @transform_6(%arg0: i32, %arg1: i32) -> (i32, i32) {
    %c0_i32 = arith.constant 0 : i32
    %c0_i32_0 = arith.constant 0 : i32
    %c0_i32_1 = arith.constant 0 : i32
    return %c0_i32, %c0_i32_0 : i32, i32
  }
  func.func @transform_7(%arg0: i32, %arg1: i32) -> (i32, i32, i32) {
    %c0_i32 = arith.constant 0 : i32
    %c0_i32_0 = arith.constant 0 : i32
    return %arg0, %c0_i32, %arg1 : i32, i32, i32
  }
}

</mosaic_0001>

<llo_original>
// kernel: msfa_pallas.1
$region0: #{msfa_pallas.1}
  #allocation0 [shape = 'u32[]', space=smem, size = 0x4, offset = 0x4, fixed_abs, tag = 'smem constant byte address 0x4 - core index']
  #allocation1 [shape = 'u32[144,128]{1,0:T(1,128)}', space=vmem, size = 0x12000, scoped, tag = 'internal scratch']
  %s0 = inlined_call_operand.vmem [shape: bf16[2,2,8,784], index: 0, kind: input, shape index: {}]
  %s1 = inlined_call_operand.vmem [shape: bf16[9,16,8], index: 1, kind: input, shape index: {}]
  %s2 = inlined_call_operand.vmem [shape: bf16[27,8,8], index: 2, kind: input, shape index: {}]
  %s3 = inlined_call_operand.vmem [shape: bf16[4,8], index: 3, kind: input, shape index: {}]
  %s4 = inlined_call_operand.vmem [shape: f32[8,1], index: 4, kind: input, shape index: {}]
  %s5 = inlined_call_operand.vmem [shape: f32[8,4], index: 5, kind: input, shape index: {}]
  %s6 = inlined_call_operand.vmem [shape: f32[4,1], index: 6, kind: input, shape index: {}]
  %s7 = inlined_call_operand.vmem [shape: f32[2,8,512], index: 7, kind: output, shape index: {}]
  %s8 = sld [smem:[#allocation0]]
  $region61: #{msfa_pallas.1} parent=0
    _
  %s10 = ssub.s32 1, %s8
  %s11 = scalar_select 0, %s10, %s8
  loop: start=0, step=1, limit=6
  $region2: #{msfa_pallas.1} parent=0 // loop_pre_header
    _
  $region3: #{msfa_pallas.1} parent=0 // loop_header
    %s13 = sphi 0, %s17
    %p14 = scmp.ge.s32.totalorder %s13, 6
    %s20 = sphi 0, %s32
    %s21 = sphi 0, %s28
    %s22 = sphi 0, %s20
    %s23 = sphi 0, %s21
    %s24 = sphi 0, %s22
    %s25 = sphi 0, %s23
    %s37 = sphi 0, %s39
    %s40 = sphi 0, %s37
    %s41 = sphi 0, %s40
    %s57 = sphi 0, %s41
    %s61 = sphi 0, %s61
    %s63 = sphi 0, %s61
    %s64 = sphi 0, %s63
    %s78 = sphi 0, %s64
    %s82 = sphi 0, %s82
    %s84 = sphi 0, %s82
    %s85 = sphi 0, %s84
    %s99 = sphi 0, %s85
    %s103 = sphi 0, %s103
    %s105 = sphi 0, %s103
    %s106 = sphi 0, %s105
    %s120 = sphi 0, %s106
    %s124 = sphi 0, %s124
    %s126 = sphi 0, %s124
    %s127 = sphi 0, %s126
    %s141 = sphi 0, %s127
    %s145 = sphi 0, %s145
    %s147 = sphi 0, %s145
    %s148 = sphi 0, %s147
    %s162 = sphi 0, %s148
    %s166 = sphi 0, %s166
    %s168 = sphi 0, %s166
    %s169 = sphi 0, %s168
    %s183 = sphi 0, %s169
    %s191 = sphi 0, %s193
    %s194 = sphi 0, %s191
    %s195 = sphi 0, %s194
    %s211 = sphi 0, %s195
  $region4: #{msfa_pallas.1} parent=0 // loop_header_branch
    %16 = sbr.rel (%p14) target = $region8
  $region5: #{msfa_pallas.1} parent=0 // loop_body
    %s18 = ssub.s32 %s13, 1
    %s19 = ssub.s32 %s13, 2
    %s26 = sadd.s32 1, %s21
    %p27 = scmp.ge.s32.totalorder %s26, 2
    %s28 = scalar_select %p27, 0, %s26
    %s29 = sadd.s32 1, %s20
    %s30 = scalar_select %p27, %s29, %s20
    %p31 = scmp.ge.s32.totalorder %s30, 2
    %s32 = scalar_select %p31, 0, %s30
    %s33 = ssub.s32 %s20, %s32
    %s34 = ssub.s32 %s21, %s28
    %s35 = sor.u32 %s33, %s34
    %p36 = scmp.eq.s32.totalorder %s35, 0
    %s38 = sadd.s32 %s37, 1
    %s39 = scalar_select %p36, %s37, %s38
    %p42 = pneg %p36
    %p43 = scmp.eq.s32.totalorder %s13, 3
    %p44 = por %p42, %p43
    %p45 = scmp.ne.s32.totalorder %s37, %s40
    %p46 = scmp.eq.s32.totalorder %s13, 0
    %p47 = por %p45, %p46
    %p48 = scmp.ne.s32.totalorder %s37, %s40
    %p49 = scmp.eq.s32.totalorder %s18, 3
    %p50 = por %p48, %p49
    %p51 = scmp.ne.s32.totalorder %s40, %s41
    %p52 = scmp.eq.s32.totalorder %s18, 0
    %p53 = por %p51, %p52
    %p54 = scmp.ne.s32.totalorder %s40, %s41
    %p55 = scmp.eq.s32.totalorder %s19, 3
    %p56 = por %p54, %p55
    %p58 = scmp.ne.s32.totalorder %s41, %s57
    %p59 = scmp.eq.s32.totalorder %s19, 0
    %p60 = por %p58, %p59
    %s62 = sadd.s32 %s61, 1
    %p65 = scmp.eq.s32.totalorder %s13, 3
    %p66 = scmp.ne.s32.totalorder %s61, %s63
    %p67 = scmp.eq.s32.totalorder %s13, 0
    %p68 = por %p66, %p67
    %p69 = scmp.ne.s32.totalorder %s61, %s63
    %p70 = scmp.eq.s32.totalorder %s18, 3
    %p71 = por %p69, %p70
    %p72 = scmp.ne.s32.totalorder %s63, %s64
    %p73 = scmp.eq.s32.totalorder %s18, 0
    %p74 = por %p72, %p73
    %p75 = scmp.ne.s32.totalorder %s63, %s64
    %p76 = scmp.eq.s32.totalorder %s19, 3
    %p77 = por %p75, %p76
    %p79 = scmp.ne.s32.totalorder %s64, %s78
    %p80 = scmp.eq.s32.totalorder %s19, 0
    %p81 = por %p79, %p80
    %s83 = sadd.s32 %s82, 1
    %p86 = scmp.eq.s32.totalorder %s13, 3
    %p87 = scmp.ne.s32.totalorder %s82, %s84
    %p88 = scmp.eq.s32.totalorder %s13, 0
    %p89 = por %p87, %p88
    %p90 = scmp.ne.s32.totalorder %s82, %s84
    %p91 = scmp.eq.s32.totalorder %s18, 3
    %p92 = por %p90, %p91
    %p93 = scmp.ne.s32.totalorder %s84, %s85
    %p94 = scmp.eq.s32.totalorder %s18, 0
    %p95 = por %p93, %p94
    %p96 = scmp.ne.s32.totalorder %s84, %s85
    %p97 = scmp.eq.s32.totalorder %s19, 3
    %p98 = por %p96, %p97
    %p100 = scmp.ne.s32.totalorder %s85, %s99
    %p101 = scmp.eq.s32.totalorder %s19, 0
    %p102 = por %p100, %p101
    %s104 = sadd.s32 %s103, 1
    %p107 = scmp.eq.s32.totalorder %s13, 3
    %p108 = scmp.ne.s32.totalorder %s103, %s105
    %p109 = scmp.eq.s32.totalorder %s13, 0
    %p110 = por %p108, %p109
    %p111 = scmp.ne.s32.totalorder %s103, %s105
    %p112 = scmp.eq.s32.totalorder %s18, 3
    %p113 = por %p111, %p112
    %p114 = scmp.ne.s32.totalorder %s105, %s106
    %p115 = scmp.eq.s32.totalorder %s18, 0
    %p116 = por %p114, %p115
    %p117 = scmp.ne.s32.totalorder %s105, %s106
    %p118 = scmp.eq.s32.totalorder %s19, 3
    %p119 = por %p117, %p118
    %p121 = scmp.ne.s32.totalorder %s106, %s120
    %p122 = scmp.eq.s32.totalorder %s19, 0
    %p123 = por %p121, %p122
    %s125 = sadd.s32 %s124, 1
    %p128 = scmp.eq.s32.totalorder %s13, 3
    %p129 = scmp.ne.s32.totalorder %s124, %s126
    %p130 = scmp.eq.s32.totalorder %s13, 0
    %p131 = por %p129, %p130
    %p132 = scmp.ne.s32.totalorder %s124, %s126
    %p133 = scmp.eq.s32.totalorder %s18, 3
    %p134 = por %p132, %p133
    %p135 = scmp.ne.s32.totalorder %s126, %s127
    %p136 = scmp.eq.s32.totalorder %s18, 0
    %p137 = por %p135, %p136
    %p138 = scmp.ne.s32.totalorder %s126, %s127
    %p139 = scmp.eq.s32.totalorder %s19, 3
    %p140 = por %p138, %p139
    %p142 = scmp.ne.s32.totalorder %s127, %s141
    %p143 = scmp.eq.s32.totalorder %s19, 0
    %p144 = por %p142, %p143
    %s146 = sadd.s32 %s145, 1
    %p149 = scmp.eq.s32.totalorder %s13, 3
    %p150 = scmp.ne.s32.totalorder %s145, %s147
    %p151 = scmp.eq.s32.totalorder %s13, 0
    %p152 = por %p150, %p151
    %p153 = scmp.ne.s32.totalorder %s145, %s147
    %p154 = scmp.eq.s32.totalorder %s18, 3
    %p155 = por %p153, %p154
    %p156 = scmp.ne.s32.totalorder %s147, %s148
    %p157 = scmp.eq.s32.totalorder %s18, 0
    %p158 = por %p156, %p157
    %p159 = scmp.ne.s32.totalorder %s147, %s148
    %p160 = scmp.eq.s32.totalorder %s19, 3
    %p161 = por %p159, %p160
    %p163 = scmp.ne.s32.totalorder %s148, %s162
    %p164 = scmp.eq.s32.totalorder %s19, 0
    %p165 = por %p163, %p164
    %s167 = sadd.s32 %s166, 1
    %p170 = scmp.eq.s32.totalorder %s13, 3
    %p171 = scmp.ne.s32.totalorder %s166, %s168
    %p172 = scmp.eq.s32.totalorder %s13, 0
    %p173 = por %p171, %p172
    %p174 = scmp.ne.s32.totalorder %s166, %s168
    %p175 = scmp.eq.s32.totalorder %s18, 3
    %p176 = por %p174, %p175
    %p177 = scmp.ne.s32.totalorder %s168, %s169
    %p178 = scmp.eq.s32.totalorder %s18, 0
    %p179 = por %p177, %p178
    %p180 = scmp.ne.s32.totalorder %s168, %s169
    %p181 = scmp.eq.s32.totalorder %s19, 3
    %p182 = por %p180, %p181
    %p184 = scmp.ne.s32.totalorder %s169, %s183
    %p185 = scmp.eq.s32.totalorder %s19, 0
    %p186 = por %p184, %p185
    %s187 = ssub.s32 %s20, %s32
    %s188 = ssub.s32 %s21, %s28
    %s189 = sor.u32 %s187, %s188
    %p190 = scmp.eq.s32.totalorder %s189, 0
    %s192 = sadd.s32 %s191, 1
    %s193 = scalar_select %p190, %s191, %s192
    %p196 = pneg %p190
    %p197 = scmp.eq.s32.totalorder %s13, 3
    %p198 = por %p196, %p197
    %p199 = scmp.ne.s32.totalorder %s191, %s194
    %p200 = scmp.eq.s32.totalorder %s13, 0
    %p201 = por %p199, %p200
    %p202 = scmp.ne.s32.totalorder %s191, %s194
    %p203 = scmp.eq.s32.totalorder %s18, 3
    %p204 = por %p202, %p203
    %p205 = scmp.ne.s32.totalorder %s194, %s195
    %p206 = scmp.eq.s32.totalorder %s18, 0
    %p207 = por %p205, %p206
    %p208 = scmp.ne.s32.totalorder %s194, %s195
    %p209 = scmp.eq.s32.totalorder %s19, 3
    %p210 = por %p208, %p209
    %p212 = scmp.ne.s32.totalorder %s195, %s211
    %p213 = scmp.eq.s32.totalorder %s19, 0
    %p214 = por %p212, %p213
    %p215 = scmp.le.s32.totalorder 1, %s13
    %p216 = scmp.lt.s32.totalorder %s13, 5
    %p217 = pnand %p215, %p216
    %p218 = pneg %p217
    // Predicated region
    $region9: #{msfa_pallas.1} parent=5 // pred_check
      _
    $region10: #{msfa_pallas.1} parent=5 // pred_check_branch
      %220 = sbr.rel (%p217) target = $region12
    $region11: #{msfa_pallas.1} parent=5 // pred_region
      %s221 = ssub.s32 %s13, 1
      // Predicated region
      $region13: #{msfa_pallas.1} parent=11 // pred_check
        %p222 = pneg %p74
      $region14: #{msfa_pallas.1} parent=11 // pred_check_branch
        %224 = sbr.rel (%p222) target = $region16
      $region15: #{msfa_pallas.1} parent=11 // pred_region
        _
      $region16: #{msfa_pallas.1} parent=11 // pred_fallthru
        _
      // Predicated region
      $region17: #{msfa_pallas.1} parent=11 // pred_check
        %p225 = pneg %p95
      $region18: #{msfa_pallas.1} parent=11 // pred_check_branch
        %227 = sbr.rel (%p225) target = $region20
      $region19: #{msfa_pallas.1} parent=11 // pred_region
        _
      $region20: #{msfa_pallas.1} parent=11 // pred_fallthru
        _
      // Predicated region
      $region21: #{msfa_pallas.1} parent=11 // pred_check
        %p228 = pneg %p116
      $region22: #{msfa_pallas.1} parent=11 // pred_check_branch
        %230 = sbr.rel (%p228) target = $region24
      $region23: #{msfa_pallas.1} parent=11 // pred_region
        _
      $region24: #{msfa_pallas.1} parent=11 // pred_fallthru
        _
      // Predicated region
      $region25: #{msfa_pallas.1} parent=11 // pred_check
        %p231 = pneg %p137
      $region26: #{msfa_pallas.1} parent=11 // pred_check_branch
        %233 = sbr.rel (%p231) target = $region28
      $region27: #{msfa_pallas.1} parent=11 // pred_region
        _
      $region28: #{msfa_pallas.1} parent=11 // pred_fallthru
        _
      // Predicated region
      $region29: #{msfa_pallas.1} parent=11 // pred_check
        %p234 = pneg %p158
      $region30: #{msfa_pallas.1} parent=11 // pred_check_branch
        %236 = sbr.rel (%p234) target = $region32
      $region31: #{msfa_pallas.1} parent=11 // pred_region
        _
      $region32: #{msfa_pallas.1} parent=11 // pred_fallthru
        _
      // Predicated region
      $region33: #{msfa_pallas.1} parent=11 // pred_check
        %p237 = pneg %p179
      $region34: #{msfa_pallas.1} parent=11 // pred_check_branch
        %239 = sbr.rel (%p237) target = $region36
      $region35: #{msfa_pallas.1} parent=11 // pred_region
        _
      $region36: #{msfa_pallas.1} parent=11 // pred_fallthru
        _
    $region12: #{msfa_pallas.1} parent=5 // pred_fallthru
      _
    %p240 = scmp.lt.s32.totalorder %s13, 4
    // Predicated region
    $region37: #{msfa_pallas.1} parent=5 // pred_check
      %p241 = pneg %p240
    $region38: #{msfa_pallas.1} parent=5 // pred_check_branch
      %243 = sbr.rel (%p241) target = $region40
    $region39: #{msfa_pallas.1} parent=5 // pred_region
      // Predicated region
      $region41: #{msfa_pallas.1} parent=39 // pred_check
        %p244 = pneg %p47
      $region42: #{msfa_pallas.1} parent=39 // pred_check_branch
        %246 = sbr.rel (%p244) target = $region44
      $region43: #{msfa_pallas.1} parent=39 // pred_region
        %p247 = scmp.lt.s32.totalorder %s20, 1
        %s248 = scalar_select %p247, %s20, 1
        %p249 = scmp.lt.s32.totalorder %s21, 1
        %s250 = scalar_select %p249, %s21, 1
        %s251 = smul.addr %s250, 7
        %s252 = smul.addr %s248, 14
        %s253 = sadd.s32 %s251, %s252
        %s254 = smul.addr %s253, 4
        %s255 = scalar_lea.vmem %s0, %s254
      $region44: #{msfa_pallas.1} parent=39 // pred_fallthru
        _
    $region40: #{msfa_pallas.1} parent=5 // pred_fallthru
      _
    %p256 = scmp.le.s32.totalorder 1, %s13
    %p257 = scmp.lt.s32.totalorder %s13, 5
    %p258 = pnand %p256, %p257
    %p259 = pneg %p258
    // Predicated region
    $region45: #{msfa_pallas.1} parent=5 // pred_check
      _
    $region46: #{msfa_pallas.1} parent=5 // pred_check_branch
      %261 = sbr.rel (%p258) target = $region48
    $region47: #{msfa_pallas.1} parent=5 // pred_region
      %s262 = ssub.s32 %s13, 1
      %p263 = scmp.lt.s32.totalorder %s22, 1
      %s264 = scalar_select %p263, %s22, 1
      %p265 = scmp.lt.s32.totalorder %s23, 1
      %s266 = scalar_select %p265, %s23, 1
      %s267 = smul.addr %s266, 7
      %s268 = smul.addr %s264, 14
      %s269 = sadd.s32 %s267, %s268
      %s270 = smul.addr %s269, 4
      %s271 = scalar_lea.vmem %s0, %s270
      %p272 = pneg %p53
      %p273 = pneg %p50
      %p274 = pneg %p74
      %p275 = pneg %p71
      %p276 = pneg %p95
      %p277 = pneg %p92
      %p278 = pneg %p116
      %p279 = pneg %p113
      %p280 = pneg %p137
      %p281 = pneg %p134
      %p282 = pneg %p158
      %p283 = pneg %p155
      %p284 = pneg %p179
      %p285 = pneg %p176
      %p286 = pneg %p207
      %p287 = pneg %p204
      %s288 = smul.u32 2, %s23
      %p289 = scmp.lt.s32.totalorder %s22, 1
      %s290 = scalar_select %p289, %s22, 1
      %p291 = scmp.lt.s32.totalorder %s288, 3
      %s292 = scalar_select %p291, %s288, 3
      %s293 = smul.addr %s290, 4
      %s294 = sadd.s32 %s292, %s293
      %s295 = smul.addr %s294, 8
      %s296 = scalar_lea.vmem %s7, %s295
      %p297 = scmp.lt.s32.totalorder %s22, 1
      %s298 = scalar_select %p297, %s22, 1
      %p299 = scmp.lt.s32.totalorder %s23, 1
      %s300 = scalar_select %p299, %s23, 1
      %s301 = smul.addr %s300, 7
      %s302 = smul.addr %s298, 14
      %s303 = sadd.s32 %s301, %s302
      %s304 = smul.addr %s303, 4
      %s305 = scalar_lea.vmem %s0, %s304
      %s306 = smul.u32 2, %s23
      %p307 = scmp.lt.s32.totalorder %s22, 1
      %s308 = scalar_select %p307, %s22, 1
      %p309 = scmp.lt.s32.totalorder %s306, 3
      %s310 = scalar_select %p309, %s306, 3
      %s311 = smul.addr %s308, 4
      %s312 = sadd.s32 %s310, %s311
      %s313 = smul.addr %s312, 8
      %s314 = scalar_lea.vmem %s7, %s313
      %s315 = smul.u32 2, %s23
      %v317 = vld [vmem:[%s1] sm:$0xf]
      %v318 = vld [vmem:[%s1 + $0x4] sm:$0xf]
      %v319 = vld [vmem:[%s305 + $0x4] sm:$0xff]
      %v320 = vld [vmem:[%s305 + $0xc] sm:$0xf]
      %s321 = scalar_lea.vmem %s1, 8
      %v322 = vld [vmem:[%s321] sm:$0xf]
      %v323 = vld [vmem:[%s321 + $0x4] sm:$0xf]
      %v326 = vunpack.c.l.b16 %v322
      %v327 = vunpack.c.l.b16 %v323
      %v328 = vpack.c.b16 %v327, %v326
      %v331 = vunpack.c.l.b16 %v319
      %v332 = vunpack.c.h.b16 %v319
      %v333 = vunpack.c.l.b16 %v320
      %v334 = vpack.c.b16 %v331, %v331
      %v335 = vpack.c.b16 %v332, %v332
      %v336 = vpack.c.b16 %v333, %v333
      %337 = vrot.lane.b32.xlu0 %v334, 24
      %v338 = vpop.permute.xlu0 %337
      %339 = vrot.lane.b32.xlu0 %v335, 24
      %v340 = vpop.permute.xlu0 %339
      %341 = vrot.lane.b32.xlu0 %v336, 24
      %v342 = vpop.permute.xlu0 %341
      %vm343 = vcmask 195584
      %v344 = vsel %vm343, %v338, %v340
      %v345 = vsel %vm343, %v340, %v342
      %vm346 = vcmask 64512
      %v348 = vsel %vm346, %v328, 0
      %vm350 = vcmask 1043456
      %v352 = vsel %vm350, %v344, 0
      %v355 = vsel %vm350, %v345, 0
      %357 = vmatprep.subr.bf16.mxu0 %v355
      %358 = vmatpush1.bf16.msra.mxu0 %v352
      %359 = vmatprep.subr.bf16.mxu0 0
      %360 = vmatpush1.bf16.msra.mxu0 0
      %361 = vmatprep.subr.bf16.mxu0 0
      %362 = vmatpush1.bf16.msra.mxu0 0
      %363 = vmatprep.subr.bf16.mxu0 0
      %364 = vmatpush1.bf16.msra.mxu0 0
      %365 = vmatprep.subr.bf16.mxu0 0
      %366 = vmatpush1.bf16.msra.mxu0 0
      %367 = vmatprep.subr.bf16.mxu0 0
      %368 = vmatpush1.bf16.msra.mxu0 0
      %369 = vmatprep.subr.bf16.mxu0 0
      %370 = vmatpush1.bf16.msra.mxu0 0
      %371 = vmatprep.subr.bf16.mxu0 0
      %372 = vmatpush1.bf16.msra.mxu0 0
      %373 = vmatprep.subr.bf16.mxu0 0
      %374 = vmatpush1.bf16.msra.mxu0 0
      %375 = vmatprep.subr.bf16.mxu0 0
      %376 = vmatpush1.bf16.msra.mxu0 0
      %377 = vmatprep.subr.bf16.mxu0 0
      %378 = vmatpush1.bf16.msra.mxu0 0
      %379 = vmatprep.subr.bf16.mxu0 0
      %380 = vmatpush1.bf16.msra.mxu0 0
      %381 = vmatprep.subr.bf16.mxu0 0
      %382 = vmatpush1.bf16.msra.mxu0 0
      %383 = vmatprep.subr.bf16.mxu0 0
      %384 = vmatpush1.bf16.msra.mxu0 0
      %385 = vmatprep.subr.bf16.mxu0 0
      %386 = vmatpush1.bf16.msra.mxu0 0
      %387 = vmatprep.subr.bf16.mxu0 0
      %388 = vmatpush1.bf16.msra.mxu0 0
      %389 = vmatprep.mubr.bf16.mxu0 0
      %390 = vmatmul.mubr.bf16.gmra.mrb[0].mxu0 %v348
      %v391 = vpop.f32.mrb[0].mxu0
      %v392 = vadd.f32 0.0, %v391
      %v393 = vpop.f32.mrb[0].mxu0
      %v394 = vadd.f32 0.0, %v393
      %v395 = vpop.f32.mrb[0].mxu0
      %v396 = vadd.f32 0.0, %v395
      %v397 = vpop.f32.mrb[0].mxu0
      %v398 = vadd.f32 0.0, %v397
      %399 = vdwg.mxu0
      %v402 = vunpack.c.l.b16 %v317
      %v403 = vunpack.c.l.b16 %v318
      %v404 = vpack.c.b16 %v403, %v402
      %405 = vrot.lane.b32.xlu0 %v334, 25
      %v406 = vpop.permute.xlu0 %405
      %407 = vrot.lane.b32.xlu0 %v335, 25
      %v408 = vpop.permute.xlu0 %407
      %409 = vrot.lane.b32.xlu0 %v336, 25
      %v410 = vpop.permute.xlu0 %409
      %vm411 = vcmask 203776
      %v412 = vsel %vm411, %v406, %v408
      %v413 = vsel %vm411, %v408, %v410
      %v415 = vsel %vm346, %v404, 0
      %v418 = vsel %vm350, %v412, 0
      %v421 = vsel %vm350, %v413, 0
      %423 = vmatprep.subr.bf16.mxu0 %v421
      %424 = vmatpush1.bf16.msra.mxu0 %v418
      %425 = vmatprep.subr.bf16.mxu0 0
      %426 = vmatpush1.bf16.msra.mxu0 0
      %427 = vmatprep.subr.bf16.mxu0 0
      %428 = vmatpush1.bf16.msra.mxu0 0
      %429 = vmatprep.subr.bf16.mxu0 0
      %430 = vmatpush1.bf16.msra.mxu0 0
      %431 = vmatprep.subr.bf16.mxu0 0
      %432 = vmatpush1.bf16.msra.mxu0 0
      %433 = vmatprep.subr.bf16.mxu0 0
      %434 = vmatpush1.bf16.msra.mxu0 0
      %435 = vmatprep.subr.bf16.mxu0 0
      %436 = vmatpush1.bf16.msra.mxu0 0
      %437 = vmatprep.subr.bf16.mxu0 0
      %438 = vmatpush1.bf16.msra.mxu0 0
      %439 = vmatprep.subr.bf16.mxu0 0
      %440 = vmatpush1.bf16.msra.mxu0 0
      %441 = vmatprep.subr.bf16.mxu0 0
      %442 = vmatpush1.bf16.msra.mxu0 0
      %443 = vmatprep.subr.bf16.mxu0 0
      %444 = vmatpush1.bf16.msra.mxu0 0
      %445 = vmatprep.subr.bf16.mxu0 0
      %446 = vmatpush1.bf16.msra.mxu0 0
      %447 = vmatprep.subr.bf16.mxu0 0
      %448 = vmatpush1.bf16.msra.mxu0 0
      %449 = vmatprep.subr.bf16.mxu0 0
      %450 = vmatpush1.bf16.msra.mxu0 0
      %451 = vmatprep.subr.bf16.mxu0 0
      %452 = vmatpush1.bf16.msra.mxu0 0
      %453 = vmatprep.subr.bf16.mxu0 0
      %454 = vmatpush1.bf16.msra.mxu0 0
      %455 = vmatprep.mubr.bf16.mxu0 0
      %456 = vmatmul.mubr.bf16.gmra.mrb[0].mxu0 %v415
      %v457 = vpop.f32.mrb[0].mxu0
      %v458 = vadd.f32 %v392, %v457
      %v459 = vpop.f32.mrb[0].mxu0
      %v460 = vadd.f32 %v394, %v459
      %v461 = vpop.f32.mrb[0].mxu0
      %v462 = vadd.f32 %v396, %v461
      %v463 = vpop.f32.mrb[0].mxu0
      %v464 = vadd.f32 %v398, %v463
      %465 = vdwg.mxu0
      %s466 = scalar_lea.vmem %s1, 16
      %v467 = vld [vmem:[%s466] sm:$0xf]
      %v468 = vld [vmem:[%s466 + $0x4] sm:$0xf]
      %v471 = vunpack.c.l.b16 %v467
      %v472 = vunpack.c.l.b16 %v468
      %v473 = vpack.c.b16 %v472, %v471
      %474 = vrot.lane.b32.xlu0 %v334, 23
      %v475 = vpop.permute.xlu0 %474
      %476 = vrot.lane.b32.xlu0 %v335, 23
      %v477 = vpop.permute.xlu0 %476
      %478 = vrot.lane.b32.xlu0 %v336, 23
      %v479 = vpop.permute.xlu0 %478
      %vm480 = vcmask 187392
      %v481 = vsel %vm480, %v475, %v477
      %v482 = vsel %vm480, %v477, %v479
      %v484 = vsel %vm346, %v473, 0
      %v487 = vsel %vm350, %v481, 0
      %v490 = vsel %vm350, %v482, 0
      %492 = vmatprep.subr.bf16.mxu0 %v490
      %493 = vmatpush1.bf16.msra.mxu0 %v487
      %494 = vmatprep.subr.bf16.mxu0 0
      %495 = vmatpush1.bf16.msra.mxu0 0
      %496 = vmatprep.subr.bf16.mxu0 0
      %497 = vmatpush1.bf16.msra.mxu0 0
      %498 = vmatprep.subr.bf16.mxu0 0
      %499 = vmatpush1.bf16.msra.mxu0 0
      %500 = vmatprep.subr.bf16.mxu0 0
      %501 = vmatpush1.bf16.msra.mxu0 0
      %502 = vmatprep.subr.bf16.mxu0 0
      %503 = vmatpush1.bf16.msra.mxu0 0
      %504 = vmatprep.subr.bf16.mxu0 0
      %505 = vmatpush1.bf16.msra.mxu0 0
      %506 = vmatprep.subr.bf16.mxu0 0
      %507 = vmatpush1.bf16.msra.mxu0 0
      %508 = vmatprep.subr.bf16.mxu0 0
      %509 = vmatpush1.bf16.msra.mxu0 0
      %510 = vmatprep.subr.bf16.mxu0 0
      %511 = vmatpush1.bf16.msra.mxu0 0
      %512 = vmatprep.subr.bf16.mxu0 0
      %513 = vmatpush1.bf16.msra.mxu0 0
      %514 = vmatprep.subr.bf16.mxu0 0
      %515 = vmatpush1.bf16.msra.mxu0 0
      %516 = vmatprep.subr.bf16.mxu0 0
      %517 = vmatpush1.bf16.msra.mxu0 0
      %518 = vmatprep.subr.bf16.mxu0 0
      %519 = vmatpush1.bf16.msra.mxu0 0
      %520 = vmatprep.subr.bf16.mxu0 0
      %521 = vmatpush1.bf16.msra.mxu0 0
      %522 = vmatprep.subr.bf16.mxu0 0
      %523 = vmatpush1.bf16.msra.mxu0 0
      %524 = vmatprep.mubr.bf16.mxu0 0
      %525 = vmatmul.mubr.bf16.gmra.mrb[0].mxu0 %v484
      %v526 = vpop.f32.mrb[0].mxu0
      %v527 = vadd.f32 0.0, %v526
      %v528 = vpop.f32.mrb[0].mxu0
      %v529 = vadd.f32 0.0, %v528
      %v530 = vpop.f32.mrb[0].mxu0
      %v531 = vadd.f32 0.0, %v530
      %v532 = vpop.f32.mrb[0].mxu0
      %v533 = vadd.f32 0.0, %v532
      %534 = vdwg.mxu0
      %v535 = vadd.f32 %v458, %v527
      %v536 = vadd.f32 %v460, %v529
      %v537 = vadd.f32 %v462, %v531
      %v538 = vadd.f32 %v464, %v533
      %s539 = scalar_lea.vmem %s1, 24
      %v540 = vld [vmem:[%s539] sm:$0xf]
      %v541 = vld [vmem:[%s539 + $0x4] sm:$0xf]
      %v542 = vld [vmem:[%s305 + $0x8] sm:$0xff]
      %v543 = vld [vmem:[%s305 + $0x10] sm:$0xf]
      %v546 = vunpack.c.l.b16 %v540
      %v547 = vunpack.c.l.b16 %v541
      %v548 = vpack.c.b16 %v547, %v546
      %v551 = vunpack.c.l.b16 %v542
      %v552 = vunpack.c.h.b16 %v542
      %v553 = vunpack.c.l.b16 %v543
      %v554 = vpack.c.b16 %v551, %v551
      %v555 = vpack.c.b16 %v552, %v552
      %v556 = vpack.c.b16 %v553, %v553
      %557 = vrot.lane.b32.xlu0 %v554, 121
      %v558 = vpop.permute.xlu0 %557
      %559 = vrot.lane.b32.xlu0 %v555, 121
      %v560 = vpop.permute.xlu0 %559
      %561 = vrot.lane.b32.xlu0 %v556, 121
      %v562 = vpop.permute.xlu0 %561
      %vm563 = vcmask 990208
      %v564 = vsel %vm563, %v558, %v560
      %v565 = vsel %vm563, %v560, %v562
      %v567 = vsel %vm346, %v548, 0
      %v570 = vsel %vm350, %v564, 0
      %v573 = vsel %vm350, %v565, 0
      %575 = vmatprep.subr.bf16.mxu0 %v573
      %576 = vmatpush1.bf16.msra.mxu0 %v570
      %577 = vmatprep.subr.bf16.mxu0 0
      %578 = vmatpush1.bf16.msra.mxu0 0
      %579 = vmatprep.subr.bf16.mxu0 0
      %580 = vmatpush1.bf16.msra.mxu0 0
      %581 = vmatprep.subr.bf16.mxu0 0
      %582 = vmatpush1.bf16.msra.mxu0 0
      %583 = vmatprep.subr.bf16.mxu0 0
      %584 = vmatpush1.bf16.msra.mxu0 0
      %585 = vmatprep.subr.bf16.mxu0 0
      %586 = vmatpush1.bf16.msra.mxu0 0
      %587 = vmatprep.subr.bf16.mxu0 0
      %588 = vmatpush1.bf16.msra.mxu0 0
      %589 = vmatprep.subr.bf16.mxu0 0
      %590 = vmatpush1.bf16.msra.mxu0 0
      %591 = vmatprep.subr.bf16.mxu0 0
      %592 = vmatpush1.bf16.msra.mxu0 0
      %593 = vmatprep.subr.bf16.mxu0 0
      %594 = vmatpush1.bf16.msra.mxu0 0
      %595 = vmatprep.subr.bf16.mxu0 0
      %596 = vmatpush1.bf16.msra.mxu0 0
      %597 = vmatprep.subr.bf16.mxu0 0
      %598 = vmatpush1.bf16.msra.mxu0 0
      %599 = vmatprep.subr.bf16.mxu0 0
      %600 = vmatpush1.bf16.msra.mxu0 0
      %601 = vmatprep.subr.bf16.mxu0 0
      %602 = vmatpush1.bf16.msra.mxu0 0
      %603 = vmatprep.subr.bf16.mxu0 0
      %604 = vmatpush1.bf16.msra.mxu0 0
      %605 = vmatprep.subr.bf16.mxu0 0
      %606 = vmatpush1.bf16.msra.mxu0 0
      %607 = vmatprep.mubr.bf16.mxu0 0
      %608 = vmatmul.mubr.bf16.gmra.mrb[0].mxu0 %v567
      %v609 = vpop.f32.mrb[0].mxu0
      %v610 = vadd.f32 0.0, %v609
      %v611 = vpop.f32.mrb[0].mxu0
      %v612 = vadd.f32 0.0, %v611
      %v613 = vpop.f32.mrb[0].mxu0
      %v614 = vadd.f32 0.0, %v613
      %v615 = vpop.f32.mrb[0].mxu0
      %v616 = vadd.f32 0.0, %v615
      %617 = vdwg.mxu0
      %v618 = vadd.f32 %v535, %v610
      %v619 = vadd.f32 %v536, %v612
      %v620 = vadd.f32 %v537, %v614
      %v621 = vadd.f32 %v538, %v616
      %s622 = scalar_lea.vmem %s1, 32
      %v623 = vld [vmem:[%s622] sm:$0xf]
      %v624 = vld [vmem:[%s622 + $0x4] sm:$0xf]
      %v627 = vunpack.c.l.b16 %v623
      %v628 = vunpack.c.l.b16 %v624
      %v629 = vpack.c.b16 %v628, %v627
      %630 = vrot.lane.b32.xlu0 %v554, 120
      %v631 = vpop.permute.xlu0 %630
      %632 = vrot.lane.b32.xlu0 %v555, 120
      %v633 = vpop.permute.xlu0 %632
      %634 = vrot.lane.b32.xlu0 %v556, 120
      %v635 = vpop.permute.xlu0 %634
      %vm636 = vcmask 982016
      %v637 = vsel %vm636, %v631, %v633
      %v638 = vsel %vm636, %v633, %v635
      %v640 = vsel %vm346, %v629, 0
      %v643 = vsel %vm350, %v637, 0
      %v646 = vsel %vm350, %v638, 0
      %648 = vmatprep.subr.bf16.mxu0 %v646
      %649 = vmatpush1.bf16.msra.mxu0 %v643
      %650 = vmatprep.subr.bf16.mxu0 0
      %651 = vmatpush1.bf16.msra.mxu0 0
      %652 = vmatprep.subr.bf16.mxu0 0
      %653 = vmatpush1.bf16.msra.mxu0 0
      %654 = vmatprep.subr.bf16.mxu0 0
      %655 = vmatpush1.bf16.msra.mxu0 0
      %656 = vmatprep.subr.bf16.mxu0 0
      %657 = vmatpush1.bf16.msra.mxu0 0
      %658 = vmatprep.subr.bf16.mxu0 0
      %659 = vmatpush1.bf16.msra.mxu0 0
      %660 = vmatprep.subr.bf16.mxu0 0
      %661 = vmatpush1.bf16.msra.mxu0 0
      %662 = vmatprep.subr.bf16.mxu0 0
      %663 = vmatpush1.bf16.msra.mxu0 0
      %664 = vmatprep.subr.bf16.mxu0 0
      %665 = vmatpush1.bf16.msra.mxu0 0
      %666 = vmatprep.subr.bf16.mxu0 0
      %667 = vmatpush1.bf16.msra.mxu0 0
      %668 = vmatprep.subr.bf16.mxu0 0
      %669 = vmatpush1.bf16.msra.mxu0 0
      %670 = vmatprep.subr.bf16.mxu0 0
      %671 = vmatpush1.bf16.msra.mxu0 0
      %672 = vmatprep.subr.bf16.mxu0 0
      %673 = vmatpush1.bf16.msra.mxu0 0
      %674 = vmatprep.subr.bf16.mxu0 0
      %675 = vmatpush1.bf16.msra.mxu0 0
      %676 = vmatprep.subr.bf16.mxu0 0
      %677 = vmatpush1.bf16.msra.mxu0 0
      %678 = vmatprep.subr.bf16.mxu0 0
      %679 = vmatpush1.bf16.msra.mxu0 0
      %680 = vmatprep.mubr.bf16.mxu0 0
      %681 = vmatmul.mubr.bf16.gmra.mrb[0].mxu0 %v640
      %v682 = vpop.f32.mrb[0].mxu0
      %v683 = vadd.f32 0.0, %v682
      %v684 = vpop.f32.mrb[0].mxu0
      %v685 = vadd.f32 0.0, %v684
      %v686 = vpop.f32.mrb[0].mxu0
      %v687 = vadd.f32 0.0, %v686
      %v688 = vpop.f32.mrb[0].mxu0
      %v689 = vadd.f32 0.0, %v688
      %690 = vdwg.mxu0
      %v691 = vadd.f32 %v618, %v683
      %v692 = vadd.f32 %v619, %v685
      %v693 = vadd.f32 %v620, %v687
      %v694 = vadd.f32 %v621, %v689
      %s695 = scalar_lea.vmem %s1, 40
      %v696 = vld [vmem:[%s695] sm:$0xf]
      %v697 = vld [vmem:[%s695 + $0x4] sm:$0xf]
      %v700 = vunpack.c.l.b16 %v696
      %v701 = vunpack.c.l.b16 %v697
      %v702 = vpack.c.b16 %v701, %v700
      %703 = vrot.lane.b32.xlu0 %v554, 119
      %v704 = vpop.permute.xlu0 %703
      %705 = vrot.lane.b32.xlu0 %v555, 119
      %v706 = vpop.permute.xlu0 %705
      %707 = vrot.lane.b32.xlu0 %v556, 119
      %v708 = vpop.permute.xlu0 %707
      %vm709 = vcmask 973824
      %v710 = vsel %vm709, %v704, %v706
      %v711 = vsel %vm709, %v706, %v708
      %v713 = vsel %vm346, %v702, 0
      %v716 = vsel %vm350, %v710, 0
      %v719 = vsel %vm350, %v711, 0
      %721 = vmatprep.subr.bf16.mxu0 %v719
      %722 = vmatpush1.bf16.msra.mxu0 %v716
      %723 = vmatprep.subr.bf16.mxu0 0
      %724 = vmatpush1.bf16.msra.mxu0 0
      %725 = vmatprep.subr.bf16.mxu0 0
      %726 = vmatpush1.bf16.msra.mxu0 0
      %727 = vmatprep.subr.bf16.mxu0 0
      %728 = vmatpush1.bf16.msra.mxu0 0
      %729 = vmatprep.subr.bf16.mxu0 0
      %730 = vmatpush1.bf16.msra.mxu0 0
      %731 = vmatprep.subr.bf16.mxu0 0
      %732 = vmatpush1.bf16.msra.mxu0 0
      %733 = vmatprep.subr.bf16.mxu0 0
      %734 = vmatpush1.bf16.msra.mxu0 0
      %735 = vmatprep.subr.bf16.mxu0 0
      %736 = vmatpush1.bf16.msra.mxu0 0
      %737 = vmatprep.subr.bf16.mxu0 0
      %738 = vmatpush1.bf16.msra.mxu0 0
      %739 = vmatprep.subr.bf16.mxu0 0
      %740 = vmatpush1.bf16.msra.mxu0 0
      %741 = vmatprep.subr.bf16.mxu0 0
      %742 = vmatpush1.bf16.msra.mxu0 0
      %743 = vmatprep.subr.bf16.mxu0 0
      %744 = vmatpush1.bf16.msra.mxu0 0
      %745 = vmatprep.subr.bf16.mxu0 0
      %746 = vmatpush1.bf16.msra.mxu0 0
      %747 = vmatprep.subr.bf16.mxu0 0
      %748 = vmatpush1.bf16.msra.mxu0 0
      %749 = vmatprep.subr.bf16.mxu0 0
      %750 = vmatpush1.bf16.msra.mxu0 0
      %751 = vmatprep.subr.bf16.mxu0 0
      %752 = vmatpush1.bf16.msra.mxu0 0
      %753 = vmatprep.mubr.bf16.mxu0 0
      %754 = vmatmul.mubr.bf16.gmra.mrb[0].mxu0 %v713
      %v755 = vpop.f32.mrb[0].mxu0
      %v756 = vadd.f32 0.0, %v755
      %v757 = vpop.f32.mrb[0].mxu0
      %v758 = vadd.f32 0.0, %v757
      %v759 = vpop.f32.mrb[0].mxu0
      %v760 = vadd.f32 0.0, %v759
      %v761 = vpop.f32.mrb[0].mxu0
      %v762 = vadd.f32 0.0, %v761
      %763 = vdwg.mxu0
      %v764 = vadd.f32 %v691, %v756
      %v765 = vadd.f32 %v692, %v758
      %v766 = vadd.f32 %v693, %v760
      %v767 = vadd.f32 %v694, %v762
      %s768 = scalar_lea.vmem %s1, 48
      %v769 = vld [vmem:[%s768] sm:$0xf]
      %v770 = vld [vmem:[%s768 + $0x4] sm:$0xf]
      %v773 = vunpack.c.l.b16 %v769
      %v774 = vunpack.c.l.b16 %v770
      %v775 = vpack.c.b16 %v774, %v773
      %776 = vrot.lane.b32.xlu0 %v554, 89
      %v777 = vpop.permute.xlu0 %776
      %778 = vrot.lane.b32.xlu0 %v555, 89
      %v779 = vpop.permute.xlu0 %778
      %780 = vrot.lane.b32.xlu0 %v556, 89
      %v781 = vpop.permute.xlu0 %780
      %vm782 = vcmask 728064
      %v783 = vsel %vm782, %v777, %v779
      %v784 = vsel %vm782, %v779, %v781
      %v786 = vsel %vm346, %v775, 0
      %v789 = vsel %vm350, %v783, 0
      %v792 = vsel %vm350, %v784, 0
      %794 = vmatprep.subr.bf16.mxu0 %v792
      %795 = vmatpush1.bf16.msra.mxu0 %v789
      %796 = vmatprep.subr.bf16.mxu0 0
      %797 = vmatpush1.bf16.msra.mxu0 0
      %798 = vmatprep.subr.bf16.mxu0 0
      %799 = vmatpush1.bf16.msra.mxu0 0
      %800 = vmatprep.subr.bf16.mxu0 0
      %801 = vmatpush1.bf16.msra.mxu0 0
      %802 = vmatprep.subr.bf16.mxu0 0
      %803 = vmatpush1.bf16.msra.mxu0 0
      %804 = vmatprep.subr.bf16.mxu0 0
      %805 = vmatpush1.bf16.msra.mxu0 0
      %806 = vmatprep.subr.bf16.mxu0 0
      %807 = vmatpush1.bf16.msra.mxu0 0
      %808 = vmatprep.subr.bf16.mxu0 0
      %809 = vmatpush1.bf16.msra.mxu0 0
      %810 = vmatprep.subr.bf16.mxu0 0
      %811 = vmatpush1.bf16.msra.mxu0 0
      %812 = vmatprep.subr.bf16.mxu0 0
      %813 = vmatpush1.bf16.msra.mxu0 0
      %814 = vmatprep.subr.bf16.mxu0 0
      %815 = vmatpush1.bf16.msra.mxu0 0
      %816 = vmatprep.subr.bf16.mxu0 0
      %817 = vmatpush1.bf16.msra.mxu0 0
      %818 = vmatprep.subr.bf16.mxu0 0
      %819 = vmatpush1.bf16.msra.mxu0 0
      %820 = vmatprep.subr.bf16.mxu0 0
      %821 = vmatpush1.bf16.msra.mxu0 0
      %822 = vmatprep.subr.bf16.mxu0 0
      %823 = vmatpush1.bf16.msra.mxu0 0
      %824 = vmatprep.subr.bf16.mxu0 0
      %825 = vmatpush1.bf16.msra.mxu0 0
      %826 = vmatprep.mubr.bf16.mxu0 0
      %827 = vmatmul.mubr.bf16.gmra.mrb[0].mxu0 %v786
      %v828 = vpop.f32.mrb[0].mxu0
      %v829 = vadd.f32 0.0, %v828
      %v830 = vpop.f32.mrb[0].mxu0
      %v831 = vadd.f32 0.0, %v830
      %v832 = vpop.f32.mrb[0].mxu0
      %v833 = vadd.f32 0.0, %v832
      %v834 = vpop.f32.mrb[0].mxu0
      %v835 = vadd.f32 0.0, %v834
      %836 = vdwg.mxu0
      %v837 = vadd.f32 %v764, %v829
      %v838 = vadd.f32 %v765, %v831
      %v839 = vadd.f32 %v766, %v833
      %v840 = vadd.f32 %v767, %v835
      %s841 = scalar_lea.vmem %s1, 56
      %v842 = vld [vmem:[%s841] sm:$0xf]
      %v843 = vld [vmem:[%s841 + $0x4] sm:$0xf]
      %v846 = vunpack.c.l.b16 %v842
      %v847 = vunpack.c.l.b16 %v843
      %v848 = vpack.c.b16 %v847, %v846
      %849 = vrot.lane.b32.xlu0 %v554, 88
      %v850 = vpop.permute.xlu0 %849
      %851 = vrot.lane.b32.xlu0 %v555, 88
      %v852 = vpop.permute.xlu0 %851
      %853 = vrot.lane.b32.xlu0 %v556, 88
      %v854 = vpop.permute.xlu0 %853
      %vm855 = vcmask 719872
      %v856 = vsel %vm855, %v850, %v852
      %v857 = vsel %vm855, %v852, %v854
      %v859 = vsel %vm346, %v848, 0
      %v862 = vsel %vm350, %v856, 0
      %v865 = vsel %vm350, %v857, 0
      %867 = vmatprep.subr.bf16.mxu0 %v865
      %868 = vmatpush1.bf16.msra.mxu0 %v862
      %869 = vmatprep.subr.bf16.mxu0 0
      %870 = vmatpush1.bf16.msra.mxu0 0
      %871 = vmatprep.subr.bf16.mxu0 0
      %872 = vmatpush1.bf16.msra.mxu0 0
      %873 = vmatprep.subr.bf16.mxu0 0
      %874 = vmatpush1.bf16.msra.mxu0 0
      %875 = vmatprep.subr.bf16.mxu0 0
      %876 = vmatpush1.bf16.msra.mxu0 0
      %877 = vmatprep.subr.bf16.mxu0 0
      %878 = vmatpush1.bf16.msra.mxu0 0
      %879 = vmatprep.subr.bf16.mxu0 0
      %880 = vmatpush1.bf16.msra.mxu0 0
      %881 = vmatprep.subr.bf16.mxu0 0
      %882 = vmatpush1.bf16.msra.mxu0 0
      %883 = vmatprep.subr.bf16.mxu0 0
      %884 = vmatpush1.bf16.msra.mxu0 0
      %885 = vmatprep.subr.bf16.mxu0 0
      %886 = vmatpush1.bf16.msra.mxu0 0
      %887 = vmatprep.subr.bf16.mxu0 0
      %888 = vmatpush1.bf16.msra.mxu0 0
      %889 = vmatprep.subr.bf16.mxu0 0
      %890 = vmatpush1.bf16.msra.mxu0 0
      %891 = vmatprep.subr.bf16.mxu0 0
      %892 = vmatpush1.bf16.msra.mxu0 0
      %893 = vmatprep.subr.bf16.mxu0 0
      %894 = vmatpush1.bf16.msra.mxu0 0
      %895 = vmatprep.subr.bf16.mxu0 0
      %896 = vmatpush1.bf16.msra.mxu0 0
      %897 = vmatprep.subr.bf16.mxu0 0
      %898 = vmatpush1.bf16.msra.mxu0 0
      %899 = vmatprep.mubr.bf16.mxu0 0
      %900 = vmatmul.mubr.bf16.gmra.mrb[0].mxu0 %v859
      %v901 = vpop.f32.mrb[0].mxu0
      %v902 = vadd.f32 0.0, %v901
      %v903 = vpop.f32.mrb[0].mxu0
      %v904 = vadd.f32 0.0, %v903
      %v905 = vpop.f32.mrb[0].mxu0
      %v906 = vadd.f32 0.0, %v905
      %v907 = vpop.f32.mrb[0].mxu0
      %v908 = vadd.f32 0.0, %v907
      %909 = vdwg.mxu0
      %v910 = vadd.f32 %v837, %v902
      %v911 = vadd.f32 %v838, %v904
      %v912 = vadd.f32 %v839, %v906
      %v913 = vadd.f32 %v840, %v908
      %s914 = scalar_lea.vmem %s1, 64
      %v915 = vld [vmem:[%s914] sm:$0xf]
      %v916 = vld [vmem:[%s914 + $0x4] sm:$0xf]
      %v919 = vunpack.c.l.b16 %v915
      %v920 = vunpack.c.l.b16 %v916
      %v921 = vpack.c.b16 %v920, %v919
      %922 = vrot.lane.b32.xlu0 %v554, 87
      %v923 = vpop.permute.xlu0 %922
      %924 = vrot.lane.b32.xlu0 %v555, 87
      %v925 = vpop.permute.xlu0 %924
      %926 = vrot.lane.b32.xlu0 %v556, 87
      %v927 = vpop.permute.xlu0 %926
      %vm928 = vcmask 711680
      %v929 = vsel %vm928, %v923, %v925
      %v930 = vsel %vm928, %v925, %v927
      %v932 = vsel %vm346, %v921, 0
      %v935 = vsel %vm350, %v929, 0
      %v938 = vsel %vm350, %v930, 0
      %940 = vmatprep.subr.bf16.mxu0 %v938
      %941 = vmatpush1.bf16.msra.mxu0 %v935
      %942 = vmatprep.subr.bf16.mxu0 0
      %943 = vmatpush1.bf16.msra.mxu0 0
      %944 = vmatprep.subr.bf16.mxu0 0
      %945 = vmatpush1.bf16.msra.mxu0 0
      %946 = vmatprep.subr.bf16.mxu0 0
      %947 = vmatpush1.bf16.msra.mxu0 0
      %948 = vmatprep.subr.bf16.mxu0 0
      %949 = vmatpush1.bf16.msra.mxu0 0
      %950 = vmatprep.subr.bf16.mxu0 0
      %951 = vmatpush1.bf16.msra.mxu0 0
      %952 = vmatprep.subr.bf16.mxu0 0
      %953 = vmatpush1.bf16.msra.mxu0 0
      %954 = vmatprep.subr.bf16.mxu0 0
      %955 = vmatpush1.bf16.msra.mxu0 0
      %956 = vmatprep.subr.bf16.mxu0 0
      %957 = vmatpush1.bf16.msra.mxu0 0
      %958 = vmatprep.subr.bf16.mxu0 0
      %959 = vmatpush1.bf16.msra.mxu0 0
      %960 = vmatprep.subr.bf16.mxu0 0
      %961 = vmatpush1.bf16.msra.mxu0 0
      %962 = vmatprep.subr.bf16.mxu0 0
      %963 = vmatpush1.bf16.msra.mxu0 0
      %964 = vmatprep.subr.bf16.mxu0 0
      %965 = vmatpush1.bf16.msra.mxu0 0
      %966 = vmatprep.subr.bf16.mxu0 0
      %967 = vmatpush1.bf16.msra.mxu0 0
      %968 = vmatprep.subr.bf16.mxu0 0
      %969 = vmatpush1.bf16.msra.mxu0 0
      %970 = vmatprep.subr.bf16.mxu0 0
      %971 = vmatpush1.bf16.msra.mxu0 0
      %972 = vmatprep.mubr.bf16.mxu0 0
      %973 = vmatmul.mubr.bf16.gmra.mrb[0].mxu0 %v932
      %v974 = vpop.f32.mrb[0].mxu0
      %v975 = vadd.f32 0.0, %v974
      %v976 = vpop.f32.mrb[0].mxu0
      %v977 = vadd.f32 0.0, %v976
      %v978 = vpop.f32.mrb[0].mxu0
      %v979 = vadd.f32 0.0, %v978
      %v980 = vpop.f32.mrb[0].mxu0
      %v981 = vadd.f32 0.0, %v980
      %982 = vdwg.mxu0
      %v983 = vadd.f32 %v910, %v975
      %v984 = vadd.f32 %v911, %v977
      %v985 = vadd.f32 %v912, %v979
      %v986 = vadd.f32 %v913, %v981
      %v987 = vld [vmem:[%s4] sm:$0xff]
      %989 = vset.pattern.permute.xlu0 0
      %990 = vperm.xlu0 %989, %v987
      %v991 = vpop.permute.xlu0 %990
      %v993 = vadd.f32 %v983, %v991
      %v994 = vadd.f32 %v984, %v991
      %v995 = vmax.f32 %v993, 0.0
      %v996 = vmax.f32 %v994, 0.0
      %v997 = vld [vmem:[%s5] sm:$0xff]
      %999 = vset.pattern.permute.xlu0 0
      %1000 = vperm.xlu0 %999, %v997
      %v1001 = vpop.permute.xlu0 %1000
      %v1003 = vadd.f32 %v985, %v1001
      %v1004 = vadd.f32 %v986, %v1001
      %v1005 = vmax.f32 %v1003, 0.0
      %v1006 = vmax.f32 %v1004, 0.0
      %v1007 = vld [vmem:[%s3] sm:$0x3]
      %v1008 = vpack.c.bf16 %v995, %v995
      %v1009 = vpack.c.bf16 %v996, %v996
      %v1010 = vld [vmem:[%s6] sm:$0xf]
      %1012 = vset.pattern.permute.xlu0 0
      %1013 = vperm.xlu0 %1012, %v1010
      %v1014 = vpop.permute.xlu0 %1013
      %v1017 = vsel %vm346, %v1007, 0
      %v1020 = vsel %vm350, %v1008, 0
      %v1023 = vsel %vm350, %v1009, 0
      %1025 = vmatprep.subr.bf16.mxu0 %v1023
      %1026 = vmatpush1.bf16.msra.mxu0 %v1020
      %1027 = vmatprep.subr.bf16.mxu0 0
      %1028 = vmatpush1.bf16.msra.mxu0 0
      %1029 = vmatprep.subr.bf16.mxu0 0
      %1030 = vmatpush1.bf16.msra.mxu0 0
      %1031 = vmatprep.subr.bf16.mxu0 0
      %1032 = vmatpush1.bf16.msra.mxu0 0
      %1033 = vmatprep.subr.bf16.mxu0 0
      %1034 = vmatpush1.bf16.msra.mxu0 0
      %1035 = vmatprep.subr.bf16.mxu0 0
      %1036 = vmatpush1.bf16.msra.mxu0 0
      %1037 = vmatprep.subr.bf16.mxu0 0
      %1038 = vmatpush1.bf16.msra.mxu0 0
      %1039 = vmatprep.subr.bf16.mxu0 0
      %1040 = vmatpush1.bf16.msra.mxu0 0
      %1041 = vmatprep.subr.bf16.mxu0 0
      %1042 = vmatpush1.bf16.msra.mxu0 0
      %1043 = vmatprep.subr.bf16.mxu0 0
      %1044 = vmatpush1.bf16.msra.mxu0 0
      %1045 = vmatprep.subr.bf16.mxu0 0
      %1046 = vmatpush1.bf16.msra.mxu0 0
      %1047 = vmatprep.subr.bf16.mxu0 0
      %1048 = vmatpush1.bf16.msra.mxu0 0
      %1049 = vmatprep.subr.bf16.mxu0 0
      %1050 = vmatpush1.bf16.msra.mxu0 0
      %1051 = vmatprep.subr.bf16.mxu0 0
      %1052 = vmatpush1.bf16.msra.mxu0 0
      %1053 = vmatprep.subr.bf16.mxu0 0
      %1054 = vmatpush1.bf16.msra.mxu0 0
      %1055 = vmatprep.subr.bf16.mxu0 0
      %1056 = vmatpush1.bf16.msra.mxu0 0
      %1057 = vmatprep.mubr.bf16.mxu0 0
      %1058 = vmatmul.mubr.bf16.gmra.mrb[0].mxu0 %v1017
      %v1059 = vpop.f32.mrb[0].mxu0
      %v1060 = vadd.f32 %v1014, %v1059
      %v1061 = vpop.f32.mrb[0].mxu0
      %v1062 = vadd.f32 %v1014, %v1061
      %v1063 = vpop.f32.mrb[0].mxu0
      %v1064 = vpop.f32.mrb[0].mxu0
      %1065 = vdwg.mxu0
      %v1066 = vmax.f32 %v1060, 0.0
      %v1067 = vmax.f32 %v1062, 0.0
      %v1068 = vsel %vm350, %v1066, -inf
      %v1069 = vrot.slane %v1068, 4
      %v1070 = vmax.f32 %v1068, %v1069
      %v1071 = vrot.slane %v1070, 2
      %v1072 = vmax.f32 %v1070, %v1071
      %v1073 = vrot.slane %v1072, 1
      %v1074 = vmax.f32 %v1072, %v1073
      %v1075 = vsel %vm350, %v1067, -inf
      %v1076 = vrot.slane %v1075, 4
      %v1077 = vmax.f32 %v1075, %v1076
      %v1078 = vrot.slane %v1077, 2
      %v1079 = vmax.f32 %v1077, %v1078
      %v1080 = vrot.slane %v1079, 1
      %v1081 = vmax.f32 %v1079, %v1080
      %v1082 = vsub.f32 %v1066, %v1074
      %v1083 = vsub.f32 %v1067, %v1081
      %v1084 = vmul.f32 %v1082, 1.442695
      %v1085 = vpow.pop %v1084
      %v1086 = vmul.f32 %v1083, 1.442695
      %v1087 = vpow.pop %v1086
      %v1088 = vsel %vm350, %v1085, 0.0
      %v1089 = vrot.slane %v1088, 4
      %v1090 = vadd.f32 %v1088, %v1089
      %v1091 = vrot.slane %v1090, 2
      %v1092 = vadd.f32 %v1090, %v1091
      %v1093 = vrot.slane %v1092, 1
      %v1094 = vadd.f32 %v1092, %v1093
      %v1095 = vsel %vm350, %v1087, 0.0
      %v1096 = vrot.slane %v1095, 4
      %v1097 = vadd.f32 %v1095, %v1096
      %v1098 = vrot.slane %v1097, 2
      %v1099 = vadd.f32 %v1097, %v1098
      %v1100 = vrot.slane %v1099, 1
      %v1101 = vadd.f32 %v1099, %v1100
      %v1102 = vrcp.pop %v1094
      %v1103 = vrcp.pop %v1101
      %v1104 = vmul.f32 %v1085, %v1102
      %v1105 = vmul.f32 %v1087, %v1103
      %v1106 = vlaneseq
      %v1107 = vshrl.u32 %v1106, 7
      %v1108 = vsub.s32 0, %v1107
      %v1109 = vrot.slane %v1104, %v1108
      %v1110 = vlaneseq
      %v1111 = vshrl.u32 %v1110, 7
      %v1112 = vsub.s32 0, %v1111
      %v1113 = vrot.slane %v1105, %v1112
      %v1114 = vmul.f32 %v1109, %v1005
      %v1115 = vmul.f32 %v1113, %v1006
      %v1116 = vld [vmem:[%s2] sm:$0xf]
      %s1117 = scalar_lea.vmem %s2, 4
      %v1118 = vld [vmem:[%s1117] sm:$0xf]
      %1119 = vrot.lane.b32.xlu0 %v334, 56
      %v1120 = vpop.permute.xlu0 %1119
      %1121 = vrot.lane.b32.xlu0 %v335, 56
      %v1122 = vpop.permute.xlu0 %1121
      %1123 = vrot.lane.b32.xlu0 %v336, 56
      %v1124 = vpop.permute.xlu0 %1123
      %vm1125 = vcmask 457728
      %v1126 = vsel %vm1125, %v1120, %v1122
      %v1127 = vsel %vm1125, %v1122, %v1124
      %v1129 = vsel %vm346, %v1118, 0
      %v1132 = vsel %vm350, %v1126, 0
      %v1135 = vsel %vm350, %v1127, 0
      %1137 = vmatprep.subr.bf16.mxu0 %v1135
      %1138 = vmatpush1.bf16.msra.mxu0 %v1132
      %1139 = vmatprep.subr.bf16.mxu0 0
      %1140 = vmatpush1.bf16.msra.mxu0 0
      %1141 = vmatprep.subr.bf16.mxu0 0
      %1142 = vmatpush1.bf16.msra.mxu0 0
      %1143 = vmatprep.subr.bf16.mxu0 0
      %1144 = vmatpush1.bf16.msra.mxu0 0
      %1145 = vmatprep.subr.bf16.mxu0 0
      %1146 = vmatpush1.bf16.msra.mxu0 0
      %1147 = vmatprep.subr.bf16.mxu0 0
      %1148 = vmatpush1.bf16.msra.mxu0 0
      %1149 = vmatprep.subr.bf16.mxu0 0
      %1150 = vmatpush1.bf16.msra.mxu0 0
      %1151 = vmatprep.subr.bf16.mxu0 0
      %1152 = vmatpush1.bf16.msra.mxu0 0
      %1153 = vmatprep.subr.bf16.mxu0 0
      %1154 = vmatpush1.bf16.msra.mxu0 0
      %1155 = vmatprep.subr.bf16.mxu0 0
      %1156 = vmatpush1.bf16.msra.mxu0 0
      %1157 = vmatprep.subr.bf16.mxu0 0
      %1158 = vmatpush1.bf16.msra.mxu0 0
      %1159 = vmatprep.subr.bf16.mxu0 0
      %1160 = vmatpush1.bf16.msra.mxu0 0
      %1161 = vmatprep.subr.bf16.mxu0 0
      %1162 = vmatpush1.bf16.msra.mxu0 0
      %1163 = vmatprep.subr.bf16.mxu0 0
      %1164 = vmatpush1.bf16.msra.mxu0 0
      %1165 = vmatprep.subr.bf16.mxu0 0
      %1166 = vmatpush1.bf16.msra.mxu0 0
      %1167 = vmatprep.subr.bf16.mxu0 0
      %1168 = vmatpush1.bf16.msra.mxu0 0
      %1169 = vmatprep.mubr.bf16.mxu0 0
      %1170 = vmatmul.mubr.bf16.gmra.mrb[0].mxu0 %v1129
      %v1171 = vpop.f32.mrb[0].mxu0
      %v1172 = vadd.f32 0.0, %v1171
      %v1173 = vpop.f32.mrb[0].mxu0
      %v1174 = vadd.f32 0.0, %v1173
      %v1175 = vpop.f32.mrb[0].mxu0
      %v1176 = vpop.f32.mrb[0].mxu0
      %1177 = vdwg.mxu0
      %1178 = vrot.lane.b32.xlu0 %v334, 58
      %v1179 = vpop.permute.xlu0 %1178
      %1180 = vrot.lane.b32.xlu0 %v335, 58
      %v1181 = vpop.permute.xlu0 %1180
      %1182 = vrot.lane.b32.xlu0 %v336, 58
      %v1183 = vpop.permute.xlu0 %1182
      %vm1184 = vcmask 474112
      %v1185 = vsel %vm1184, %v1179, %v1181
      %v1186 = vsel %vm1184, %v1181, %v1183
      %v1188 = vsel %vm346, %v1116, 0
      %v1191 = vsel %vm350, %v1185, 0
      %v1194 = vsel %vm350, %v1186, 0
      %1196 = vmatprep.subr.bf16.mxu0 %v1194
      %1197 = vmatpush1.bf16.msra.mxu0 %v1191
      %1198 = vmatprep.subr.bf16.mxu0 0
      %1199 = vmatpush1.bf16.msra.mxu0 0
      %1200 = vmatprep.subr.bf16.mxu0 0
      %1201 = vmatpush1.bf16.msra.mxu0 0
      %1202 = vmatprep.subr.bf16.mxu0 0
      %1203 = vmatpush1.bf16.msra.mxu0 0
      %1204 = vmatprep.subr.bf16.mxu0 0
      %1205 = vmatpush1.bf16.msra.mxu0 0
      %1206 = vmatprep.subr.bf16.mxu0 0
      %1207 = vmatpush1.bf16.msra.mxu0 0
      %1208 = vmatprep.subr.bf16.mxu0 0
      %1209 = vmatpush1.bf16.msra.mxu0 0
      %1210 = vmatprep.subr.bf16.mxu0 0
      %1211 = vmatpush1.bf16.msra.mxu0 0
      %1212 = vmatprep.subr.bf16.mxu0 0
      %1213 = vmatpush1.bf16.msra.mxu0 0
      %1214 = vmatprep.subr.bf16.mxu0 0
      %1215 = vmatpush1.bf16.msra.mxu0 0
      %1216 = vmatprep.subr.bf16.mxu0 0
      %1217 = vmatpush1.bf16.msra.mxu0 0
      %1218 = vmatprep.subr.bf16.mxu0 0
      %1219 = vmatpush1.bf16.msra.mxu0 0
      %1220 = vmatprep.subr.bf16.mxu0 0
      %1221 = vmatpush1.bf16.msra.mxu0 0
      %1222 = vmatprep.subr.bf16.mxu0 0
      %1223 = vmatpush1.bf16.msra.mxu0 0
      %1224 = vmatprep.subr.bf16.mxu0 0
      %1225 = vmatpush1.bf16.msra.mxu0 0
      %1226 = vmatprep.subr.bf16.mxu0 0
      %1227 = vmatpush1.bf16.msra.mxu0 0
      %1228 = vmatprep.mubr.bf16.mxu0 0
      %1229 = vmatmul.mubr.bf16.gmra.mrb[0].mxu0 %v1188
      %v1230 = vpop.f32.mrb[0].mxu0
      %v1231 = vadd.f32 %v1172, %v1230
      %v1232 = vpop.f32.mrb[0].mxu0
      %v1233 = vadd.f32 %v1174, %v1232
      %v1234 = vpop.f32.mrb[0].mxu0
      %v1235 = vpop.f32.mrb[0].mxu0
      %1236 = vdwg.mxu0
      %s1237 = scalar_lea.vmem %s2, 8
      %v1238 = vld [vmem:[%s1237] sm:$0xf]
      %1239 = vrot.lane.b32.xlu0 %v334, 54
      %v1240 = vpop.permute.xlu0 %1239
      %1241 = vrot.lane.b32.xlu0 %v335, 54
      %v1242 = vpop.permute.xlu0 %1241
      %1243 = vrot.lane.b32.xlu0 %v336, 54
      %v1244 = vpop.permute.xlu0 %1243
      %vm1245 = vcmask 441344
      %v1246 = vsel %vm1245, %v1240, %v1242
      %v1247 = vsel %vm1245, %v1242, %v1244
      %v1249 = vsel %vm346, %v1238, 0
      %v1252 = vsel %vm350, %v1246, 0
      %v1255 = vsel %vm350, %v1247, 0
      %1257 = vmatprep.subr.bf16.mxu0 %v1255
      %1258 = vmatpush1.bf16.msra.mxu0 %v1252
      %1259 = vmatprep.subr.bf16.mxu0 0
      %1260 = vmatpush1.bf16.msra.mxu0 0
      %1261 = vmatprep.subr.bf16.mxu0 0
      %1262 = vmatpush1.bf16.msra.mxu0 0
      %1263 = vmatprep.subr.bf16.mxu0 0
      %1264 = vmatpush1.bf16.msra.mxu0 0
      %1265 = vmatprep.subr.bf16.mxu0 0
      %1266 = vmatpush1.bf16.msra.mxu0 0
      %1267 = vmatprep.subr.bf16.mxu0 0
      %1268 = vmatpush1.bf16.msra.mxu0 0
      %1269 = vmatprep.subr.bf16.mxu0 0
      %1270 = vmatpush1.bf16.msra.mxu0 0
      %1271 = vmatprep.subr.bf16.mxu0 0
      %1272 = vmatpush1.bf16.msra.mxu0 0
      %1273 = vmatprep.subr.bf16.mxu0 0
      %1274 = vmatpush1.bf16.msra.mxu0 0
      %1275 = vmatprep.subr.bf16.mxu0 0
      %1276 = vmatpush1.bf16.msra.mxu0 0
      %1277 = vmatprep.subr.bf16.mxu0 0
      %1278 = vmatpush1.bf16.msra.mxu0 0
      %1279 = vmatprep.subr.bf16.mxu0 0
      %1280 = vmatpush1.bf16.msra.mxu0 0
      %1281 = vmatprep.subr.bf16.mxu0 0
      %1282 = vmatpush1.bf16.msra.mxu0 0
      %1283 = vmatprep.subr.bf16.mxu0 0
      %1284 = vmatpush1.bf16.msra.mxu0 0
      %1285 = vmatprep.subr.bf16.mxu0 0
      %1286 = vmatpush1.bf16.msra.mxu0 0
      %1287 = vmatprep.subr.bf16.mxu0 0
      %1288 = vmatpush1.bf16.msra.mxu0 0
      %1289 = vmatprep.mubr.bf16.mxu0 0
      %1290 = vmatmul.mubr.bf16.gmra.mrb[0].mxu0 %v1249
      %v1291 = vpop.f32.mrb[0].mxu0
      %v1292 = vadd.f32 0.0, %v1291
      %v1293 = vpop.f32.mrb[0].mxu0
      %v1294 = vadd.f32 0.0, %v1293
      %v1295 = vpop.f32.mrb[0].mxu0
      %v1296 = vpop.f32.mrb[0].mxu0
      %1297 = vdwg.mxu0
      %v1298 = vadd.f32 %v1231, %v1292
      %v1299 = vadd.f32 %v1233, %v1294
      %s1300 = scalar_lea.vmem %s2, 12
      %v1301 = vld [vmem:[%s1300] sm:$0xf]
      %1302 = vrot.lane.b32.xlu0 %v554, 122
      %v1303 = vpop.permute.xlu0 %1302
      %1304 = vrot.lane.b32.xlu0 %v555, 122
      %v1305 = vpop.permute.xlu0 %1304
      %1306 = vrot.lane.b32.xlu0 %v556, 122
      %v1307 = vpop.permute.xlu0 %1306
      %vm1308 = vcmask 998400
      %v1309 = vsel %vm1308, %v1303, %v1305
      %v1310 = vsel %vm1308, %v1305, %v1307
      %v1312 = vsel %vm346, %v1301, 0
      %v1315 = vsel %vm350, %v1309, 0
      %v1318 = vsel %vm350, %v1310, 0
      %1320 = vmatprep.subr.bf16.mxu0 %v1318
      %1321 = vmatpush1.bf16.msra.mxu0 %v1315
      %1322 = vmatprep.subr.bf16.mxu0 0
      %1323 = vmatpush1.bf16.msra.mxu0 0
      %1324 = vmatprep.subr.bf16.mxu0 0
      %1325 = vmatpush1.bf16.msra.mxu0 0
      %1326 = vmatprep.subr.bf16.mxu0 0
      %1327 = vmatpush1.bf16.msra.mxu0 0
      %1328 = vmatprep.subr.bf16.mxu0 0
      %1329 = vmatpush1.bf16.msra.mxu0 0
      %1330 = vmatprep.subr.bf16.mxu0 0
      %1331 = vmatpush1.bf16.msra.mxu0 0
      %1332 = vmatprep.subr.bf16.mxu0 0
      %1333 = vmatpush1.bf16.msra.mxu0 0
      %1334 = vmatprep.subr.bf16.mxu0 0
      %1335 = vmatpush1.bf16.msra.mxu0 0
      %1336 = vmatprep.subr.bf16.mxu0 0
      %1337 = vmatpush1.bf16.msra.mxu0 0
      %1338 = vmatprep.subr.bf16.mxu0 0
      %1339 = vmatpush1.bf16.msra.mxu0 0
      %1340 = vmatprep.subr.bf16.mxu0 0
      %1341 = vmatpush1.bf16.msra.mxu0 0
      %1342 = vmatprep.subr.bf16.mxu0 0
      %1343 = vmatpush1.bf16.msra.mxu0 0
      %1344 = vmatprep.subr.bf16.mxu0 0
      %1345 = vmatpush1.bf16.msra.mxu0 0
      %1346 = vmatprep.subr.bf16.mxu0 0
      %1347 = vmatpush1.bf16.msra.mxu0 0
      %1348 = vmatprep.subr.bf16.mxu0 0
      %1349 = vmatpush1.bf16.msra.mxu0 0
      %1350 = vmatprep.subr.bf16.mxu0 0
      %1351 = vmatpush1.bf16.msra.mxu0 0
      %1352 = vmatprep.mubr.bf16.mxu0 0
      %1353 = vmatmul.mubr.bf16.gmra.mrb[0].mxu0 %v1312
      %v1354 = vpop.f32.mrb[0].mxu0
      %v1355 = vadd.f32 0.0, %v1354
      %v1356 = vpop.f32.mrb[0].mxu0
      %v1357 = vadd.f32 0.0, %v1356
      %v1358 = vpop.f32.mrb[0].mxu0
      %v1359 = vpop.f32.mrb[0].mxu0
      %1360 = vdwg.mxu0
      %v1361 = vadd.f32 %v1298, %v1355
      %v1362 = vadd.f32 %v1299, %v1357
      %s1363 = scalar_lea.vmem %s2, 16
      %v1364 = vld [vmem:[%s1363] sm:$0xf]
      %v1366 = vsel %vm346, %v1364, 0
      %1368 = vmatprep.subr.bf16.mxu0 %v646
      %1369 = vmatpush1.bf16.msra.mxu0 %v643
      %1370 = vmatprep.subr.bf16.mxu0 0
      %1371 = vmatpush1.bf16.msra.mxu0 0
      %1372 = vmatprep.subr.bf16.mxu0 0
      %1373 = vmatpush1.bf16.msra.mxu0 0
      %1374 = vmatprep.subr.bf16.mxu0 0
      %1375 = vmatpush1.bf16.msra.mxu0 0
      %1376 = vmatprep.subr.bf16.mxu0 0
      %1377 = vmatpush1.bf16.msra.mxu0 0
      %1378 = vmatprep.subr.bf16.mxu0 0
      %1379 = vmatpush1.bf16.msra.mxu0 0
      %1380 = vmatprep.subr.bf16.mxu0 0
      %1381 = vmatpush1.bf16.msra.mxu0 0
      %1382 = vmatprep.subr.bf16.mxu0 0
      %1383 = vmatpush1.bf16.msra.mxu0 0
      %1384 = vmatprep.subr.bf16.mxu0 0
      %1385 = vmatpush1.bf16.msra.mxu0 0
      %1386 = vmatprep.subr.bf16.mxu0 0
      %1387 = vmatpush1.bf16.msra.mxu0 0
      %1388 = vmatprep.subr.bf16.mxu0 0
      %1389 = vmatpush1.bf16.msra.mxu0 0
      %1390 = vmatprep.subr.bf16.mxu0 0
      %1391 = vmatpush1.bf16.msra.mxu0 0
      %1392 = vmatprep.subr.bf16.mxu0 0
      %1393 = vmatpush1.bf16.msra.mxu0 0
      %1394 = vmatprep.subr.bf16.mxu0 0
      %1395 = vmatpush1.bf16.msra.mxu0 0
      %1396 = vmatprep.subr.bf16.mxu0 0
      %1397 = vmatpush1.bf16.msra.mxu0 0
      %1398 = vmatprep.subr.bf16.mxu0 0
      %1399 = vmatpush1.bf16.msra.mxu0 0
      %1400 = vmatprep.mubr.bf16.mxu0 0
      %1401 = vmatmul.mubr.bf16.gmra.mrb[0].mxu0 %v1366
      %v1402 = vpop.f32.mrb[0].mxu0
      %v1403 = vadd.f32 0.0, %v1402
      %v1404 = vpop.f32.mrb[0].mxu0
      %v1405 = vadd.f32 0.0, %v1404
      %v1406 = vpop.f32.mrb[0].mxu0
      %v1407 = vpop.f32.mrb[0].mxu0
      %1408 = vdwg.mxu0
      %v1409 = vadd.f32 %v1361, %v1403
      %v1410 = vadd.f32 %v1362, %v1405
      %s1411 = scalar_lea.vmem %s2, 20
      %v1412 = vld [vmem:[%s1411] sm:$0xf]
      %1413 = vrot.lane.b32.xlu0 %v554, 118
      %v1414 = vpop.permute.xlu0 %1413
      %1415 = vrot.lane.b32.xlu0 %v555, 118
      %v1416 = vpop.permute.xlu0 %1415
      %1417 = vrot.lane.b32.xlu0 %v556, 118
      %v1418 = vpop.permute.xlu0 %1417
      %vm1419 = vcmask 965632
      %v1420 = vsel %vm1419, %v1414, %v1416
      %v1421 = vsel %vm1419, %v1416, %v1418
      %v1423 = vsel %vm346, %v1412, 0
      %v1426 = vsel %vm350, %v1420, 0
      %v1429 = vsel %vm350, %v1421, 0
      %1431 = vmatprep.subr.bf16.mxu0 %v1429
      %1432 = vmatpush1.bf16.msra.mxu0 %v1426
      %1433 = vmatprep.subr.bf16.mxu0 0
      %1434 = vmatpush1.bf16.msra.mxu0 0
      %1435 = vmatprep.subr.bf16.mxu0 0
      %1436 = vmatpush1.bf16.msra.mxu0 0
      %1437 = vmatprep.subr.bf16.mxu0 0
      %1438 = vmatpush1.bf16.msra.mxu0 0
      %1439 = vmatprep.subr.bf16.mxu0 0
      %1440 = vmatpush1.bf16.msra.mxu0 0
      %1441 = vmatprep.subr.bf16.mxu0 0
      %1442 = vmatpush1.bf16.msra.mxu0 0
      %1443 = vmatprep.subr.bf16.mxu0 0
      %1444 = vmatpush1.bf16.msra.mxu0 0
      %1445 = vmatprep.subr.bf16.mxu0 0
      %1446 = vmatpush1.bf16.msra.mxu0 0
      %1447 = vmatprep.subr.bf16.mxu0 0
      %1448 = vmatpush1.bf16.msra.mxu0 0
      %1449 = vmatprep.subr.bf16.mxu0 0
      %1450 = vmatpush1.bf16.msra.mxu0 0
      %1451 = vmatprep.subr.bf16.mxu0 0
      %1452 = vmatpush1.bf16.msra.mxu0 0
      %1453 = vmatprep.subr.bf16.mxu0 0
      %1454 = vmatpush1.bf16.msra.mxu0 0
      %1455 = vmatprep.subr.bf16.mxu0 0
      %1456 = vmatpush1.bf16.msra.mxu0 0
      %1457 = vmatprep.subr.bf16.mxu0 0
      %1458 = vmatpush1.bf16.msra.mxu0 0
      %1459 = vmatprep.subr.bf16.mxu0 0
      %1460 = vmatpush1.bf16.msra.mxu0 0
      %1461 = vmatprep.subr.bf16.mxu0 0
      %1462 = vmatpush1.bf16.msra.mxu0 0
      %1463 = vmatprep.mubr.bf16.mxu0 0
      %1464 = vmatmul.mubr.bf16.gmra.mrb[0].mxu0 %v1423
      %v1465 = vpop.f32.mrb[0].mxu0
      %v1466 = vadd.f32 0.0, %v1465
      %v1467 = vpop.f32.mrb[0].mxu0
      %v1468 = vadd.f32 0.0, %v1467
      %v1469 = vpop.f32.mrb[0].mxu0
      %v1470 = vpop.f32.mrb[0].mxu0
      %1471 = vdwg.mxu0
      %v1472 = vadd.f32 %v1409, %v1466
      %v1473 = vadd.f32 %v1410, %v1468
      %s1474 = scalar_lea.vmem %s2, 24
      %v1475 = vld [vmem:[%s1474] sm:$0xf]
      %1476 = vrot.lane.b32.xlu0 %v554, 58
      %v1477 = vpop.permute.xlu0 %1476
      %1478 = vrot.lane.b32.xlu0 %v555, 58
      %v1479 = vpop.permute.xlu0 %1478
      %1480 = vrot.lane.b32.xlu0 %v556, 58
      %v1481 = vpop.permute.xlu0 %1480
      %v1482 = vsel %vm1184, %v1477, %v1479
      %v1483 = vsel %vm1184, %v1479, %v1481
      %v1485 = vsel %vm346, %v1475, 0
      %v1488 = vsel %vm350, %v1482, 0
      %v1491 = vsel %vm350, %v1483, 0
      %1493 = vmatprep.subr.bf16.mxu0 %v1491
      %1494 = vmatpush1.bf16.msra.mxu0 %v1488
      %1495 = vmatprep.subr.bf16.mxu0 0
      %1496 = vmatpush1.bf16.msra.mxu0 0
      %1497 = vmatprep.subr.bf16.mxu0 0
      %1498 = vmatpush1.bf16.msra.mxu0 0
      %1499 = vmatprep.subr.bf16.mxu0 0
      %1500 = vmatpush1.bf16.msra.mxu0 0
      %1501 = vmatprep.subr.bf16.mxu0 0
      %1502 = vmatpush1.bf16.msra.mxu0 0
      %1503 = vmatprep.subr.bf16.mxu0 0
      %1504 = vmatpush1.bf16.msra.mxu0 0
      %1505 = vmatprep.subr.bf16.mxu0 0
      %1506 = vmatpush1.bf16.msra.mxu0 0
      %1507 = vmatprep.subr.bf16.mxu0 0
      %1508 = vmatpush1.bf16.msra.mxu0 0
      %1509 = vmatprep.subr.bf16.mxu0 0
      %1510 = vmatpush1.bf16.msra.mxu0 0
      %1511 = vmatprep.subr.bf16.mxu0 0
      %1512 = vmatpush1.bf16.msra.mxu0 0
      %1513 = vmatprep.subr.bf16.mxu0 0
      %1514 = vmatpush1.bf16.msra.mxu0 0
      %1515 = vmatprep.subr.bf16.mxu0 0
      %1516 = vmatpush1.bf16.msra.mxu0 0
      %1517 = vmatprep.subr.bf16.mxu0 0
      %1518 = vmatpush1.bf16.msra.mxu0 0
      %1519 = vmatprep.subr.bf16.mxu0 0
      %1520 = vmatpush1.bf16.msra.mxu0 0
      %1521 = vmatprep.subr.bf16.mxu0 0
      %1522 = vmatpush1.bf16.msra.mxu0 0
      %1523 = vmatprep.subr.bf16.mxu0 0
      %1524 = vmatpush1.bf16.msra.mxu0 0
      %1525 = vmatprep.mubr.bf16.mxu0 0
      %1526 = vmatmul.mubr.bf16.gmra.mrb[0].mxu0 %v1485
      %v1527 = vpop.f32.mrb[0].mxu0
      %v1528 = vadd.f32 0.0, %v1527
      %v1529 = vpop.f32.mrb[0].mxu0
      %v1530 = vadd.f32 0.0, %v1529
      %v1531 = vpop.f32.mrb[0].mxu0
      %v1532 = vpop.f32.mrb[0].mxu0
      %1533 = vdwg.mxu0
      %v1534 = vadd.f32 %v1472, %v1528
      %v1535 = vadd.f32 %v1473, %v1530
      %s1536 = scalar_lea.vmem %s2, 28
      %v1537 = vld [vmem:[%s1536] sm:$0xf]
      %1538 = vrot.lane.b32.xlu0 %v554, 56
      %v1539 = vpop.permute.xlu0 %1538
      %1540 = vrot.lane.b32.xlu0 %v555, 56
      %v1541 = vpop.permute.xlu0 %1540
      %1542 = vrot.lane.b32.xlu0 %v556, 56
      %v1543 = vpop.permute.xlu0 %1542
      %v1544 = vsel %vm1125, %v1539, %v1541
      %v1545 = vsel %vm1125, %v1541, %v1543
      %v1547 = vsel %vm346, %v1537, 0
      %v1550 = vsel %vm350, %v1544, 0
      %v1553 = vsel %vm350, %v1545, 0
      %1555 = vmatprep.subr.bf16.mxu0 %v1553
      %1556 = vmatpush1.bf16.msra.mxu0 %v1550
      %1557 = vmatprep.subr.bf16.mxu0 0
      %1558 = vmatpush1.bf16.msra.mxu0 0
      %1559 = vmatprep.subr.bf16.mxu0 0
      %1560 = vmatpush1.bf16.msra.mxu0 0
      %1561 = vmatprep.subr.bf16.mxu0 0
      %1562 = vmatpush1.bf16.msra.mxu0 0
      %1563 = vmatprep.subr.bf16.mxu0 0
      %1564 = vmatpush1.bf16.msra.mxu0 0
      %1565 = vmatprep.subr.bf16.mxu0 0
      %1566 = vmatpush1.bf16.msra.mxu0 0
      %1567 = vmatprep.subr.bf16.mxu0 0
      %1568 = vmatpush1.bf16.msra.mxu0 0
      %1569 = vmatprep.subr.bf16.mxu0 0
      %1570 = vmatpush1.bf16.msra.mxu0 0
      %1571 = vmatprep.subr.bf16.mxu0 0
      %1572 = vmatpush1.bf16.msra.mxu0 0
      %1573 = vmatprep.subr.bf16.mxu0 0
      %1574 = vmatpush1.bf16.msra.mxu0 0
      %1575 = vmatprep.subr.bf16.mxu0 0
      %1576 = vmatpush1.bf16.msra.mxu0 0
      %1577 = vmatprep.subr.bf16.mxu0 0
      %1578 = vmatpush1.bf16.msra.mxu0 0
      %1579 = vmatprep.subr.bf16.mxu0 0
      %1580 = vmatpush1.bf16.msra.mxu0 0
      %1581 = vmatprep.subr.bf16.mxu0 0
      %1582 = vmatpush1.bf16.msra.mxu0 0
      %1583 = vmatprep.subr.bf16.mxu0 0
      %1584 = vmatpush1.bf16.msra.mxu0 0
      %1585 = vmatprep.subr.bf16.mxu0 0
      %1586 = vmatpush1.bf16.msra.mxu0 0
      %1587 = vmatprep.mubr.bf16.mxu0 0
      %1588 = vmatmul.mubr.bf16.gmra.mrb[0].mxu0 %v1547
      %v1589 = vpop.f32.mrb[0].mxu0
      %v1590 = vadd.f32 0.0, %v1589
      %v1591 = vpop.f32.mrb[0].mxu0
      %v1592 = vadd.f32 0.0, %v1591
      %v1593 = vpop.f32.mrb[0].mxu0
      %v1594 = vpop.f32.mrb[0].mxu0
      %1595 = vdwg.mxu0
      %v1596 = vadd.f32 %v1534, %v1590
      %v1597 = vadd.f32 %v1535, %v1592
      %s1598 = scalar_lea.vmem %s2, 32
      %v1599 = vld [vmem:[%s1598] sm:$0xf]
      %1600 = vrot.lane.b32.xlu0 %v554, 54
      %v1601 = vpop.permute.xlu0 %1600
      %1602 = vrot.lane.b32.xlu0 %v555, 54
      %v1603 = vpop.permute.xlu0 %1602
      %1604 = vrot.lane.b32.xlu0 %v556, 54
      %v1605 = vpop.permute.xlu0 %1604
      %v1606 = vsel %vm1245, %v1601, %v1603
      %v1607 = vsel %vm1245, %v1603, %v1605
      %v1609 = vsel %vm346, %v1599, 0
      %v1612 = vsel %vm350, %v1606, 0
      %v1615 = vsel %vm350, %v1607, 0
      %1617 = vmatprep.subr.bf16.mxu0 %v1615
      %1618 = vmatpush1.bf16.msra.mxu0 %v1612
      %1619 = vmatprep.subr.bf16.mxu0 0
      %1620 = vmatpush1.bf16.msra.mxu0 0
      %1621 = vmatprep.subr.bf16.mxu0 0
      %1622 = vmatpush1.bf16.msra.mxu0 0
      %1623 = vmatprep.subr.bf16.mxu0 0
      %1624 = vmatpush1.bf16.msra.mxu0 0
      %1625 = vmatprep.subr.bf16.mxu0 0
      %1626 = vmatpush1.bf16.msra.mxu0 0
      %1627 = vmatprep.subr.bf16.mxu0 0
      %1628 = vmatpush1.bf16.msra.mxu0 0
      %1629 = vmatprep.subr.bf16.mxu0 0
      %1630 = vmatpush1.bf16.msra.mxu0 0
      %1631 = vmatprep.subr.bf16.mxu0 0
      %1632 = vmatpush1.bf16.msra.mxu0 0
      %1633 = vmatprep.subr.bf16.mxu0 0
      %1634 = vmatpush1.bf16.msra.mxu0 0
      %1635 = vmatprep.subr.bf16.mxu0 0
      %1636 = vmatpush1.bf16.msra.mxu0 0
      %1637 = vmatprep.subr.bf16.mxu0 0
      %1638 = vmatpush1.bf16.msra.mxu0 0
      %1639 = vmatprep.subr.bf16.mxu0 0
      %1640 = vmatpush1.bf16.msra.mxu0 0
      %1641 = vmatprep.subr.bf16.mxu0 0
      %1642 = vmatpush1.bf16.msra.mxu0 0
      %1643 = vmatprep.subr.bf16.mxu0 0
      %1644 = vmatpush1.bf16.msra.mxu0 0
      %1645 = vmatprep.subr.bf16.mxu0 0
      %1646 = vmatpush1.bf16.msra.mxu0 0
      %1647 = vmatprep.subr.bf16.mxu0 0
      %1648 = vmatpush1.bf16.msra.mxu0 0
      %1649 = vmatprep.mubr.bf16.mxu0 0
      %1650 = vmatmul.mubr.bf16.gmra.mrb[0].mxu0 %v1609
      %v1651 = vpop.f32.mrb[0].mxu0
      %v1652 = vadd.f32 0.0, %v1651
      %v1653 = vpop.f32.mrb[0].mxu0
      %v1654 = vadd.f32 0.0, %v1653
      %v1655 = vpop.f32.mrb[0].mxu0
      %v1656 = vpop.f32.mrb[0].mxu0
      %1657 = vdwg.mxu0
      %v1658 = vadd.f32 %v1596, %v1652
      %v1659 = vadd.f32 %v1597, %v1654
      %1660 = vset.pattern.permute.xlu0 1
      %1661 = vperm.xlu0 %1660, %v997
      %v1662 = vpop.permute.xlu0 %1661
      %v1664 = vadd.f32 %v1658, %v1662
      %v1665 = vadd.f32 %v1659, %v1662
      %v1666 = vmax.f32 %v1664, 0.0
      %v1667 = vmax.f32 %v1665, 0.0
      %v1668 = vlaneseq
      %v1669 = vshrl.u32 %v1668, 7
      %v1670 = vsub.s32 1, %v1669
      %v1671 = vrot.slane %v1104, %v1670
      %v1672 = vlaneseq
      %v1673 = vshrl.u32 %v1672, 7
      %v1674 = vsub.s32 1, %v1673
      %v1675 = vrot.slane %v1105, %v1674
      %v1676 = vmul.f32 %v1671, %v1666
      %v1677 = vmul.f32 %v1675, %v1667
      %v1678 = vadd.f32 %v1114, %v1676
      %v1679 = vadd.f32 %v1115, %v1677
      %s1680 = scalar_lea.vmem %s2, 36
      %v1681 = vld [vmem:[%s1680] sm:$0xf]
      %s1682 = scalar_lea.vmem %s2, 40
      %v1683 = vld [vmem:[%s1682] sm:$0xf]
      %1684 = vrot.lane.b32.xlu0 %v334, 120
      %v1685 = vpop.permute.xlu0 %1684
      %1686 = vrot.lane.b32.xlu0 %v335, 120
      %v1687 = vpop.permute.xlu0 %1686
      %1688 = vrot.lane.b32.xlu0 %v336, 120
      %v1689 = vpop.permute.xlu0 %1688
      %v1690 = vsel %vm636, %v1685, %v1687
      %v1691 = vsel %vm636, %v1687, %v1689
      %v1693 = vsel %vm346, %v1683, 0
      %v1696 = vsel %vm350, %v1690, 0
      %v1699 = vsel %vm350, %v1691, 0
      %1701 = vmatprep.subr.bf16.mxu0 %v1699
      %1702 = vmatpush1.bf16.msra.mxu0 %v1696
      %1703 = vmatprep.subr.bf16.mxu0 0
      %1704 = vmatpush1.bf16.msra.mxu0 0
      %1705 = vmatprep.subr.bf16.mxu0 0
      %1706 = vmatpush1.bf16.msra.mxu0 0
      %1707 = vmatprep.subr.bf16.mxu0 0
      %1708 = vmatpush1.bf16.msra.mxu0 0
      %1709 = vmatprep.subr.bf16.mxu0 0
      %1710 = vmatpush1.bf16.msra.mxu0 0
      %1711 = vmatprep.subr.bf16.mxu0 0
      %1712 = vmatpush1.bf16.msra.mxu0 0
      %1713 = vmatprep.subr.bf16.mxu0 0
      %1714 = vmatpush1.bf16.msra.mxu0 0
      %1715 = vmatprep.subr.bf16.mxu0 0
      %1716 = vmatpush1.bf16.msra.mxu0 0
      %1717 = vmatprep.subr.bf16.mxu0 0
      %1718 = vmatpush1.bf16.msra.mxu0 0
      %1719 = vmatprep.subr.bf16.mxu0 0
      %1720 = vmatpush1.bf16.msra.mxu0 0
      %1721 = vmatprep.subr.bf16.mxu0 0
      %1722 = vmatpush1.bf16.msra.mxu0 0
      %1723 = vmatprep.subr.bf16.mxu0 0
      %1724 = vmatpush1.bf16.msra.mxu0 0
      %1725 = vmatprep.subr.bf16.mxu0 0
      %1726 = vmatpush1.bf16.msra.mxu0 0
      %1727 = vmatprep.subr.bf16.mxu0 0
      %1728 = vmatpush1.bf16.msra.mxu0 0
      %1729 = vmatprep.subr.bf16.mxu0 0
      %1730 = vmatpush1.bf16.msra.mxu0 0
      %1731 = vmatprep.subr.bf16.mxu0 0
      %1732 = vmatpush1.bf16.msra.mxu0 0
      %1733 = vmatprep.mubr.bf16.mxu0 0
      %1734 = vmatmul.mubr.bf16.gmra.mrb[0].mxu0 %v1693
      %v1735 = vpop.f32.mrb[0].mxu0
      %v1736 = vadd.f32 0.0, %v1735
      %v1737 = vpop.f32.mrb[0].mxu0
      %v1738 = vadd.f32 0.0, %v1737
      %v1739 = vpop.f32.mrb[0].mxu0
      %v1740 = vpop.f32.mrb[0].mxu0
      %1741 = vdwg.mxu0
      %1742 = vrot.lane.b32.xlu0 %v334, 124
      %v1743 = vpop.permute.xlu0 %1742
      %1744 = vrot.lane.b32.xlu0 %v335, 124
      %v1745 = vpop.permute.xlu0 %1744
      %1746 = vrot.lane.b32.xlu0 %v336, 124
      %v1747 = vpop.permute.xlu0 %1746
      %vm1748 = vcmask 1014784
      %v1749 = vsel %vm1748, %v1743, %v1745
      %v1750 = vsel %vm1748, %v1745, %v1747
      %v1752 = vsel %vm346, %v1681, 0
      %v1755 = vsel %vm350, %v1749, 0
      %v1758 = vsel %vm350, %v1750, 0
      %1760 = vmatprep.subr.bf16.mxu0 %v1758
      %1761 = vmatpush1.bf16.msra.mxu0 %v1755
      %1762 = vmatprep.subr.bf16.mxu0 0
      %1763 = vmatpush1.bf16.msra.mxu0 0
      %1764 = vmatprep.subr.bf16.mxu0 0
      %1765 = vmatpush1.bf16.msra.mxu0 0
      %1766 = vmatprep.subr.bf16.mxu0 0
      %1767 = vmatpush1.bf16.msra.mxu0 0
      %1768 = vmatprep.subr.bf16.mxu0 0
      %1769 = vmatpush1.bf16.msra.mxu0 0
      %1770 = vmatprep.subr.bf16.mxu0 0
      %1771 = vmatpush1.bf16.msra.mxu0 0
      %1772 = vmatprep.subr.bf16.mxu0 0
      %1773 = vmatpush1.bf16.msra.mxu0 0
      %1774 = vmatprep.subr.bf16.mxu0 0
      %1775 = vmatpush1.bf16.msra.mxu0 0
      %1776 = vmatprep.subr.bf16.mxu0 0
      %1777 = vmatpush1.bf16.msra.mxu0 0
      %1778 = vmatprep.subr.bf16.mxu0 0
      %1779 = vmatpush1.bf16.msra.mxu0 0
      %1780 = vmatprep.subr.bf16.mxu0 0
      %1781 = vmatpush1.bf16.msra.mxu0 0
      %1782 = vmatprep.subr.bf16.mxu0 0
      %1783 = vmatpush1.bf16.msra.mxu0 0
      %1784 = vmatprep.subr.bf16.mxu0 0
      %1785 = vmatpush1.bf16.msra.mxu0 0
      %1786 = vmatprep.subr.bf16.mxu0 0
      %1787 = vmatpush1.bf16.msra.mxu0 0
      %1788 = vmatprep.subr.bf16.mxu0 0
      %1789 = vmatpush1.bf16.msra.mxu0 0
      %1790 = vmatprep.subr.bf16.mxu0 0
      %1791 = vmatpush1.bf16.msra.mxu0 0
      %1792 = vmatprep.mubr.bf16.mxu0 0
      %1793 = vmatmul.mubr.bf16.gmra.mrb[0].mxu0 %v1752
      %v1794 = vpop.f32.mrb[0].mxu0
      %v1795 = vadd.f32 %v1736, %v1794
      %v1796 = vpop.f32.mrb[0].mxu0
      %v1797 = vadd.f32 %v1738, %v1796
      %v1798 = vpop.f32.mrb[0].mxu0
      %v1799 = vpop.f32.mrb[0].mxu0
      %1800 = vdwg.mxu0
      %s1801 = scalar_lea.vmem %s2, 44
      %v1802 = vld [vmem:[%s1801] sm:$0xf]
      %1803 = vrot.lane.b32.xlu0 %v334, 116
      %v1804 = vpop.permute.xlu0 %1803
      %1805 = vrot.lane.b32.xlu0 %v335, 116
      %v1806 = vpop.permute.xlu0 %1805
      %1807 = vrot.lane.b32.xlu0 %v336, 116
      %v1808 = vpop.permute.xlu0 %1807
      %vm1809 = vcmask 949248
      %v1810 = vsel %vm1809, %v1804, %v1806
      %v1811 = vsel %vm1809, %v1806, %v1808
      %v1813 = vsel %vm346, %v1802, 0
      %v1816 = vsel %vm350, %v1810, 0
      %v1819 = vsel %vm350, %v1811, 0
      %1821 = vmatprep.subr.bf16.mxu0 %v1819
      %1822 = vmatpush1.bf16.msra.mxu0 %v1816
      %1823 = vmatprep.subr.bf16.mxu0 0
      %1824 = vmatpush1.bf16.msra.mxu0 0
      %1825 = vmatprep.subr.bf16.mxu0 0
      %1826 = vmatpush1.bf16.msra.mxu0 0
      %1827 = vmatprep.subr.bf16.mxu0 0
      %1828 = vmatpush1.bf16.msra.mxu0 0
      %1829 = vmatprep.subr.bf16.mxu0 0
      %1830 = vmatpush1.bf16.msra.mxu0 0
      %1831 = vmatprep.subr.bf16.mxu0 0
      %1832 = vmatpush1.bf16.msra.mxu0 0
      %1833 = vmatprep.subr.bf16.mxu0 0
      %1834 = vmatpush1.bf16.msra.mxu0 0
      %1835 = vmatprep.subr.bf16.mxu0 0
      %1836 = vmatpush1.bf16.msra.mxu0 0
      %1837 = vmatprep.subr.bf16.mxu0 0
      %1838 = vmatpush1.bf16.msra.mxu0 0
      %1839 = vmatprep.subr.bf16.mxu0 0
      %1840 = vmatpush1.bf16.msra.mxu0 0
      %1841 = vmatprep.subr.bf16.mxu0 0
      %1842 = vmatpush1.bf16.msra.mxu0 0
      %1843 = vmatprep.subr.bf16.mxu0 0
      %1844 = vmatpush1.bf16.msra.mxu0 0
      %1845 = vmatprep.subr.bf16.mxu0 0
      %1846 = vmatpush1.bf16.msra.mxu0 0
      %1847 = vmatprep.subr.bf16.mxu0 0
      %1848 = vmatpush1.bf16.msra.mxu0 0
      %1849 = vmatprep.subr.bf16.mxu0 0
      %1850 = vmatpush1.bf16.msra.mxu0 0
      %1851 = vmatprep.subr.bf16.mxu0 0
      %1852 = vmatpush1.bf16.msra.mxu0 0
      %1853 = vmatprep.mubr.bf16.mxu0 0
      %1854 = vmatmul.mubr.bf16.gmra.mrb[0].mxu0 %v1813
      %v1855 = vpop.f32.mrb[0].mxu0
      %v1856 = vadd.f32 0.0, %v1855
      %v1857 = vpop.f32.mrb[0].mxu0
      %v1858 = vadd.f32 0.0, %v1857
      %v1859 = vpop.f32.mrb[0].mxu0
      %v1860 = vpop.f32.mrb[0].mxu0
      %1861 = vdwg.mxu0
      %v1862 = vadd.f32 %v1795, %v1856
      %v1863 = vadd.f32 %v1797, %v1858
      %s1864 = scalar_lea.vmem %s2, 48
      %v1865 = vld [vmem:[%s1864] sm:$0xf]
      %1866 = vrot.lane.b32.xlu0 %v554, 124
      %v1867 = vpop.permute.xlu0 %1866
      %1868 = vrot.lane.b32.xlu0 %v555, 124
      %v1869 = vpop.permute.xlu0 %1868
      %1870 = vrot.lane.b32.xlu0 %v556, 124
      %v1871 = vpop.permute.xlu0 %1870
      %v1872 = vsel %vm1748, %v1867, %v1869
      %v1873 = vsel %vm1748, %v1869, %v1871
      %v1875 = vsel %vm346, %v1865, 0
      %v1878 = vsel %vm350, %v1872, 0
      %v1881 = vsel %vm350, %v1873, 0
      %1883 = vmatprep.subr.bf16.mxu0 %v1881
      %1884 = vmatpush1.bf16.msra.mxu0 %v1878
      %1885 = vmatprep.subr.bf16.mxu0 0
      %1886 = vmatpush1.bf16.msra.mxu0 0
      %1887 = vmatprep.subr.bf16.mxu0 0
      %1888 = vmatpush1.bf16.msra.mxu0 0
      %1889 = vmatprep.subr.bf16.mxu0 0
      %1890 = vmatpush1.bf16.msra.mxu0 0
      %1891 = vmatprep.subr.bf16.mxu0 0
      %1892 = vmatpush1.bf16.msra.mxu0 0
      %1893 = vmatprep.subr.bf16.mxu0 0
      %1894 = vmatpush1.bf16.msra.mxu0 0
      %1895 = vmatprep.subr.bf16.mxu0 0
      %1896 = vmatpush1.bf16.msra.mxu0 0
      %1897 = vmatprep.subr.bf16.mxu0 0
      %1898 = vmatpush1.bf16.msra.mxu0 0
      %1899 = vmatprep.subr.bf16.mxu0 0
      %1900 = vmatpush1.bf16.msra.mxu0 0
      %1901 = vmatprep.subr.bf16.mxu0 0
      %1902 = vmatpush1.bf16.msra.mxu0 0
      %1903 = vmatprep.subr.bf16.mxu0 0
      %1904 = vmatpush1.bf16.msra.mxu0 0
      %1905 = vmatprep.subr.bf16.mxu0 0
      %1906 = vmatpush1.bf16.msra.mxu0 0
      %1907 = vmatprep.subr.bf16.mxu0 0
      %1908 = vmatpush1.bf16.msra.mxu0 0
      %1909 = vmatprep.subr.bf16.mxu0 0
      %1910 = vmatpush1.bf16.msra.mxu0 0
      %1911 = vmatprep.subr.bf16.mxu0 0
      %1912 = vmatpush1.bf16.msra.mxu0 0
      %1913 = vmatprep.subr.bf16.mxu0 0
      %1914 = vmatpush1.bf16.msra.mxu0 0
      %1915 = vmatprep.mubr.bf16.mxu0 0
      %1916 = vmatmul.mubr.bf16.gmra.mrb[0].mxu0 %v1875
      %v1917 = vpop.f32.mrb[0].mxu0
      %v1918 = vadd.f32 0.0, %v1917
      %v1919 = vpop.f32.mrb[0].mxu0
      %v1920 = vadd.f32 0.0, %v1919
      %v1921 = vpop.f32.mrb[0].mxu0
      %v1922 = vpop.f32.mrb[0].mxu0
      %1923 = vdwg.mxu0
      %v1924 = vadd.f32 %v1862, %v1918
      %v1925 = vadd.f32 %v1863, %v1920
      %s1926 = scalar_lea.vmem %s2, 52
      %v1927 = vld [vmem:[%s1926] sm:$0xf]
      %v1929 = vsel %vm346, %v1927, 0
      %1931 = vmatprep.subr.bf16.mxu0 %v646
      %1932 = vmatpush1.bf16.msra.mxu0 %v643
      %1933 = vmatprep.subr.bf16.mxu0 0
      %1934 = vmatpush1.bf16.msra.mxu0 0
      %1935 = vmatprep.subr.bf16.mxu0 0
      %1936 = vmatpush1.bf16.msra.mxu0 0
      %1937 = vmatprep.subr.bf16.mxu0 0
      %1938 = vmatpush1.bf16.msra.mxu0 0
      %1939 = vmatprep.subr.bf16.mxu0 0
      %1940 = vmatpush1.bf16.msra.mxu0 0
      %1941 = vmatprep.subr.bf16.mxu0 0
      %1942 = vmatpush1.bf16.msra.mxu0 0
      %1943 = vmatprep.subr.bf16.mxu0 0
      %1944 = vmatpush1.bf16.msra.mxu0 0
      %1945 = vmatprep.subr.bf16.mxu0 0
      %1946 = vmatpush1.bf16.msra.mxu0 0
      %1947 = vmatprep.subr.bf16.mxu0 0
      %1948 = vmatpush1.bf16.msra.mxu0 0
      %1949 = vmatprep.subr.bf16.mxu0 0
      %1950 = vmatpush1.bf16.msra.mxu0 0
      %1951 = vmatprep.subr.bf16.mxu0 0
      %1952 = vmatpush1.bf16.msra.mxu0 0
      %1953 = vmatprep.subr.bf16.mxu0 0
      %1954 = vmatpush1.bf16.msra.mxu0 0
      %1955 = vmatprep.subr.bf16.mxu0 0
      %1956 = vmatpush1.bf16.msra.mxu0 0
      %1957 = vmatprep.subr.bf16.mxu0 0
      %1958 = vmatpush1.bf16.msra.mxu0 0
      %1959 = vmatprep.subr.bf16.mxu0 0
      %1960 = vmatpush1.bf16.msra.mxu0 0
      %1961 = vmatprep.subr.bf16.mxu0 0
      %1962 = vmatpush1.bf16.msra.mxu0 0
      %1963 = vmatprep.mubr.bf16.mxu0 0
      %1964 = vmatmul.mubr.bf16.gmra.mrb[0].mxu0 %v1929
      %v1965 = vpop.f32.mrb[0].mxu0
      %v1966 = vadd.f32 0.0, %v1965
      %v1967 = vpop.f32.mrb[0].mxu0
      %v1968 = vadd.f32 0.0, %v1967
      %v1969 = vpop.f32.mrb[0].mxu0
      %v1970 = vpop.f32.mrb[0].mxu0
      %1971 = vdwg.mxu0
      %v1972 = vadd.f32 %v1924, %v1966
      %v1973 = vadd.f32 %v1925, %v1968
      %s1974 = scalar_lea.vmem %s2, 56
      %v1975 = vld [vmem:[%s1974] sm:$0xf]
      %1976 = vrot.lane.b32.xlu0 %v554, 116
      %v1977 = vpop.permute.xlu0 %1976
      %1978 = vrot.lane.b32.xlu0 %v555, 116
      %v1979 = vpop.permute.xlu0 %1978
      %1980 = vrot.lane.b32.xlu0 %v556, 116
      %v1981 = vpop.permute.xlu0 %1980
      %v1982 = vsel %vm1809, %v1977, %v1979
      %v1983 = vsel %vm1809, %v1979, %v1981
      %v1985 = vsel %vm346, %v1975, 0
      %v1988 = vsel %vm350, %v1982, 0
      %v1991 = vsel %vm350, %v1983, 0
      %1993 = vmatprep.subr.bf16.mxu0 %v1991
      %1994 = vmatpush1.bf16.msra.mxu0 %v1988
      %1995 = vmatprep.subr.bf16.mxu0 0
      %1996 = vmatpush1.bf16.msra.mxu0 0
      %1997 = vmatprep.subr.bf16.mxu0 0
      %1998 = vmatpush1.bf16.msra.mxu0 0
      %1999 = vmatprep.subr.bf16.mxu0 0
      %2000 = vmatpush1.bf16.msra.mxu0 0
      %2001 = vmatprep.subr.bf16.mxu0 0
      %2002 = vmatpush1.bf16.msra.mxu0 0
      %2003 = vmatprep.subr.bf16.mxu0 0
      %2004 = vmatpush1.bf16.msra.mxu0 0
      %2005 = vmatprep.subr.bf16.mxu0 0
      %2006 = vmatpush1.bf16.msra.mxu0 0
      %2007 = vmatprep.subr.bf16.mxu0 0
      %2008 = vmatpush1.bf16.msra.mxu0 0
      %2009 = vmatprep.subr.bf16.mxu0 0
      %2010 = vmatpush1.bf16.msra.mxu0 0
      %2011 = vmatprep.subr.bf16.mxu0 0
      %2012 = vmatpush1.bf16.msra.mxu0 0
      %2013 = vmatprep.subr.bf16.mxu0 0
      %2014 = vmatpush1.bf16.msra.mxu0 0
      %2015 = vmatprep.subr.bf16.mxu0 0
      %2016 = vmatpush1.bf16.msra.mxu0 0
      %2017 = vmatprep.subr.bf16.mxu0 0
      %2018 = vmatpush1.bf16.msra.mxu0 0
      %2019 = vmatprep.subr.bf16.mxu0 0
      %2020 = vmatpush1.bf16.msra.mxu0 0
      %2021 = vmatprep.subr.bf16.mxu0 0
      %2022 = vmatpush1.bf16.msra.mxu0 0
      %2023 = vmatprep.subr.bf16.mxu0 0
      %2024 = vmatpush1.bf16.msra.mxu0 0
      %2025 = vmatprep.mubr.bf16.mxu0 0
      %2026 = vmatmul.mubr.bf16.gmra.mrb[0].mxu0 %v1985
      %v2027 = vpop.f32.mrb[0].mxu0
      %v2028 = vadd.f32 0.0, %v2027
      %v2029 = vpop.f32.mrb[0].mxu0
      %v2030 = vadd.f32 0.0, %v2029
      %v2031 = vpop.f32.mrb[0].mxu0
      %v2032 = vpop.f32.mrb[0].mxu0
      %2033 = vdwg.mxu0
      %v2034 = vadd.f32 %v1972, %v2028
      %v2035 = vadd.f32 %v1973, %v2030
      %s2036 = scalar_lea.vmem %s2, 60
      %v2037 = vld [vmem:[%s2036] sm:$0xf]
      %v2038 = vld [vmem:[%s305 + $0xc] sm:$0xff]
      %v2039 = vld [vmem:[%s305 + $0x14] sm:$0xf]
      %v2042 = vunpack.c.l.b16 %v2038
      %v2043 = vunpack.c.h.b16 %v2038
      %v2044 = vunpack.c.l.b16 %v2039
      %v2045 = vpack.c.b16 %v2042, %v2042
      %v2046 = vpack.c.b16 %v2043, %v2043
      %v2047 = vpack.c.b16 %v2044, %v2044
      %2048 = vrot.lane.b32.xlu0 %v2045, 124
      %v2049 = vpop.permute.xlu0 %2048
      %2050 = vrot.lane.b32.xlu0 %v2046, 124
      %v2051 = vpop.permute.xlu0 %2050
      %2052 = vrot.lane.b32.xlu0 %v2047, 124
      %v2053 = vpop.permute.xlu0 %2052
      %v2054 = vsel %vm1748, %v2049, %v2051
      %v2055 = vsel %vm1748, %v2051, %v2053
      %v2057 = vsel %vm346, %v2037, 0
      %v2060 = vsel %vm350, %v2054, 0
      %v2063 = vsel %vm350, %v2055, 0
      %2065 = vmatprep.subr.bf16.mxu0 %v2063
      %2066 = vmatpush1.bf16.msra.mxu0 %v2060
      %2067 = vmatprep.subr.bf16.mxu0 0
      %2068 = vmatpush1.bf16.msra.mxu0 0
      %2069 = vmatprep.subr.bf16.mxu0 0
      %2070 = vmatpush1.bf16.msra.mxu0 0
      %2071 = vmatprep.subr.bf16.mxu0 0
      %2072 = vmatpush1.bf16.msra.mxu0 0
      %2073 = vmatprep.subr.bf16.mxu0 0
      %2074 = vmatpush1.bf16.msra.mxu0 0
      %2075 = vmatprep.subr.bf16.mxu0 0
      %2076 = vmatpush1.bf16.msra.mxu0 0
      %2077 = vmatprep.subr.bf16.mxu0 0
      %2078 = vmatpush1.bf16.msra.mxu0 0
      %2079 = vmatprep.subr.bf16.mxu0 0
      %2080 = vmatpush1.bf16.msra.mxu0 0
      %2081 = vmatprep.subr.bf16.mxu0 0
      %2082 = vmatpush1.bf16.msra.mxu0 0
      %2083 = vmatprep.subr.bf16.mxu0 0
      %2084 = vmatpush1.bf16.msra.mxu0 0
      %2085 = vmatprep.subr.bf16.mxu0 0
      %2086 = vmatpush1.bf16.msra.mxu0 0
      %2087 = vmatprep.subr.bf16.mxu0 0
      %2088 = vmatpush1.bf16.msra.mxu0 0
      %2089 = vmatprep.subr.bf16.mxu0 0
      %2090 = vmatpush1.bf16.msra.mxu0 0
      %2091 = vmatprep.subr.bf16.mxu0 0
      %2092 = vmatpush1.bf16.msra.mxu0 0
      %2093 = vmatprep.subr.bf16.mxu0 0
      %2094 = vmatpush1.bf16.msra.mxu0 0
      %2095 = vmatprep.subr.bf16.mxu0 0
      %2096 = vmatpush1.bf16.msra.mxu0 0
      %2097 = vmatprep.mubr.bf16.mxu0 0
      %2098 = vmatmul.mubr.bf16.gmra.mrb[0].mxu0 %v2057
      %v2099 = vpop.f32.mrb[0].mxu0
      %v2100 = vadd.f32 0.0, %v2099
      %v2101 = vpop.f32.mrb[0].mxu0
      %v2102 = vadd.f32 0.0, %v2101
      %v2103 = vpop.f32.mrb[0].mxu0
      %v2104 = vpop.f32.mrb[0].mxu0
      %2105 = vdwg.mxu0
      %v2106 = vadd.f32 %v2034, %v2100
      %v2107 = vadd.f32 %v2035, %v2102
      %s2108 = scalar_lea.vmem %s2, 64
      %v2109 = vld [vmem:[%s2108] sm:$0xf]
      %2110 = vrot.lane.b32.xlu0 %v2045, 120
      %v2111 = vpop.permute.xlu0 %2110
      %2112 = vrot.lane.b32.xlu0 %v2046, 120
      %v2113 = vpop.permute.xlu0 %2112
      %2114 = vrot.lane.b32.xlu0 %v2047, 120
      %v2115 = vpop.permute.xlu0 %2114
      %v2116 = vsel %vm636, %v2111, %v2113
      %v2117 = vsel %vm636, %v2113, %v2115
      %v2119 = vsel %vm346, %v2109, 0
      %v2122 = vsel %vm350, %v2116, 0
      %v2125 = vsel %vm350, %v2117, 0
      %2127 = vmatprep.subr.bf16.mxu0 %v2125
      %2128 = vmatpush1.bf16.msra.mxu0 %v2122
      %2129 = vmatprep.subr.bf16.mxu0 0
      %2130 = vmatpush1.bf16.msra.mxu0 0
      %2131 = vmatprep.subr.bf16.mxu0 0
      %2132 = vmatpush1.bf16.msra.mxu0 0
      %2133 = vmatprep.subr.bf16.mxu0 0
      %2134 = vmatpush1.bf16.msra.mxu0 0
      %2135 = vmatprep.subr.bf16.mxu0 0
      %2136 = vmatpush1.bf16.msra.mxu0 0
      %2137 = vmatprep.subr.bf16.mxu0 0
      %2138 = vmatpush1.bf16.msra.mxu0 0
      %2139 = vmatprep.subr.bf16.mxu0 0
      %2140 = vmatpush1.bf16.msra.mxu0 0
      %2141 = vmatprep.subr.bf16.mxu0 0
      %2142 = vmatpush1.bf16.msra.mxu0 0
      %2143 = vmatprep.subr.bf16.mxu0 0
      %2144 = vmatpush1.bf16.msra.mxu0 0
      %2145 = vmatprep.subr.bf16.mxu0 0
      %2146 = vmatpush1.bf16.msra.mxu0 0
      %2147 = vmatprep.subr.bf16.mxu0 0
      %2148 = vmatpush1.bf16.msra.mxu0 0
      %2149 = vmatprep.subr.bf16.mxu0 0
      %2150 = vmatpush1.bf16.msra.mxu0 0
      %2151 = vmatprep.subr.bf16.mxu0 0
      %2152 = vmatpush1.bf16.msra.mxu0 0
      %2153 = vmatprep.subr.bf16.mxu0 0
      %2154 = vmatpush1.bf16.msra.mxu0 0
      %2155 = vmatprep.subr.bf16.mxu0 0
      %2156 = vmatpush1.bf16.msra.mxu0 0
      %2157 = vmatprep.subr.bf16.mxu0 0
      %2158 = vmatpush1.bf16.msra.mxu0 0
      %2159 = vmatprep.mubr.bf16.mxu0 0
      %2160 = vmatmul.mubr.bf16.gmra.mrb[0].mxu0 %v2119
      %v2161 = vpop.f32.mrb[0].mxu0
      %v2162 = vadd.f32 0.0, %v2161
      %v2163 = vpop.f32.mrb[0].mxu0
      %v2164 = vadd.f32 0.0, %v2163
      %v2165 = vpop.f32.mrb[0].mxu0
      %v2166 = vpop.f32.mrb[0].mxu0
      %2167 = vdwg.mxu0
      %v2168 = vadd.f32 %v2106, %v2162
      %v2169 = vadd.f32 %v2107, %v2164
      %s2170 = scalar_lea.vmem %s2, 68
      %v2171 = vld [vmem:[%s2170] sm:$0xf]
      %2172 = vrot.lane.b32.xlu0 %v2045, 116
      %v2173 = vpop.permute.xlu0 %2172
      %2174 = vrot.lane.b32.xlu0 %v2046, 116
      %v2175 = vpop.permute.xlu0 %2174
      %2176 = vrot.lane.b32.xlu0 %v2047, 116
      %v2177 = vpop.permute.xlu0 %2176
      %v2178 = vsel %vm1809, %v2173, %v2175
      %v2179 = vsel %vm1809, %v2175, %v2177
      %v2181 = vsel %vm346, %v2171, 0
      %v2184 = vsel %vm350, %v2178, 0
      %v2187 = vsel %vm350, %v2179, 0
      %2189 = vmatprep.subr.bf16.mxu0 %v2187
      %2190 = vmatpush1.bf16.msra.mxu0 %v2184
      %2191 = vmatprep.subr.bf16.mxu0 0
      %2192 = vmatpush1.bf16.msra.mxu0 0
      %2193 = vmatprep.subr.bf16.mxu0 0
      %2194 = vmatpush1.bf16.msra.mxu0 0
      %2195 = vmatprep.subr.bf16.mxu0 0
      %2196 = vmatpush1.bf16.msra.mxu0 0
      %2197 = vmatprep.subr.bf16.mxu0 0
      %2198 = vmatpush1.bf16.msra.mxu0 0
      %2199 = vmatprep.subr.bf16.mxu0 0
      %2200 = vmatpush1.bf16.msra.mxu0 0
      %2201 = vmatprep.subr.bf16.mxu0 0
      %2202 = vmatpush1.bf16.msra.mxu0 0
      %2203 = vmatprep.subr.bf16.mxu0 0
      %2204 = vmatpush1.bf16.msra.mxu0 0
      %2205 = vmatprep.subr.bf16.mxu0 0
      %2206 = vmatpush1.bf16.msra.mxu0 0
      %2207 = vmatprep.subr.bf16.mxu0 0
      %2208 = vmatpush1.bf16.msra.mxu0 0
      %2209 = vmatprep.subr.bf16.mxu0 0
      %2210 = vmatpush1.bf16.msra.mxu0 0
      %2211 = vmatprep.subr.bf16.mxu0 0
      %2212 = vmatpush1.bf16.msra.mxu0 0
      %2213 = vmatprep.subr.bf16.mxu0 0
      %2214 = vmatpush1.bf16.msra.mxu0 0
      %2215 = vmatprep.subr.bf16.mxu0 0
      %2216 = vmatpush1.bf16.msra.mxu0 0
      %2217 = vmatprep.subr.bf16.mxu0 0
      %2218 = vmatpush1.bf16.msra.mxu0 0
      %2219 = vmatprep.subr.bf16.mxu0 0
      %2220 = vmatpush1.bf16.msra.mxu0 0
      %2221 = vmatprep.mubr.bf16.mxu0 0
      %2222 = vmatmul.mubr.bf16.gmra.mrb[0].mxu0 %v2181
      %v2223 = vpop.f32.mrb[0].mxu0
      %v2224 = vadd.f32 0.0, %v2223
      %v2225 = vpop.f32.mrb[0].mxu0
      %v2226 = vadd.f32 0.0, %v2225
      %v2227 = vpop.f32.mrb[0].mxu0
      %v2228 = vpop.f32.mrb[0].mxu0
      %2229 = vdwg.mxu0
      %v2230 = vadd.f32 %v2168, %v2224
      %v2231 = vadd.f32 %v2169, %v2226
      %2232 = vset.pattern.permute.xlu0 2
      %2233 = vperm.xlu0 %2232, %v997
      %v2234 = vpop.permute.xlu0 %2233
      %v2236 = vadd.f32 %v2230, %v2234
      %v2237 = vadd.f32 %v2231, %v2234
      %v2238 = vmax.f32 %v2236, 0.0
      %v2239 = vmax.f32 %v2237, 0.0
      %v2240 = vlaneseq
      %v2241 = vshrl.u32 %v2240, 7
      %v2242 = vsub.s32 2, %v2241
      %v2243 = vrot.slane %v1104, %v2242
      %v2244 = vlaneseq
      %v2245 = vshrl.u32 %v2244, 7
      %v2246 = vsub.s32 2, %v2245
      %v2247 = vrot.slane %v1105, %v2246
      %v2248 = vmul.f32 %v2243, %v2238
      %v2249 = vmul.f32 %v2247, %v2239
      %v2250 = vadd.f32 %v1678, %v2248
      %v2251 = vadd.f32 %v1679, %v2249
      %s2252 = scalar_lea.vmem %s2, 72
      %v2253 = vld [vmem:[%s2252] sm:$0xf]
      %v2254 = vld [vmem:[%s305] sm:$0xff]
      %s2255 = scalar_lea.vmem %s2, 76
      %v2256 = vld [vmem:[%s2255] sm:$0xf]
      %v2257 = vld [vmem:[%s305 + $0x8] sm:$0xf]
      %v2260 = vunpack.c.l.b16 %v2254
      %v2261 = vunpack.c.h.b16 %v2254
      %v2262 = vunpack.c.l.b16 %v2257
      %v2263 = vpack.c.b16 %v2260, %v2260
      %v2264 = vpack.c.b16 %v2261, %v2261
      %v2265 = vpack.c.b16 %v2262, %v2262
      %2266 = vrot.lane.b32.xlu0 %v2263, 120
      %v2267 = vpop.permute.xlu0 %2266
      %2268 = vrot.lane.b32.xlu0 %v2264, 120
      %v2269 = vpop.permute.xlu0 %2268
      %2270 = vrot.lane.b32.xlu0 %v2265, 120
      %v2271 = vpop.permute.xlu0 %2270
      %v2272 = vsel %vm636, %v2267, %v2269
      %v2273 = vsel %vm636, %v2269, %v2271
      %v2275 = vsel %vm346, %v2256, 0
      %v2278 = vsel %vm350, %v2272, 0
      %v2281 = vsel %vm350, %v2273, 0
      %2283 = vmatprep.subr.bf16.mxu0 %v2281
      %2284 = vmatpush1.bf16.msra.mxu0 %v2278
      %2285 = vmatprep.subr.bf16.mxu0 0
      %2286 = vmatpush1.bf16.msra.mxu0 0
      %2287 = vmatprep.subr.bf16.mxu0 0
      %2288 = vmatpush1.bf16.msra.mxu0 0
      %2289 = vmatprep.subr.bf16.mxu0 0
      %2290 = vmatpush1.bf16.msra.mxu0 0
      %2291 = vmatprep.subr.bf16.mxu0 0
      %2292 = vmatpush1.bf16.msra.mxu0 0
      %2293 = vmatprep.subr.bf16.mxu0 0
      %2294 = vmatpush1.bf16.msra.mxu0 0
      %2295 = vmatprep.subr.bf16.mxu0 0
      %2296 = vmatpush1.bf16.msra.mxu0 0
      %2297 = vmatprep.subr.bf16.mxu0 0
      %2298 = vmatpush1.bf16.msra.mxu0 0
      %2299 = vmatprep.subr.bf16.mxu0 0
      %2300 = vmatpush1.bf16.msra.mxu0 0
      %2301 = vmatprep.subr.bf16.mxu0 0
      %2302 = vmatpush1.bf16.msra.mxu0 0
      %2303 = vmatprep.subr.bf16.mxu0 0
      %2304 = vmatpush1.bf16.msra.mxu0 0
      %2305 = vmatprep.subr.bf16.mxu0 0
      %2306 = vmatpush1.bf16.msra.mxu0 0
      %2307 = vmatprep.subr.bf16.mxu0 0
      %2308 = vmatpush1.bf16.msra.mxu0 0
      %2309 = vmatprep.subr.bf16.mxu0 0
      %2310 = vmatpush1.bf16.msra.mxu0 0
      %2311 = vmatprep.subr.bf16.mxu0 0
      %2312 = vmatpush1.bf16.msra.mxu0 0
      %2313 = vmatprep.subr.bf16.mxu0 0
      %2314 = vmatpush1.bf16.msra.mxu0 0
      %2315 = vmatprep.mubr.bf16.mxu0 0
      %2316 = vmatmul.mubr.bf16.gmra.mrb[0].mxu0 %v2275
      %v2317 = vpop.f32.mrb[0].mxu0
      %v2318 = vadd.f32 0.0, %v2317
      %v2319 = vpop.f32.mrb[0].mxu0
      %v2320 = vadd.f32 0.0, %v2319
      %v2321 = vpop.f32.mrb[0].mxu0
      %v2322 = vpop.f32.mrb[0].mxu0
      %2323 = vdwg.mxu0
      %v2325 = vsel %vm346, %v2253, 0
      %v2328 = vsel %vm350, %v2263, 0
      %v2331 = vsel %vm350, %v2264, 0
      %2333 = vmatprep.subr.bf16.mxu0 %v2331
      %2334 = vmatpush1.bf16.msra.mxu0 %v2328
      %2335 = vmatprep.subr.bf16.mxu0 0
      %2336 = vmatpush1.bf16.msra.mxu0 0
      %2337 = vmatprep.subr.bf16.mxu0 0
      %2338 = vmatpush1.bf16.msra.mxu0 0
      %2339 = vmatprep.subr.bf16.mxu0 0
      %2340 = vmatpush1.bf16.msra.mxu0 0
      %2341 = vmatprep.subr.bf16.mxu0 0
      %2342 = vmatpush1.bf16.msra.mxu0 0
      %2343 = vmatprep.subr.bf16.mxu0 0
      %2344 = vmatpush1.bf16.msra.mxu0 0
      %2345 = vmatprep.subr.bf16.mxu0 0
      %2346 = vmatpush1.bf16.msra.mxu0 0
      %2347 = vmatprep.subr.bf16.mxu0 0
      %2348 = vmatpush1.bf16.msra.mxu0 0
      %2349 = vmatprep.subr.bf16.mxu0 0
      %2350 = vmatpush1.bf16.msra.mxu0 0
      %2351 = vmatprep.subr.bf16.mxu0 0
      %2352 = vmatpush1.bf16.msra.mxu0 0
      %2353 = vmatprep.subr.bf16.mxu0 0
      %2354 = vmatpush1.bf16.msra.mxu0 0
      %2355 = vmatprep.subr.bf16.mxu0 0
      %2356 = vmatpush1.bf16.msra.mxu0 0
      %2357 = vmatprep.subr.bf16.mxu0 0
      %2358 = vmatpush1.bf16.msra.mxu0 0
      %2359 = vmatprep.subr.bf16.mxu0 0
      %2360 = vmatpush1.bf16.msra.mxu0 0
      %2361 = vmatprep.subr.bf16.mxu0 0
      %2362 = vmatpush1.bf16.msra.mxu0 0
      %2363 = vmatprep.subr.bf16.mxu0 0
      %2364 = vmatpush1.bf16.msra.mxu0 0
      %2365 = vmatprep.mubr.bf16.mxu0 0
      %2366 = vmatmul.mubr.bf16.gmra.mrb[0].mxu0 %v2325
      %v2367 = vpop.f32.mrb[0].mxu0
      %v2368 = vadd.f32 %v2318, %v2367
      %v2369 = vpop.f32.mrb[0].mxu0
      %v2370 = vadd.f32 %v2320, %v2369
      %v2371 = vpop.f32.mrb[0].mxu0
      %v2372 = vpop.f32.mrb[0].mxu0
      %2373 = vdwg.mxu0
      %s2374 = scalar_lea.vmem %s2, 80
      %v2375 = vld [vmem:[%s2374] sm:$0xf]
      %2376 = vrot.lane.b32.xlu0 %v2263, 112
      %v2377 = vpop.permute.xlu0 %2376
      %2378 = vrot.lane.b32.xlu0 %v2264, 112
      %v2379 = vpop.permute.xlu0 %2378
      %2380 = vrot.lane.b32.xlu0 %v2265, 112
      %v2381 = vpop.permute.xlu0 %2380
      %vm2382 = vcmask 916480
      %v2383 = vsel %vm2382, %v2377, %v2379
      %v2384 = vsel %vm2382, %v2379, %v2381
      %v2386 = vsel %vm346, %v2375, 0
      %v2389 = vsel %vm350, %v2383, 0
      %v2392 = vsel %vm350, %v2384, 0
      %2394 = vmatprep.subr.bf16.mxu0 %v2392
      %2395 = vmatpush1.bf16.msra.mxu0 %v2389
      %2396 = vmatprep.subr.bf16.mxu0 0
      %2397 = vmatpush1.bf16.msra.mxu0 0
      %2398 = vmatprep.subr.bf16.mxu0 0
      %2399 = vmatpush1.bf16.msra.mxu0 0
      %2400 = vmatprep.subr.bf16.mxu0 0
      %2401 = vmatpush1.bf16.msra.mxu0 0
      %2402 = vmatprep.subr.bf16.mxu0 0
      %2403 = vmatpush1.bf16.msra.mxu0 0
      %2404 = vmatprep.subr.bf16.mxu0 0
      %2405 = vmatpush1.bf16.msra.mxu0 0
      %2406 = vmatprep.subr.bf16.mxu0 0
      %2407 = vmatpush1.bf16.msra.mxu0 0
      %2408 = vmatprep.subr.bf16.mxu0 0
      %2409 = vmatpush1.bf16.msra.mxu0 0
      %2410 = vmatprep.subr.bf16.mxu0 0
      %2411 = vmatpush1.bf16.msra.mxu0 0
      %2412 = vmatprep.subr.bf16.mxu0 0
      %2413 = vmatpush1.bf16.msra.mxu0 0
      %2414 = vmatprep.subr.bf16.mxu0 0
      %2415 = vmatpush1.bf16.msra.mxu0 0
      %2416 = vmatprep.subr.bf16.mxu0 0
      %2417 = vmatpush1.bf16.msra.mxu0 0
      %2418 = vmatprep.subr.bf16.mxu0 0
      %2419 = vmatpush1.bf16.msra.mxu0 0
      %2420 = vmatprep.subr.bf16.mxu0 0
      %2421 = vmatpush1.bf16.msra.mxu0 0
      %2422 = vmatprep.subr.bf16.mxu0 0
      %2423 = vmatpush1.bf16.msra.mxu0 0
      %2424 = vmatprep.subr.bf16.mxu0 0
      %2425 = vmatpush1.bf16.msra.mxu0 0
      %2426 = vmatprep.mubr.bf16.mxu0 0
      %2427 = vmatmul.mubr.bf16.gmra.mrb[0].mxu0 %v2386
      %v2428 = vpop.f32.mrb[0].mxu0
      %v2429 = vadd.f32 0.0, %v2428
      %v2430 = vpop.f32.mrb[0].mxu0
      %v2431 = vadd.f32 0.0, %v2430
      %v2432 = vpop.f32.mrb[0].mxu0
      %v2433 = vpop.f32.mrb[0].mxu0
      %2434 = vdwg.mxu0
      %v2435 = vadd.f32 %v2368, %v2429
      %v2436 = vadd.f32 %v2370, %v2431
      %s2437 = scalar_lea.vmem %s2, 84
      %v2438 = vld [vmem:[%s2437] sm:$0xf]
      %v2439 = vld [vmem:[%s305 + $0x8] sm:$0xff]
      %v2441 = vunpack.c.l.b16 %v2439
      %v2442 = vunpack.c.h.b16 %v2439
      %v2443 = vpack.c.b16 %v2441, %v2441
      %v2444 = vpack.c.b16 %v2442, %v2442
      %v2446 = vsel %vm346, %v2438, 0
      %v2449 = vsel %vm350, %v2443, 0
      %v2452 = vsel %vm350, %v2444, 0
      %2454 = vmatprep.subr.bf16.mxu0 %v2452
      %2455 = vmatpush1.bf16.msra.mxu0 %v2449
      %2456 = vmatprep.subr.bf16.mxu0 0
      %2457 = vmatpush1.bf16.msra.mxu0 0
      %2458 = vmatprep.subr.bf16.mxu0 0
      %2459 = vmatpush1.bf16.msra.mxu0 0
      %2460 = vmatprep.subr.bf16.mxu0 0
      %2461 = vmatpush1.bf16.msra.mxu0 0
      %2462 = vmatprep.subr.bf16.mxu0 0
      %2463 = vmatpush1.bf16.msra.mxu0 0
      %2464 = vmatprep.subr.bf16.mxu0 0
      %2465 = vmatpush1.bf16.msra.mxu0 0
      %2466 = vmatprep.subr.bf16.mxu0 0
      %2467 = vmatpush1.bf16.msra.mxu0 0
      %2468 = vmatprep.subr.bf16.mxu0 0
      %2469 = vmatpush1.bf16.msra.mxu0 0
      %2470 = vmatprep.subr.bf16.mxu0 0
      %2471 = vmatpush1.bf16.msra.mxu0 0
      %2472 = vmatprep.subr.bf16.mxu0 0
      %2473 = vmatpush1.bf16.msra.mxu0 0
      %2474 = vmatprep.subr.bf16.mxu0 0
      %2475 = vmatpush1.bf16.msra.mxu0 0
      %2476 = vmatprep.subr.bf16.mxu0 0
      %2477 = vmatpush1.bf16.msra.mxu0 0
      %2478 = vmatprep.subr.bf16.mxu0 0
      %2479 = vmatpush1.bf16.msra.mxu0 0
      %2480 = vmatprep.subr.bf16.mxu0 0
      %2481 = vmatpush1.bf16.msra.mxu0 0
      %2482 = vmatprep.subr.bf16.mxu0 0
      %2483 = vmatpush1.bf16.msra.mxu0 0
      %2484 = vmatprep.subr.bf16.mxu0 0
      %2485 = vmatpush1.bf16.msra.mxu0 0
      %2486 = vmatprep.mubr.bf16.mxu0 0
      %2487 = vmatmul.mubr.bf16.gmra.mrb[0].mxu0 %v2446
      %v2488 = vpop.f32.mrb[0].mxu0
      %v2489 = vadd.f32 0.0, %v2488
      %v2490 = vpop.f32.mrb[0].mxu0
      %v2491 = vadd.f32 0.0, %v2490
      %v2492 = vpop.f32.mrb[0].mxu0
      %v2493 = vpop.f32.mrb[0].mxu0
      %2494 = vdwg.mxu0
      %v2495 = vadd.f32 %v2435, %v2489
      %v2496 = vadd.f32 %v2436, %v2491
      %s2497 = scalar_lea.vmem %s2, 88
      %v2498 = vld [vmem:[%s2497] sm:$0xf]
      %v2500 = vsel %vm346, %v2498, 0
      %2502 = vmatprep.subr.bf16.mxu0 %v646
      %2503 = vmatpush1.bf16.msra.mxu0 %v643
      %2504 = vmatprep.subr.bf16.mxu0 0
      %2505 = vmatpush1.bf16.msra.mxu0 0
      %2506 = vmatprep.subr.bf16.mxu0 0
      %2507 = vmatpush1.bf16.msra.mxu0 0
      %2508 = vmatprep.subr.bf16.mxu0 0
      %2509 = vmatpush1.bf16.msra.mxu0 0
      %2510 = vmatprep.subr.bf16.mxu0 0
      %2511 = vmatpush1.bf16.msra.mxu0 0
      %2512 = vmatprep.subr.bf16.mxu0 0
      %2513 = vmatpush1.bf16.msra.mxu0 0
      %2514 = vmatprep.subr.bf16.mxu0 0
      %2515 = vmatpush1.bf16.msra.mxu0 0
      %2516 = vmatprep.subr.bf16.mxu0 0
      %2517 = vmatpush1.bf16.msra.mxu0 0
      %2518 = vmatprep.subr.bf16.mxu0 0
      %2519 = vmatpush1.bf16.msra.mxu0 0
      %2520 = vmatprep.subr.bf16.mxu0 0
      %2521 = vmatpush1.bf16.msra.mxu0 0
      %2522 = vmatprep.subr.bf16.mxu0 0
      %2523 = vmatpush1.bf16.msra.mxu0 0
      %2524 = vmatprep.subr.bf16.mxu0 0
      %2525 = vmatpush1.bf16.msra.mxu0 0
      %2526 = vmatprep.subr.bf16.mxu0 0
      %2527 = vmatpush1.bf16.msra.mxu0 0
      %2528 = vmatprep.subr.bf16.mxu0 0
      %2529 = vmatpush1.bf16.msra.mxu0 0
      %2530 = vmatprep.subr.bf16.mxu0 0
      %2531 = vmatpush1.bf16.msra.mxu0 0
      %2532 = vmatprep.subr.bf16.mxu0 0
      %2533 = vmatpush1.bf16.msra.mxu0 0
      %2534 = vmatprep.mubr.bf16.mxu0 0
      %2535 = vmatmul.mubr.bf16.gmra.mrb[0].mxu0 %v2500
      %v2536 = vpop.f32.mrb[0].mxu0
      %v2537 = vadd.f32 0.0, %v2536
      %v2538 = vpop.f32.mrb[0].mxu0
      %v2539 = vadd.f32 0.0, %v2538
      %v2540 = vpop.f32.mrb[0].mxu0
      %v2541 = vpop.f32.mrb[0].mxu0
      %2542 = vdwg.mxu0
      %v2543 = vadd.f32 %v2495, %v2537
      %v2544 = vadd.f32 %v2496, %v2539
      %s2545 = scalar_lea.vmem %s2, 92
      %v2546 = vld [vmem:[%s2545] sm:$0xf]
      %2547 = vrot.lane.b32.xlu0 %v554, 112
      %v2548 = vpop.permute.xlu0 %2547
      %2549 = vrot.lane.b32.xlu0 %v555, 112
      %v2550 = vpop.permute.xlu0 %2549
      %2551 = vrot.lane.b32.xlu0 %v556, 112
      %v2552 = vpop.permute.xlu0 %2551
      %v2553 = vsel %vm2382, %v2548, %v2550
      %v2554 = vsel %vm2382, %v2550, %v2552
      %v2556 = vsel %vm346, %v2546, 0
      %v2559 = vsel %vm350, %v2553, 0
      %v2562 = vsel %vm350, %v2554, 0
      %2564 = vmatprep.subr.bf16.mxu0 %v2562
      %2565 = vmatpush1.bf16.msra.mxu0 %v2559
      %2566 = vmatprep.subr.bf16.mxu0 0
      %2567 = vmatpush1.bf16.msra.mxu0 0
      %2568 = vmatprep.subr.bf16.mxu0 0
      %2569 = vmatpush1.bf16.msra.mxu0 0
      %2570 = vmatprep.subr.bf16.mxu0 0
      %2571 = vmatpush1.bf16.msra.mxu0 0
      %2572 = vmatprep.subr.bf16.mxu0 0
      %2573 = vmatpush1.bf16.msra.mxu0 0
      %2574 = vmatprep.subr.bf16.mxu0 0
      %2575 = vmatpush1.bf16.msra.mxu0 0
      %2576 = vmatprep.subr.bf16.mxu0 0
      %2577 = vmatpush1.bf16.msra.mxu0 0
      %2578 = vmatprep.subr.bf16.mxu0 0
      %2579 = vmatpush1.bf16.msra.mxu0 0
      %2580 = vmatprep.subr.bf16.mxu0 0
      %2581 = vmatpush1.bf16.msra.mxu0 0
      %2582 = vmatprep.subr.bf16.mxu0 0
      %2583 = vmatpush1.bf16.msra.mxu0 0
      %2584 = vmatprep.subr.bf16.mxu0 0
      %2585 = vmatpush1.bf16.msra.mxu0 0
      %2586 = vmatprep.subr.bf16.mxu0 0
      %2587 = vmatpush1.bf16.msra.mxu0 0
      %2588 = vmatprep.subr.bf16.mxu0 0
      %2589 = vmatpush1.bf16.msra.mxu0 0
      %2590 = vmatprep.subr.bf16.mxu0 0
      %2591 = vmatpush1.bf16.msra.mxu0 0
      %2592 = vmatprep.subr.bf16.mxu0 0
      %2593 = vmatpush1.bf16.msra.mxu0 0
      %2594 = vmatprep.subr.bf16.mxu0 0
      %2595 = vmatpush1.bf16.msra.mxu0 0
      %2596 = vmatprep.mubr.bf16.mxu0 0
      %2597 = vmatmul.mubr.bf16.gmra.mrb[0].mxu0 %v2556
      %v2598 = vpop.f32.mrb[0].mxu0
      %v2599 = vadd.f32 0.0, %v2598
      %v2600 = vpop.f32.mrb[0].mxu0
      %v2601 = vadd.f32 0.0, %v2600
      %v2602 = vpop.f32.mrb[0].mxu0
      %v2603 = vpop.f32.mrb[0].mxu0
      %2604 = vdwg.mxu0
      %v2605 = vadd.f32 %v2543, %v2599
      %v2606 = vadd.f32 %v2544, %v2601
      %s2607 = scalar_lea.vmem %s2, 96
      %v2608 = vld [vmem:[%s2607] sm:$0xf]
      %v2609 = vld [vmem:[%s305 + $0x10] sm:$0xff]
      %v2611 = vunpack.c.l.b16 %v2609
      %v2612 = vunpack.c.h.b16 %v2609
      %v2613 = vpack.c.b16 %v2611, %v2611
      %v2614 = vpack.c.b16 %v2612, %v2612
      %v2616 = vsel %vm346, %v2608, 0
      %v2619 = vsel %vm350, %v2613, 0
      %v2622 = vsel %vm350, %v2614, 0
      %2624 = vmatprep.subr.bf16.mxu0 %v2622
      %2625 = vmatpush1.bf16.msra.mxu0 %v2619
      %2626 = vmatprep.subr.bf16.mxu0 0
      %2627 = vmatpush1.bf16.msra.mxu0 0
      %2628 = vmatprep.subr.bf16.mxu0 0
      %2629 = vmatpush1.bf16.msra.mxu0 0
      %2630 = vmatprep.subr.bf16.mxu0 0
      %2631 = vmatpush1.bf16.msra.mxu0 0
      %2632 = vmatprep.subr.bf16.mxu0 0
      %2633 = vmatpush1.bf16.msra.mxu0 0
      %2634 = vmatprep.subr.bf16.mxu0 0
      %2635 = vmatpush1.bf16.msra.mxu0 0
      %2636 = vmatprep.subr.bf16.mxu0 0
      %2637 = vmatpush1.bf16.msra.mxu0 0
      %2638 = vmatprep.subr.bf16.mxu0 0
      %2639 = vmatpush1.bf16.msra.mxu0 0
      %2640 = vmatprep.subr.bf16.mxu0 0
      %2641 = vmatpush1.bf16.msra.mxu0 0
      %2642 = vmatprep.subr.bf16.mxu0 0
      %2643 = vmatpush1.bf16.msra.mxu0 0
      %2644 = vmatprep.subr.bf16.mxu0 0
      %2645 = vmatpush1.bf16.msra.mxu0 0
      %2646 = vmatprep.subr.bf16.mxu0 0
      %2647 = vmatpush1.bf16.msra.mxu0 0
      %2648 = vmatprep.subr.bf16.mxu0 0
      %2649 = vmatpush1.bf16.msra.mxu0 0
      %2650 = vmatprep.subr.bf16.mxu0 0
      %2651 = vmatpush1.bf16.msra.mxu0 0
      %2652 = vmatprep.subr.bf16.mxu0 0
      %2653 = vmatpush1.bf16.msra.mxu0 0
      %2654 = vmatprep.subr.bf16.mxu0 0
      %2655 = vmatpush1.bf16.msra.mxu0 0
      %2656 = vmatprep.mubr.bf16.mxu0 0
      %2657 = vmatmul.mubr.bf16.gmra.mrb[0].mxu0 %v2616
      %v2658 = vpop.f32.mrb[0].mxu0
      %v2659 = vadd.f32 0.0, %v2658
      %v2660 = vpop.f32.mrb[0].mxu0
      %v2661 = vadd.f32 0.0, %v2660
      %v2662 = vpop.f32.mrb[0].mxu0
      %v2663 = vpop.f32.mrb[0].mxu0
      %2664 = vdwg.mxu0
      %v2665 = vadd.f32 %v2605, %v2659
      %v2666 = vadd.f32 %v2606, %v2661
      %s2667 = scalar_lea.vmem %s2, 100
      %v2668 = vld [vmem:[%s2667] sm:$0xf]
      %v2669 = vld [vmem:[%s305 + $0x10] sm:$0xff]
      %v2670 = vld [vmem:[%s305 + $0x18] sm:$0xf]
      %v2673 = vunpack.c.l.b16 %v2669
      %v2674 = vunpack.c.h.b16 %v2669
      %v2675 = vunpack.c.l.b16 %v2670
      %v2676 = vpack.c.b16 %v2673, %v2673
      %v2677 = vpack.c.b16 %v2674, %v2674
      %v2678 = vpack.c.b16 %v2675, %v2675
      %2679 = vrot.lane.b32.xlu0 %v2676, 120
      %v2680 = vpop.permute.xlu0 %2679
      %2681 = vrot.lane.b32.xlu0 %v2677, 120
      %v2682 = vpop.permute.xlu0 %2681
      %2683 = vrot.lane.b32.xlu0 %v2678, 120
      %v2684 = vpop.permute.xlu0 %2683
      %v2685 = vsel %vm636, %v2680, %v2682
      %v2686 = vsel %vm636, %v2682, %v2684
      %v2688 = vsel %vm346, %v2668, 0
      %v2691 = vsel %vm350, %v2685, 0
      %v2694 = vsel %vm350, %v2686, 0
      %2696 = vmatprep.subr.bf16.mxu0 %v2694
      %2697 = vmatpush1.bf16.msra.mxu0 %v2691
      %2698 = vmatprep.subr.bf16.mxu0 0
      %2699 = vmatpush1.bf16.msra.mxu0 0
      %2700 = vmatprep.subr.bf16.mxu0 0
      %2701 = vmatpush1.bf16.msra.mxu0 0
      %2702 = vmatprep.subr.bf16.mxu0 0
      %2703 = vmatpush1.bf16.msra.mxu0 0
      %2704 = vmatprep.subr.bf16.mxu0 0
      %2705 = vmatpush1.bf16.msra.mxu0 0
      %2706 = vmatprep.subr.bf16.mxu0 0
      %2707 = vmatpush1.bf16.msra.mxu0 0
      %2708 = vmatprep.subr.bf16.mxu0 0
      %2709 = vmatpush1.bf16.msra.mxu0 0
      %2710 = vmatprep.subr.bf16.mxu0 0
      %2711 = vmatpush1.bf16.msra.mxu0 0
      %2712 = vmatprep.subr.bf16.mxu0 0
      %2713 = vmatpush1.bf16.msra.mxu0 0
      %2714 = vmatprep.subr.bf16.mxu0 0
      %2715 = vmatpush1.bf16.msra.mxu0 0
      %2716 = vmatprep.subr.bf16.mxu0 0
      %2717 = vmatpush1.bf16.msra.mxu0 0
      %2718 = vmatprep.subr.bf16.mxu0 0
      %2719 = vmatpush1.bf16.msra.mxu0 0
      %2720 = vmatprep.subr.bf16.mxu0 0
      %2721 = vmatpush1.bf16.msra.mxu0 0
      %2722 = vmatprep.subr.bf16.mxu0 0
      %2723 = vmatpush1.bf16.msra.mxu0 0
      %2724 = vmatprep.subr.bf16.mxu0 0
      %2725 = vmatpush1.bf16.msra.mxu0 0
      %2726 = vmatprep.subr.bf16.mxu0 0
      %2727 = vmatpush1.bf16.msra.mxu0 0
      %2728 = vmatprep.mubr.bf16.mxu0 0
      %2729 = vmatmul.mubr.bf16.gmra.mrb[0].mxu0 %v2688
      %v2730 = vpop.f32.mrb[0].mxu0
      %v2731 = vadd.f32 0.0, %v2730
      %v2732 = vpop.f32.mrb[0].mxu0
      %v2733 = vadd.f32 0.0, %v2732
      %v2734 = vpop.f32.mrb[0].mxu0
      %v2735 = vpop.f32.mrb[0].mxu0
      %2736 = vdwg.mxu0
      %v2737 = vadd.f32 %v2665, %v2731
      %v2738 = vadd.f32 %v2666, %v2733
      %s2739 = scalar_lea.vmem %s2, 104
      %v2740 = vld [vmem:[%s2739] sm:$0xf]
      %2741 = vrot.lane.b32.xlu0 %v2676, 112
      %v2742 = vpop.permute.xlu0 %2741
      %2743 = vrot.lane.b32.xlu0 %v2677, 112
      %v2744 = vpop.permute.xlu0 %2743
      %2745 = vrot.lane.b32.xlu0 %v2678, 112
      %v2746 = vpop.permute.xlu0 %2745
      %v2747 = vsel %vm2382, %v2742, %v2744
      %v2748 = vsel %vm2382, %v2744, %v2746
      %v2750 = vsel %vm346, %v2740, 0
      %v2753 = vsel %vm350, %v2747, 0
      %v2756 = vsel %vm350, %v2748, 0
      %2758 = vmatprep.subr.bf16.mxu0 %v2756
      %2759 = vmatpush1.bf16.msra.mxu0 %v2753
      %2760 = vmatprep.subr.bf16.mxu0 0
      %2761 = vmatpush1.bf16.msra.mxu0 0
      %2762 = vmatprep.subr.bf16.mxu0 0
      %2763 = vmatpush1.bf16.msra.mxu0 0
      %2764 = vmatprep.subr.bf16.mxu0 0
      %2765 = vmatpush1.bf16.msra.mxu0 0
      %2766 = vmatprep.subr.bf16.mxu0 0
      %2767 = vmatpush1.bf16.msra.mxu0 0
      %2768 = vmatprep.subr.bf16.mxu0 0
      %2769 = vmatpush1.bf16.msra.mxu0 0
      %2770 = vmatprep.subr.bf16.mxu0 0
      %2771 = vmatpush1.bf16.msra.mxu0 0
      %2772 = vmatprep.subr.bf16.mxu0 0
      %2773 = vmatpush1.bf16.msra.mxu0 0
      %2774 = vmatprep.subr.bf16.mxu0 0
      %2775 = vmatpush1.bf16.msra.mxu0 0
      %2776 = vmatprep.subr.bf16.mxu0 0
      %2777 = vmatpush1.bf16.msra.mxu0 0
      %2778 = vmatprep.subr.bf16.mxu0 0
      %2779 = vmatpush1.bf16.msra.mxu0 0
      %2780 = vmatprep.subr.bf16.mxu0 0
      %2781 = vmatpush1.bf16.msra.mxu0 0
      %2782 = vmatprep.subr.bf16.mxu0 0
      %2783 = vmatpush1.bf16.msra.mxu0 0
      %2784 = vmatprep.subr.bf16.mxu0 0
      %2785 = vmatpush1.bf16.msra.mxu0 0
      %2786 = vmatprep.subr.bf16.mxu0 0
      %2787 = vmatpush1.bf16.msra.mxu0 0
      %2788 = vmatprep.subr.bf16.mxu0 0
      %2789 = vmatpush1.bf16.msra.mxu0 0
      %2790 = vmatprep.mubr.bf16.mxu0 0
      %2791 = vmatmul.mubr.bf16.gmra.mrb[0].mxu0 %v2750
      %v2792 = vpop.f32.mrb[0].mxu0
      %v2793 = vadd.f32 0.0, %v2792
      %v2794 = vpop.f32.mrb[0].mxu0
      %v2795 = vadd.f32 0.0, %v2794
      %v2796 = vpop.f32.mrb[0].mxu0
      %v2797 = vpop.f32.mrb[0].mxu0
      %2798 = vdwg.mxu0
      %v2799 = vadd.f32 %v2737, %v2793
      %v2800 = vadd.f32 %v2738, %v2795
      %2801 = vset.pattern.permute.xlu0 3
      %2802 = vperm.xlu0 %2801, %v997
      %v2803 = vpop.permute.xlu0 %2802
      %v2805 = vadd.f32 %v2799, %v2803
      %v2806 = vadd.f32 %v2800, %v2803
      %v2807 = vmax.f32 %v2805, 0.0
      %v2808 = vmax.f32 %v2806, 0.0
      %v2809 = vlaneseq
      %v2810 = vshrl.u32 %v2809, 7
      %v2811 = vsub.s32 3, %v2810
      %v2812 = vrot.slane %v1104, %v2811
      %v2813 = vlaneseq
      %v2814 = vshrl.u32 %v2813, 7
      %v2815 = vsub.s32 3, %v2814
      %v2816 = vrot.slane %v1105, %v2815
      %v2817 = vmul.f32 %v2812, %v2807
      %v2818 = vmul.f32 %v2816, %v2808
      %v2819 = vadd.f32 %v2250, %v2817
      %v2820 = vadd.f32 %v2251, %v2818
      %2821 = vst [vmem:[%s314] sm:$0xff] %v2819
      %2822 = vst [vmem:[%s314 + $0x8] sm:$0xff] %v2820
      %s2823 = smul.u32 2, %s23
      %p2824 = scmp.lt.s32.totalorder %s22, 1
      %s2825 = scalar_select %p2824, %s22, 1
      %p2826 = scmp.lt.s32.totalorder %s2823, 3
      %s2827 = scalar_select %p2826, %s2823, 3
      %s2828 = smul.addr %s2825, 4
      %s2829 = sadd.s32 %s2827, %s2828
      %s2830 = smul.addr %s2829, 8
      %s2831 = scalar_lea.vmem %s7, %s2830
      // Predicated region
      $region49: #{msfa_pallas.1} parent=47 // pred_check
        %p2832 = pneg %p204
      $region50: #{msfa_pallas.1} parent=47 // pred_check_branch
        %2834 = sbr.rel (%p2832) target = $region52
      $region51: #{msfa_pallas.1} parent=47 // pred_region
        %s2835 = smul.u32 2, %s23
      $region52: #{msfa_pallas.1} parent=47 // pred_fallthru
        _
    $region48: #{msfa_pallas.1} parent=5 // pred_fallthru
      _
    %p2836 = scmp.le.s32.totalorder 2, %s13
    // Predicated region
    $region53: #{msfa_pallas.1} parent=5 // pred_check
      %p2837 = pneg %p2836
    $region54: #{msfa_pallas.1} parent=5 // pred_check_branch
      %2839 = sbr.rel (%p2837) target = $region56
    $region55: #{msfa_pallas.1} parent=5 // pred_region
      %s2840 = ssub.s32 %s13, 2
      // Predicated region
      $region57: #{msfa_pallas.1} parent=55 // pred_check
        %p2841 = pneg %p210
      $region58: #{msfa_pallas.1} parent=55 // pred_check_branch
        %2843 = sbr.rel (%p2841) target = $region60
      $region59: #{msfa_pallas.1} parent=55 // pred_region
        %s2844 = smul.u32 2, %s25
        %p2845 = scmp.lt.s32.totalorder %s24, 1
        %s2846 = scalar_select %p2845, %s24, 1
        %p2847 = scmp.lt.s32.totalorder %s2844, 3
        %s2848 = scalar_select %p2847, %s2844, 3
        %s2849 = smul.addr %s2846, 4
        %s2850 = sadd.s32 %s2848, %s2849
        %s2851 = smul.addr %s2850, 8
        %s2852 = scalar_lea.vmem %s7, %s2851
      $region60: #{msfa_pallas.1} parent=55 // pred_fallthru
        _
    $region56: #{msfa_pallas.1} parent=5 // pred_fallthru
      _
  $region6: #{msfa_pallas.1} parent=0 // loop_footer
    %s17 = sadd.s32 1, %s13
  $region7: #{msfa_pallas.1} parent=0 // loop_footer_branch
    %12 = sbr.rel target = $region3
  $region8: #{msfa_pallas.1} parent=0 // loop_exit
    _

</llo_original>
